<compile_context>
chip_gen: v6e
topology: v6e:2x2x1
jax: 0.10.0
libtpu: 0.0.40
codegen_flags: <defaults>
</compile_context>

<pallas_src>
import math
from functools import partial

import jax
import jax.numpy as jnp
from jax.experimental import pallas as pl
from jax.experimental.pallas import tpu as pltpu

# ----------------------------- model config ---------------------------------
VOCAB_SIZE = 100
D_MODEL = 32
N_HEAD = 4
D_FF = 64
N_LAYER = 2
MAX_LEN = 64
BATCH = 2
SEQ = 8
HEAD_DIM = D_MODEL // N_HEAD
LN_EPS = 1e-5


# ------------------------------ Pallas kernel --------------------------------
def encoder_kernel(
    tok_ref, emb_ref, pe_ref, mask_ref,
    wqkv_ref, bqkv_ref, wo_ref, bo_ref,
    g1_ref, be1_ref,
    w1_ref, b1_ref, w2_ref, b2_ref,
    g2_ref, be2_ref,
    out_ref, attnw_ref,
    *, B, S,
):
    """Single invocation: embedding + PE + all N_LAYER encoder layers.

    tok_ref   : (B*S, 1) int32       token ids
    emb_ref   : (V, D)               embedding table
    pe_ref    : (B*S, D)             positional encoding, pre-tiled over batch
    mask_ref  : (B, 1, S)            float padding mask (1 = attend, 0 = masked)
    *_ref     : (L, ...)             stacked per-layer weights, fully VMEM-resident
    out_ref   : (B*S, D)             final encoder output
    attnw_ref : (L, B, H*S, S)       attention weights, head-major (pure reshape later)
    """
    BS = B * S

    # --- token embedding via one-hot MXU matmul + positional encoding ---
    ids = tok_ref[...]                                                  # (BS, 1) int32
    vocab_iota = jax.lax.broadcasted_iota(jnp.int32, (BS, VOCAB_SIZE), 1)
    onehot = (vocab_iota == ids).astype(jnp.float32)                    # (BS, V)
    x = jnp.dot(onehot, emb_ref[...], preferred_element_type=jnp.float32)
    x = x * jnp.float32(math.sqrt(D_MODEL)) + pe_ref[...]               # (BS, D)
    # TODO(synk): positional-encoding dropout omitted (inference mode).

    # --- additive attention bias from padding mask (0 keep / -1e9 masked), hoisted ---
    bias = (mask_ref[...] - 1.0) * jnp.float32(1e9)                     # (B, 1, S)
    bias = jnp.broadcast_to(bias, (B, S, S))                            # broadcast once

    scale = jnp.float32(1.0 / math.sqrt(HEAD_DIM))

    def layer_norm(val, g, b):
        mu = jnp.mean(val, axis=-1, keepdims=True)
        d = val - mu
        var = jnp.mean(d * d, axis=-1, keepdims=True)                   # two-pass variance
        return d * jax.lax.rsqrt(var + LN_EPS) * g + b

    # --- statically unrolled layer stack ---
    for l in range(N_LAYER):
        # fused QKV projection: one MXU matmul
        qkv = jnp.dot(x, wqkv_ref[l], preferred_element_type=jnp.float32) + bqkv_ref[l]
        q = qkv[:, 0 * D_MODEL:1 * D_MODEL].reshape(B, S, D_MODEL)
        k = qkv[:, 1 * D_MODEL:2 * D_MODEL].reshape(B, S, D_MODEL)
        v = qkv[:, 2 * D_MODEL:3 * D_MODEL].reshape(B, S, D_MODEL)

        ctxs = []
        for h in range(N_HEAD):
            lo = h * HEAD_DIM
            qh = q[:, :, lo:lo + HEAD_DIM]                              # (B, S, hd)
            kh = k[:, :, lo:lo + HEAD_DIM]
            vh = v[:, :, lo:lo + HEAD_DIM]
            s = jnp.einsum('bqd,bkd->bqk', qh, kh,
                           preferred_element_type=jnp.float32)          # (B, S, S)
            s = s * scale + bias
            s = s - jnp.max(s, axis=-1, keepdims=True)
            e = jnp.exp(s)
            p = e / jnp.sum(e, axis=-1, keepdims=True)                  # exact softmax
            # head-major store: (l, b, h*S:(h+1)*S, :)  ->  wrapper reshape only
            attnw_ref[l, :, h * S:(h + 1) * S, :] = p
            ctxs.append(jnp.einsum('bqk,bkd->bqd', p, vh,
                                   preferred_element_type=jnp.float32)) # (B, S, hd)

        # merge heads and project out
        ctx = jnp.concatenate(ctxs, axis=-1).reshape(BS, D_MODEL)       # (BS, D)
        attn_out = jnp.dot(ctx, wo_ref[l],
                           preferred_element_type=jnp.float32) + bo_ref[l]

        # TODO(synk): dropout layers are identity (inference-mode semantics).
        # Add & Norm 1
        x1 = layer_norm(attn_out + x, g1_ref[l], be1_ref[l])

        # FeedForward: Linear -> ReLU -> Linear
        hdn = jnp.maximum(
            jnp.dot(x1, w1_ref[l], preferred_element_type=jnp.float32) + b1_ref[l], 0.0)
        ffn = jnp.dot(hdn, w2_ref[l], preferred_element_type=jnp.float32) + b2_ref[l]

        # Add & Norm 2
        x = layer_norm(ffn + x1, g2_ref[l], be2_ref[l])

    out_ref[...] = x.astype(out_ref.dtype)


def encoder_pallas(tok_flat, emb, pe_flat, mask, stacked, B, S):
    """All layers + embedding in a single pallas_call (no grid; everything VMEM-resident)."""
    BS = B * S
    names = ("wqkv", "bqkv", "wo", "bo", "g1", "be1",
             "w1", "b1", "w2", "b2", "g2", "be2")
    weights = [stacked[n] for n in names]

    vmem = pl.BlockSpec(memory_space=pltpu.MemorySpace.VMEM)

    out, attn_slab = pl.pallas_call(
        partial(encoder_kernel, B=B, S=S),
        out_shape=(
            jax.ShapeDtypeStruct((BS, D_MODEL), jnp.float32),
            jax.ShapeDtypeStruct((N_LAYER, B, N_HEAD * S, S), jnp.float32),
        ),
        in_specs=[vmem] * (4 + len(weights)),
        out_specs=(vmem, vmem),
    )(tok_flat, emb, pe_flat, mask, *weights)
    return out, attn_slab


# --------------------------- parameter initialization ------------------------
def init_params(key):
    def nrm(k, shape, scale=0.02):
        return (scale * jax.random.normal(k, shape)).astype(jnp.float32)

    keys = jax.random.split(key, 1 + N_LAYER)
    emb = nrm(keys[0], (VOCAB_SIZE, D_MODEL), scale=1.0)

    layers = []
    for li in range(N_LAYER):
        lk = jax.random.split(keys[1 + li], 12)
        layers.append({
            # fused QKV: columns ordered [Q | K | V]
            "wqkv": jnp.concatenate([nrm(lk[0], (D_MODEL, D_MODEL)),
                                     nrm(lk[1], (D_MODEL, D_MODEL)),
                                     nrm(lk[2], (D_MODEL, D_MODEL))], axis=1),
            "bqkv": jnp.concatenate([nrm(lk[3], (1, D_MODEL)),
                                     nrm(lk[4], (1, D_MODEL)),
                                     nrm(lk[5], (1, D_MODEL))], axis=1),
            "wo": nrm(lk[6], (D_MODEL, D_MODEL)), "bo": nrm(lk[7], (1, D_MODEL)),
            "g1": jnp.ones((1, D_MODEL), jnp.float32),
            "be1": jnp.zeros((1, D_MODEL), jnp.float32),
            "w1": nrm(lk[8], (D_MODEL, D_FF)), "b1": nrm(lk[9], (1, D_FF)),
            "w2": nrm(lk[10], (D_FF, D_MODEL)), "b2": nrm(lk[11], (1, D_MODEL)),
            "g2": jnp.ones((1, D_MODEL), jnp.float32),
            "be2": jnp.zeros((1, D_MODEL), jnp.float32),
        })

    stacked = {name: jnp.stack([lyr[name] for lyr in layers], axis=0)
               for name in layers[0]}
    return {"embedding": emb, "stacked": stacked}


def positional_encoding(max_len, d_model):
    pos = jnp.arange(max_len, dtype=jnp.float32)[:, None]
    div = jnp.exp(jnp.arange(0, d_model, 2, dtype=jnp.float32)
                  * (-math.log(10000.0) / d_model))
    pe = jnp.zeros((max_len, d_model), jnp.float32)
    pe = pe.at[:, 0::2].set(jnp.sin(pos * div))
    pe = pe.at[:, 1::2].set(jnp.cos(pos * div))
    return pe


# --------------------------------- encoder -----------------------------------
@jax.jit
def encoder_forward(src_tokens, src_mask, params, pe_flat):
    """src_tokens: (B, S) int32, src_mask: (B, 1, S) float (1=attend, 0=pad)."""
    B, S = src_tokens.shape
    tok_flat = src_tokens.reshape(B * S, 1).astype(jnp.int32)

    out_flat, attn_slab = encoder_pallas(
        tok_flat, params["embedding"], pe_flat, src_mask, params["stacked"], B, S)

    enc_out = out_flat.reshape(B, S, D_MODEL)
    # (L, B, H*S, S) is already head-major: pure reshape, no transpose.
    attn = attn_slab.reshape(N_LAYER, B, N_HEAD, S, S)
    attn_weights = [attn[l] for l in range(N_LAYER)]
    return enc_out, attn_weights


# ----------------------------------- main ------------------------------------
if __name__ == "__main__":
    key = jax.random.PRNGKey(0)
    pkey, tkey = jax.random.split(key)

    params = init_params(pkey)
    pe = positional_encoding(MAX_LEN, D_MODEL)
    pe_flat = jnp.tile(pe[:SEQ], (BATCH, 1))          # (B*S, D), batch-tiled once

    src_tokens = jax.random.randint(tkey, (BATCH, SEQ), 0, VOCAB_SIZE)

    # padding mask (B, 1, S): batch 0 fully valid, batch 1 has last 2 positions padded
    valid_lens = jnp.array([SEQ, SEQ - 2])
    col = jnp.arange(SEQ)[None, None, :]                                 # (1, 1, S)
    src_mask = (col < valid_lens[:, None, None]).astype(jnp.float32)     # (B, 1, S)

    enc_out, attn_ws = encoder_forward(src_tokens, src_mask, params, pe_flat)
    enc_out = jax.block_until_ready(enc_out)
    attn_ws = [jax.block_until_ready(w) for w in attn_ws]

    assert enc_out.shape == (BATCH, SEQ, D_MODEL)
    assert len(attn_ws) == N_LAYER
    assert all(w.shape == (BATCH, N_HEAD, SEQ, SEQ) for w in attn_ws)
    assert bool(jnp.all(jnp.isfinite(enc_out)))
    # attention rows form a proper softmax (exact division now)
    assert bool(jnp.allclose(jnp.sum(attn_ws[0], axis=-1), 1.0, atol=1e-4))
    # masked (padded) key positions in batch 1 get ~zero probability
    assert bool(jnp.all(attn_ws[0][1, :, :, SEQ - 2:] < 1e-6))

    print("KERNEL_OK")
</pallas_src>

<mosaic_0001>
module attributes {stable_mosaic.version = 11 : i64} {
  func.func @encoder_kernel(%arg0: memref<16x1xi32, #tpu.memory_space<vmem>>, %arg1: memref<100x32xf32, #tpu.memory_space<vmem>>, %arg2: memref<16x32xf32, #tpu.memory_space<vmem>>, %arg3: memref<2x1x8xf32, #tpu.memory_space<vmem>>, %arg4: memref<2x32x96xf32, #tpu.memory_space<vmem>>, %arg5: memref<2x1x96xf32, #tpu.memory_space<vmem>>, %arg6: memref<2x32x32xf32, #tpu.memory_space<vmem>>, %arg7: memref<2x1x32xf32, #tpu.memory_space<vmem>>, %arg8: memref<2x1x32xf32, #tpu.memory_space<vmem>>, %arg9: memref<2x1x32xf32, #tpu.memory_space<vmem>>, %arg10: memref<2x32x64xf32, #tpu.memory_space<vmem>>, %arg11: memref<2x1x64xf32, #tpu.memory_space<vmem>>, %arg12: memref<2x64x32xf32, #tpu.memory_space<vmem>>, %arg13: memref<2x1x32xf32, #tpu.memory_space<vmem>>, %arg14: memref<2x1x32xf32, #tpu.memory_space<vmem>>, %arg15: memref<2x1x32xf32, #tpu.memory_space<vmem>>, %arg16: memref<16x32xf32, #tpu.memory_space<vmem>>, %arg17: memref<2x2x32x8xf32, #tpu.memory_space<vmem>>) attributes {dimension_semantics = [], scalar_prefetch = 0 : i64, scratch_operands = 0 : i64, tpu.core_type = #tpu.core_type<tc>} {
    %c0 = arith.constant 0 : index
    %c0_0 = arith.constant 0 : index
    %0 = vector.load %arg0[%c0, %c0_0] : memref<16x1xi32, #tpu.memory_space<vmem>>, vector<16x1xi32>
    %1 = tpu.iota {dimensions = array<i32: 1>} : vector<16x100xi32>
    %2 = vector.broadcast %0 : vector<16x1xi32> to vector<16x100xi32>
    %3 = arith.cmpi eq, %1, %2 : vector<16x100xi32>
    %4 = arith.extui %3 : vector<16x100xi1> to vector<16x100xi32>
    %5 = arith.sitofp %4 : vector<16x100xi32> to vector<16x100xf32>
    %c0_1 = arith.constant 0 : index
    %c0_2 = arith.constant 0 : index
    %6 = vector.load %arg1[%c0_1, %c0_2] : memref<100x32xf32, #tpu.memory_space<vmem>>, vector<100x32xf32>
    %cst = arith.constant dense<0.000000e+00> : vector<16x32xf32>
    %7 = tpu.matmul %5, %6, %cst {dimension_numbers = #tpu.dot_dimension_numbers<[1], [0], [0], [1], [0, 0, 1, 1], [], []>} : vector<16x100xf32>, vector<100x32xf32>, vector<16x32xf32> -> vector<16x32xf32>
    %cst_3 = arith.constant 5.65685415 : f32
    %8 = vector.broadcast %cst_3 : f32 to vector<16x32xf32>
    %9 = arith.mulf %7, %8 : vector<16x32xf32>
    %c0_4 = arith.constant 0 : index
    %c0_5 = arith.constant 0 : index
    %10 = vector.load %arg2[%c0_4, %c0_5] : memref<16x32xf32, #tpu.memory_space<vmem>>, vector<16x32xf32>
    %11 = arith.addf %9, %10 : vector<16x32xf32>
    %c0_6 = arith.constant 0 : index
    %c0_7 = arith.constant 0 : index
    %c0_8 = arith.constant 0 : index
    %12 = vector.load %arg3[%c0_6, %c0_7, %c0_8] : memref<2x1x8xf32, #tpu.memory_space<vmem>>, vector<2x1x8xf32>
    %cst_9 = arith.constant 1.000000e+00 : f32
    %13 = vector.broadcast %cst_9 : f32 to vector<2x1x8xf32>
    %14 = arith.subf %12, %13 : vector<2x1x8xf32>
    %cst_10 = arith.constant 1.000000e+09 : f32
    %15 = vector.broadcast %cst_10 : f32 to vector<2x1x8xf32>
    %16 = arith.mulf %14, %15 : vector<2x1x8xf32>
    %17 = vector.shape_cast %16 : vector<2x1x8xf32> to vector<2x1x8xf32>
    %18 = vector.broadcast %17 : vector<2x1x8xf32> to vector<2x8x8xf32>
    %c0_11 = arith.constant 0 : index
    %c0_12 = arith.constant 0 : index
    %c0_13 = arith.constant 0 : index
    %19 = vector.load %arg4[%c0_11, %c0_12, %c0_13] : memref<2x32x96xf32, #tpu.memory_space<vmem>>, vector<1x32x96xf32>
    %20 = vector.shape_cast %19 : vector<1x32x96xf32> to vector<32x96xf32>
    %cst_14 = arith.constant dense<0.000000e+00> : vector<16x96xf32>
    %21 = tpu.matmul %11, %20, %cst_14 {dimension_numbers = #tpu.dot_dimension_numbers<[1], [0], [0], [1], [0, 0, 1, 1], [], []>} : vector<16x32xf32>, vector<32x96xf32>, vector<16x96xf32> -> vector<16x96xf32>
    %c0_15 = arith.constant 0 : index
    %c0_16 = arith.constant 0 : index
    %c0_17 = arith.constant 0 : index
    %22 = vector.load %arg5[%c0_15, %c0_16, %c0_17] : memref<2x1x96xf32, #tpu.memory_space<vmem>>, vector<1x1x96xf32>
    %23 = vector.shape_cast %22 : vector<1x1x96xf32> to vector<1x96xf32>
    %24 = vector.broadcast %23 : vector<1x96xf32> to vector<16x96xf32>
    %25 = arith.addf %21, %24 : vector<16x96xf32>
    %26 = vector.extract_strided_slice %25 {offsets = [0, 0], sizes = [16, 32], strides = [1, 1]} : vector<16x96xf32> to vector<16x32xf32>
    %27 = vector.shape_cast %26 : vector<16x32xf32> to vector<2x8x32xf32>
    %28 = vector.extract_strided_slice %25 {offsets = [0, 32], sizes = [16, 32], strides = [1, 1]} : vector<16x96xf32> to vector<16x32xf32>
    %29 = vector.shape_cast %28 : vector<16x32xf32> to vector<2x8x32xf32>
    %30 = vector.extract_strided_slice %25 {offsets = [0, 64], sizes = [16, 32], strides = [1, 1]} : vector<16x96xf32> to vector<16x32xf32>
    %31 = vector.shape_cast %30 : vector<16x32xf32> to vector<2x8x32xf32>
    %32 = vector.extract_strided_slice %27 {offsets = [0, 0, 0], sizes = [2, 8, 8], strides = [1, 1, 1]} : vector<2x8x32xf32> to vector<2x8x8xf32>
    %33 = vector.extract_strided_slice %29 {offsets = [0, 0, 0], sizes = [2, 8, 8], strides = [1, 1, 1]} : vector<2x8x32xf32> to vector<2x8x8xf32>
    %34 = vector.extract_strided_slice %31 {offsets = [0, 0, 0], sizes = [2, 8, 8], strides = [1, 1, 1]} : vector<2x8x32xf32> to vector<2x8x8xf32>
    "tpu.trace_start"() <{level = 10 : i32, message = "bqd,bkd->bqk"}> : () -> ()
    %cst_18 = arith.constant dense<0.000000e+00> : vector<2x8x8xf32>
    %35 = tpu.matmul %32, %33, %cst_18 {dimension_numbers = #tpu.dot_dimension_numbers<[2], [2], [1], [1], [0, 0, 0, 1, 1, 1], [0], [0]>} : vector<2x8x8xf32>, vector<2x8x8xf32>, vector<2x8x8xf32> -> vector<2x8x8xf32>
    "tpu.trace_stop"() : () -> ()
    %cst_19 = arith.constant 0.353553385 : f32
    %36 = vector.broadcast %cst_19 : f32 to vector<2x8x8xf32>
    %37 = arith.mulf %35, %36 : vector<2x8x8xf32>
    %38 = arith.addf %37, %18 : vector<2x8x8xf32>
    %cst_20 = arith.constant dense<0xFF800000> : vector<2x8xf32>
    %39 = vector.multi_reduction <maximumf>, %38, %cst_20 [2] : vector<2x8x8xf32> to vector<2x8xf32>
    %40 = vector.shape_cast %39 : vector<2x8xf32> to vector<2x8x1xf32>
    %41 = vector.broadcast %40 : vector<2x8x1xf32> to vector<2x8x8xf32>
    %42 = arith.subf %38, %41 : vector<2x8x8xf32>
    %43 = math.exp %42 : vector<2x8x8xf32>
    %cst_21 = arith.constant dense<0.000000e+00> : vector<2x8xf32>
    %44 = vector.multi_reduction <add>, %43, %cst_21 [2] : vector<2x8x8xf32> to vector<2x8xf32>
    %45 = vector.shape_cast %44 : vector<2x8xf32> to vector<2x8x1xf32>
    %46 = vector.broadcast %45 : vector<2x8x1xf32> to vector<2x8x8xf32>
    %47 = arith.divf %43, %46 : vector<2x8x8xf32>
    %c0_22 = arith.constant 0 : index
    %c0_23 = arith.constant 0 : index
    %c0_24 = arith.constant 0 : index
    %c0_25 = arith.constant 0 : index
    %48 = vector.load %arg17[%c0_22, %c0_23, %c0_24, %c0_25] : memref<2x2x32x8xf32, #tpu.memory_space<vmem>>, vector<1x2x8x8xf32>
    %49 = vector.shape_cast %48 : vector<1x2x8x8xf32> to vector<2x8x8xf32>
    %50 = vector.shape_cast %47 : vector<2x8x8xf32> to vector<1x2x8x8xf32>
    tpu.vector_store %arg17[%c0_22, %c0_23, %c0_24, %c0_25], %50 {strides = array<i32>} : memref<2x2x32x8xf32, #tpu.memory_space<vmem>>, vector<1x2x8x8xf32>,
    "tpu.trace_start"() <{level = 10 : i32, message = "bqk,bkd->bqd"}> : () -> ()
    %cst_26 = arith.constant dense<0.000000e+00> : vector<2x8x8xf32>
    %51 = tpu.matmul %47, %34, %cst_26 {dimension_numbers = #tpu.dot_dimension_numbers<[2], [1], [1], [2], [0, 0, 0, 1, 1, 2], [0], [0]>} : vector<2x8x8xf32>, vector<2x8x8xf32>, vector<2x8x8xf32> -> vector<2x8x8xf32>
    "tpu.trace_stop"() : () -> ()
    %52 = vector.extract_strided_slice %27 {offsets = [0, 0, 8], sizes = [2, 8, 8], strides = [1, 1, 1]} : vector<2x8x32xf32> to vector<2x8x8xf32>
    %53 = vector.extract_strided_slice %29 {offsets = [0, 0, 8], sizes = [2, 8, 8], strides = [1, 1, 1]} : vector<2x8x32xf32> to vector<2x8x8xf32>
    %54 = vector.extract_strided_slice %31 {offsets = [0, 0, 8], sizes = [2, 8, 8], strides = [1, 1, 1]} : vector<2x8x32xf32> to vector<2x8x8xf32>
    "tpu.trace_start"() <{level = 10 : i32, message = "bqd,bkd->bqk"}> : () -> ()
    %cst_27 = arith.constant dense<0.000000e+00> : vector<2x8x8xf32>
    %55 = tpu.matmul %52, %53, %cst_27 {dimension_numbers = #tpu.dot_dimension_numbers<[2], [2], [1], [1], [0, 0, 0, 1, 1, 1], [0], [0]>} : vector<2x8x8xf32>, vector<2x8x8xf32>, vector<2x8x8xf32> -> vector<2x8x8xf32>
    "tpu.trace_stop"() : () -> ()
    %cst_28 = arith.constant 0.353553385 : f32
    %56 = vector.broadcast %cst_28 : f32 to vector<2x8x8xf32>
    %57 = arith.mulf %55, %56 : vector<2x8x8xf32>
    %58 = arith.addf %57, %18 : vector<2x8x8xf32>
    %cst_29 = arith.constant dense<0xFF800000> : vector<2x8xf32>
    %59 = vector.multi_reduction <maximumf>, %58, %cst_29 [2] : vector<2x8x8xf32> to vector<2x8xf32>
    %60 = vector.shape_cast %59 : vector<2x8xf32> to vector<2x8x1xf32>
    %61 = vector.broadcast %60 : vector<2x8x1xf32> to vector<2x8x8xf32>
    %62 = arith.subf %58, %61 : vector<2x8x8xf32>
    %63 = math.exp %62 : vector<2x8x8xf32>
    %cst_30 = arith.constant dense<0.000000e+00> : vector<2x8xf32>
    %64 = vector.multi_reduction <add>, %63, %cst_30 [2] : vector<2x8x8xf32> to vector<2x8xf32>
    %65 = vector.shape_cast %64 : vector<2x8xf32> to vector<2x8x1xf32>
    %66 = vector.broadcast %65 : vector<2x8x1xf32> to vector<2x8x8xf32>
    %67 = arith.divf %63, %66 : vector<2x8x8xf32>
    %c0_31 = arith.constant 0 : index
    %c0_32 = arith.constant 0 : index
    %c8 = arith.constant 8 : index
    %c0_33 = arith.constant 0 : index
    %68 = vector.load %arg17[%c0_31, %c0_32, %c8, %c0_33] : memref<2x2x32x8xf32, #tpu.memory_space<vmem>>, vector<1x2x8x8xf32>
    %69 = vector.shape_cast %68 : vector<1x2x8x8xf32> to vector<2x8x8xf32>
    %70 = vector.shape_cast %67 : vector<2x8x8xf32> to vector<1x2x8x8xf32>
    tpu.vector_store %arg17[%c0_31, %c0_32, %c8, %c0_33], %70 {strides = array<i32>} : memref<2x2x32x8xf32, #tpu.memory_space<vmem>>, vector<1x2x8x8xf32>,
    "tpu.trace_start"() <{level = 10 : i32, message = "bqk,bkd->bqd"}> : () -> ()
    %cst_34 = arith.constant dense<0.000000e+00> : vector<2x8x8xf32>
    %71 = tpu.matmul %67, %54, %cst_34 {dimension_numbers = #tpu.dot_dimension_numbers<[2], [1], [1], [2], [0, 0, 0, 1, 1, 2], [0], [0]>} : vector<2x8x8xf32>, vector<2x8x8xf32>, vector<2x8x8xf32> -> vector<2x8x8xf32>
    "tpu.trace_stop"() : () -> ()
    %72 = vector.extract_strided_slice %27 {offsets = [0, 0, 16], sizes = [2, 8, 8], strides = [1, 1, 1]} : vector<2x8x32xf32> to vector<2x8x8xf32>
    %73 = vector.extract_strided_slice %29 {offsets = [0, 0, 16], sizes = [2, 8, 8], strides = [1, 1, 1]} : vector<2x8x32xf32> to vector<2x8x8xf32>
    %74 = vector.extract_strided_slice %31 {offsets = [0, 0, 16], sizes = [2, 8, 8], strides = [1, 1, 1]} : vector<2x8x32xf32> to vector<2x8x8xf32>
    "tpu.trace_start"() <{level = 10 : i32, message = "bqd,bkd->bqk"}> : () -> ()
    %cst_35 = arith.constant dense<0.000000e+00> : vector<2x8x8xf32>
    %75 = tpu.matmul %72, %73, %cst_35 {dimension_numbers = #tpu.dot_dimension_numbers<[2], [2], [1], [1], [0, 0, 0, 1, 1, 1], [0], [0]>} : vector<2x8x8xf32>, vector<2x8x8xf32>, vector<2x8x8xf32> -> vector<2x8x8xf32>
    "tpu.trace_stop"() : () -> ()
    %cst_36 = arith.constant 0.353553385 : f32
    %76 = vector.broadcast %cst_36 : f32 to vector<2x8x8xf32>
    %77 = arith.mulf %75, %76 : vector<2x8x8xf32>
    %78 = arith.addf %77, %18 : vector<2x8x8xf32>
    %cst_37 = arith.constant dense<0xFF800000> : vector<2x8xf32>
    %79 = vector.multi_reduction <maximumf>, %78, %cst_37 [2] : vector<2x8x8xf32> to vector<2x8xf32>
    %80 = vector.shape_cast %79 : vector<2x8xf32> to vector<2x8x1xf32>
    %81 = vector.broadcast %80 : vector<2x8x1xf32> to vector<2x8x8xf32>
    %82 = arith.subf %78, %81 : vector<2x8x8xf32>
    %83 = math.exp %82 : vector<2x8x8xf32>
    %cst_38 = arith.constant dense<0.000000e+00> : vector<2x8xf32>
    %84 = vector.multi_reduction <add>, %83, %cst_38 [2] : vector<2x8x8xf32> to vector<2x8xf32>
    %85 = vector.shape_cast %84 : vector<2x8xf32> to vector<2x8x1xf32>
    %86 = vector.broadcast %85 : vector<2x8x1xf32> to vector<2x8x8xf32>
    %87 = arith.divf %83, %86 : vector<2x8x8xf32>
    %c0_39 = arith.constant 0 : index
    %c0_40 = arith.constant 0 : index
    %c16 = arith.constant 16 : index
    %c0_41 = arith.constant 0 : index
    %88 = vector.load %arg17[%c0_39, %c0_40, %c16, %c0_41] : memref<2x2x32x8xf32, #tpu.memory_space<vmem>>, vector<1x2x8x8xf32>
    %89 = vector.shape_cast %88 : vector<1x2x8x8xf32> to vector<2x8x8xf32>
    %90 = vector.shape_cast %87 : vector<2x8x8xf32> to vector<1x2x8x8xf32>
    tpu.vector_store %arg17[%c0_39, %c0_40, %c16, %c0_41], %90 {strides = array<i32>} : memref<2x2x32x8xf32, #tpu.memory_space<vmem>>, vector<1x2x8x8xf32>,
    "tpu.trace_start"() <{level = 10 : i32, message = "bqk,bkd->bqd"}> : () -> ()
    %cst_42 = arith.constant dense<0.000000e+00> : vector<2x8x8xf32>
    %91 = tpu.matmul %87, %74, %cst_42 {dimension_numbers = #tpu.dot_dimension_numbers<[2], [1], [1], [2], [0, 0, 0, 1, 1, 2], [0], [0]>} : vector<2x8x8xf32>, vector<2x8x8xf32>, vector<2x8x8xf32> -> vector<2x8x8xf32>
    "tpu.trace_stop"() : () -> ()
    %92 = vector.extract_strided_slice %27 {offsets = [0, 0, 24], sizes = [2, 8, 8], strides = [1, 1, 1]} : vector<2x8x32xf32> to vector<2x8x8xf32>
    %93 = vector.extract_strided_slice %29 {offsets = [0, 0, 24], sizes = [2, 8, 8], strides = [1, 1, 1]} : vector<2x8x32xf32> to vector<2x8x8xf32>
    %94 = vector.extract_strided_slice %31 {offsets = [0, 0, 24], sizes = [2, 8, 8], strides = [1, 1, 1]} : vector<2x8x32xf32> to vector<2x8x8xf32>
    "tpu.trace_start"() <{level = 10 : i32, message = "bqd,bkd->bqk"}> : () -> ()
    %cst_43 = arith.constant dense<0.000000e+00> : vector<2x8x8xf32>
    %95 = tpu.matmul %92, %93, %cst_43 {dimension_numbers = #tpu.dot_dimension_numbers<[2], [2], [1], [1], [0, 0, 0, 1, 1, 1], [0], [0]>} : vector<2x8x8xf32>, vector<2x8x8xf32>, vector<2x8x8xf32> -> vector<2x8x8xf32>
    "tpu.trace_stop"() : () -> ()
    %cst_44 = arith.constant 0.353553385 : f32
    %96 = vector.broadcast %cst_44 : f32 to vector<2x8x8xf32>
    %97 = arith.mulf %95, %96 : vector<2x8x8xf32>
    %98 = arith.addf %97, %18 : vector<2x8x8xf32>
    %cst_45 = arith.constant dense<0xFF800000> : vector<2x8xf32>
    %99 = vector.multi_reduction <maximumf>, %98, %cst_45 [2] : vector<2x8x8xf32> to vector<2x8xf32>
    %100 = vector.shape_cast %99 : vector<2x8xf32> to vector<2x8x1xf32>
    %101 = vector.broadcast %100 : vector<2x8x1xf32> to vector<2x8x8xf32>
    %102 = arith.subf %98, %101 : vector<2x8x8xf32>
    %103 = math.exp %102 : vector<2x8x8xf32>
    %cst_46 = arith.constant dense<0.000000e+00> : vector<2x8xf32>
    %104 = vector.multi_reduction <add>, %103, %cst_46 [2] : vector<2x8x8xf32> to vector<2x8xf32>
    %105 = vector.shape_cast %104 : vector<2x8xf32> to vector<2x8x1xf32>
    %106 = vector.broadcast %105 : vector<2x8x1xf32> to vector<2x8x8xf32>
    %107 = arith.divf %103, %106 : vector<2x8x8xf32>
    %c0_47 = arith.constant 0 : index
    %c0_48 = arith.constant 0 : index
    %c24 = arith.constant 24 : index
    %c0_49 = arith.constant 0 : index
    %108 = vector.load %arg17[%c0_47, %c0_48, %c24, %c0_49] : memref<2x2x32x8xf32, #tpu.memory_space<vmem>>, vector<1x2x8x8xf32>
    %109 = vector.shape_cast %108 : vector<1x2x8x8xf32> to vector<2x8x8xf32>
    %110 = vector.shape_cast %107 : vector<2x8x8xf32> to vector<1x2x8x8xf32>
    tpu.vector_store %arg17[%c0_47, %c0_48, %c24, %c0_49], %110 {strides = array<i32>} : memref<2x2x32x8xf32, #tpu.memory_space<vmem>>, vector<1x2x8x8xf32>,
    "tpu.trace_start"() <{level = 10 : i32, message = "bqk,bkd->bqd"}> : () -> ()
    %cst_50 = arith.constant dense<0.000000e+00> : vector<2x8x8xf32>
    %111 = tpu.matmul %107, %94, %cst_50 {dimension_numbers = #tpu.dot_dimension_numbers<[2], [1], [1], [2], [0, 0, 0, 1, 1, 2], [0], [0]>} : vector<2x8x8xf32>, vector<2x8x8xf32>, vector<2x8x8xf32> -> vector<2x8x8xf32>
    "tpu.trace_stop"() : () -> ()
    %112 = tpu.concatenate %51, %71, %91, %111 in 2 : vector<2x8x8xf32>, vector<2x8x8xf32>, vector<2x8x8xf32>, vector<2x8x8xf32> -> vector<2x8x32xf32>
    %113 = vector.shape_cast %112 : vector<2x8x32xf32> to vector<16x32xf32>
    %c0_51 = arith.constant 0 : index
    %c0_52 = arith.constant 0 : index
    %c0_53 = arith.constant 0 : index
    %114 = vector.load %arg6[%c0_51, %c0_52, %c0_53] : memref<2x32x32xf32, #tpu.memory_space<vmem>>, vector<1x32x32xf32>
    %115 = vector.shape_cast %114 : vector<1x32x32xf32> to vector<32x32xf32>
    %cst_54 = arith.constant dense<0.000000e+00> : vector<16x32xf32>
    %116 = tpu.matmul %113, %115, %cst_54 {dimension_numbers = #tpu.dot_dimension_numbers<[1], [0], [0], [1], [0, 0, 1, 1], [], []>} : vector<16x32xf32>, vector<32x32xf32>, vector<16x32xf32> -> vector<16x32xf32>
    %c0_55 = arith.constant 0 : index
    %c0_56 = arith.constant 0 : index
    %c0_57 = arith.constant 0 : index
    %117 = vector.load %arg7[%c0_55, %c0_56, %c0_57] : memref<2x1x32xf32, #tpu.memory_space<vmem>>, vector<1x1x32xf32>
    %118 = vector.shape_cast %117 : vector<1x1x32xf32> to vector<1x32xf32>
    %119 = vector.broadcast %118 : vector<1x32xf32> to vector<16x32xf32>
    %120 = arith.addf %116, %119 : vector<16x32xf32>
    %121 = arith.addf %120, %11 : vector<16x32xf32>
    %c0_58 = arith.constant 0 : index
    %c0_59 = arith.constant 0 : index
    %c0_60 = arith.constant 0 : index
    %122 = vector.load %arg8[%c0_58, %c0_59, %c0_60] : memref<2x1x32xf32, #tpu.memory_space<vmem>>, vector<1x1x32xf32>
    %123 = vector.shape_cast %122 : vector<1x1x32xf32> to vector<1x32xf32>
    %c0_61 = arith.constant 0 : index
    %c0_62 = arith.constant 0 : index
    %c0_63 = arith.constant 0 : index
    %124 = vector.load %arg9[%c0_61, %c0_62, %c0_63] : memref<2x1x32xf32, #tpu.memory_space<vmem>>, vector<1x1x32xf32>
    %125 = vector.shape_cast %124 : vector<1x1x32xf32> to vector<1x32xf32>
    %cst_64 = arith.constant dense<0.000000e+00> : vector<16xf32>
    %126 = vector.multi_reduction <add>, %121, %cst_64 [1] : vector<16x32xf32> to vector<16xf32>
    %127 = vector.shape_cast %126 : vector<16xf32> to vector<16x1xf32>
    %cst_65 = arith.constant 3.200000e+01 : f32
    %128 = vector.broadcast %cst_65 : f32 to vector<16x1xf32>
    %129 = arith.divf %127, %128 : vector<16x1xf32>
    %130 = vector.broadcast %129 : vector<16x1xf32> to vector<16x32xf32>
    %131 = arith.subf %121, %130 : vector<16x32xf32>
    %132 = arith.mulf %131, %131 : vector<16x32xf32>
    %cst_66 = arith.constant dense<0.000000e+00> : vector<16xf32>
    %133 = vector.multi_reduction <add>, %132, %cst_66 [1] : vector<16x32xf32> to vector<16xf32>
    %134 = vector.shape_cast %133 : vector<16xf32> to vector<16x1xf32>
    %cst_67 = arith.constant 3.200000e+01 : f32
    %135 = vector.broadcast %cst_67 : f32 to vector<16x1xf32>
    %136 = arith.divf %134, %135 : vector<16x1xf32>
    %cst_68 = arith.constant 9.99999974E-6 : f32
    %137 = vector.broadcast %cst_68 : f32 to vector<16x1xf32>
    %138 = arith.addf %136, %137 : vector<16x1xf32>
    %139 = math.rsqrt %138 : vector<16x1xf32>
    %140 = vector.broadcast %139 : vector<16x1xf32> to vector<16x32xf32>
    %141 = arith.mulf %131, %140 : vector<16x32xf32>
    %142 = vector.broadcast %123 : vector<1x32xf32> to vector<16x32xf32>
    %143 = arith.mulf %141, %142 : vector<16x32xf32>
    %144 = vector.broadcast %125 : vector<1x32xf32> to vector<16x32xf32>
    %145 = arith.addf %143, %144 : vector<16x32xf32>
    %c0_69 = arith.constant 0 : index
    %c0_70 = arith.constant 0 : index
    %c0_71 = arith.constant 0 : index
    %146 = vector.load %arg10[%c0_69, %c0_70, %c0_71] : memref<2x32x64xf32, #tpu.memory_space<vmem>>, vector<1x32x64xf32>
    %147 = vector.shape_cast %146 : vector<1x32x64xf32> to vector<32x64xf32>
    %cst_72 = arith.constant dense<0.000000e+00> : vector<16x64xf32>
    %148 = tpu.matmul %145, %147, %cst_72 {dimension_numbers = #tpu.dot_dimension_numbers<[1], [0], [0], [1], [0, 0, 1, 1], [], []>} : vector<16x32xf32>, vector<32x64xf32>, vector<16x64xf32> -> vector<16x64xf32>
    %c0_73 = arith.constant 0 : index
    %c0_74 = arith.constant 0 : index
    %c0_75 = arith.constant 0 : index
    %149 = vector.load %arg11[%c0_73, %c0_74, %c0_75] : memref<2x1x64xf32, #tpu.memory_space<vmem>>, vector<1x1x64xf32>
    %150 = vector.shape_cast %149 : vector<1x1x64xf32> to vector<1x64xf32>
    %151 = vector.broadcast %150 : vector<1x64xf32> to vector<16x64xf32>
    %152 = arith.addf %148, %151 : vector<16x64xf32>
    %cst_76 = arith.constant 0.000000e+00 : f32
    %153 = vector.broadcast %cst_76 : f32 to vector<16x64xf32>
    %154 = arith.maximumf %152, %153 : vector<16x64xf32>
    %c0_77 = arith.constant 0 : index
    %c0_78 = arith.constant 0 : index
    %c0_79 = arith.constant 0 : index
    %155 = vector.load %arg12[%c0_77, %c0_78, %c0_79] : memref<2x64x32xf32, #tpu.memory_space<vmem>>, vector<1x64x32xf32>
    %156 = vector.shape_cast %155 : vector<1x64x32xf32> to vector<64x32xf32>
    %cst_80 = arith.constant dense<0.000000e+00> : vector<16x32xf32>
    %157 = tpu.matmul %154, %156, %cst_80 {dimension_numbers = #tpu.dot_dimension_numbers<[1], [0], [0], [1], [0, 0, 1, 1], [], []>} : vector<16x64xf32>, vector<64x32xf32>, vector<16x32xf32> -> vector<16x32xf32>
    %c0_81 = arith.constant 0 : index
    %c0_82 = arith.constant 0 : index
    %c0_83 = arith.constant 0 : index
    %158 = vector.load %arg13[%c0_81, %c0_82, %c0_83] : memref<2x1x32xf32, #tpu.memory_space<vmem>>, vector<1x1x32xf32>
    %159 = vector.shape_cast %158 : vector<1x1x32xf32> to vector<1x32xf32>
    %160 = vector.broadcast %159 : vector<1x32xf32> to vector<16x32xf32>
    %161 = arith.addf %157, %160 : vector<16x32xf32>
    %162 = arith.addf %161, %145 : vector<16x32xf32>
    %c0_84 = arith.constant 0 : index
    %c0_85 = arith.constant 0 : index
    %c0_86 = arith.constant 0 : index
    %163 = vector.load %arg14[%c0_84, %c0_85, %c0_86] : memref<2x1x32xf32, #tpu.memory_space<vmem>>, vector<1x1x32xf32>
    %164 = vector.shape_cast %163 : vector<1x1x32xf32> to vector<1x32xf32>
    %c0_87 = arith.constant 0 : index
    %c0_88 = arith.constant 0 : index
    %c0_89 = arith.constant 0 : index
    %165 = vector.load %arg15[%c0_87, %c0_88, %c0_89] : memref<2x1x32xf32, #tpu.memory_space<vmem>>, vector<1x1x32xf32>
    %166 = vector.shape_cast %165 : vector<1x1x32xf32> to vector<1x32xf32>
    %cst_90 = arith.constant dense<0.000000e+00> : vector<16xf32>
    %167 = vector.multi_reduction <add>, %162, %cst_90 [1] : vector<16x32xf32> to vector<16xf32>
    %168 = vector.shape_cast %167 : vector<16xf32> to vector<16x1xf32>
    %cst_91 = arith.constant 3.200000e+01 : f32
    %169 = vector.broadcast %cst_91 : f32 to vector<16x1xf32>
    %170 = arith.divf %168, %169 : vector<16x1xf32>
    %171 = vector.broadcast %170 : vector<16x1xf32> to vector<16x32xf32>
    %172 = arith.subf %162, %171 : vector<16x32xf32>
    %173 = arith.mulf %172, %172 : vector<16x32xf32>
    %cst_92 = arith.constant dense<0.000000e+00> : vector<16xf32>
    %174 = vector.multi_reduction <add>, %173, %cst_92 [1] : vector<16x32xf32> to vector<16xf32>
    %175 = vector.shape_cast %174 : vector<16xf32> to vector<16x1xf32>
    %cst_93 = arith.constant 3.200000e+01 : f32
    %176 = vector.broadcast %cst_93 : f32 to vector<16x1xf32>
    %177 = arith.divf %175, %176 : vector<16x1xf32>
    %cst_94 = arith.constant 9.99999974E-6 : f32
    %178 = vector.broadcast %cst_94 : f32 to vector<16x1xf32>
    %179 = arith.addf %177, %178 : vector<16x1xf32>
    %180 = math.rsqrt %179 : vector<16x1xf32>
    %181 = vector.broadcast %180 : vector<16x1xf32> to vector<16x32xf32>
    %182 = arith.mulf %172, %181 : vector<16x32xf32>
    %183 = vector.broadcast %164 : vector<1x32xf32> to vector<16x32xf32>
    %184 = arith.mulf %182, %183 : vector<16x32xf32>
    %185 = vector.broadcast %166 : vector<1x32xf32> to vector<16x32xf32>
    %186 = arith.addf %184, %185 : vector<16x32xf32>
    %c1 = arith.constant 1 : index
    %c0_95 = arith.constant 0 : index
    %c0_96 = arith.constant 0 : index
    %187 = vector.load %arg4[%c1, %c0_95, %c0_96] : memref<2x32x96xf32, #tpu.memory_space<vmem>>, vector<1x32x96xf32>
    %188 = vector.shape_cast %187 : vector<1x32x96xf32> to vector<32x96xf32>
    %cst_97 = arith.constant dense<0.000000e+00> : vector<16x96xf32>
    %189 = tpu.matmul %186, %188, %cst_97 {dimension_numbers = #tpu.dot_dimension_numbers<[1], [0], [0], [1], [0, 0, 1, 1], [], []>} : vector<16x32xf32>, vector<32x96xf32>, vector<16x96xf32> -> vector<16x96xf32>
    %c1_98 = arith.constant 1 : index
    %c0_99 = arith.constant 0 : index
    %c0_100 = arith.constant 0 : index
    %190 = vector.load %arg5[%c1_98, %c0_99, %c0_100] : memref<2x1x96xf32, #tpu.memory_space<vmem>>, vector<1x1x96xf32>
    %191 = vector.shape_cast %190 : vector<1x1x96xf32> to vector<1x96xf32>
    %192 = vector.broadcast %191 : vector<1x96xf32> to vector<16x96xf32>
    %193 = arith.addf %189, %192 : vector<16x96xf32>
    %194 = vector.extract_strided_slice %193 {offsets = [0, 0], sizes = [16, 32], strides = [1, 1]} : vector<16x96xf32> to vector<16x32xf32>
    %195 = vector.shape_cast %194 : vector<16x32xf32> to vector<2x8x32xf32>
    %196 = vector.extract_strided_slice %193 {offsets = [0, 32], sizes = [16, 32], strides = [1, 1]} : vector<16x96xf32> to vector<16x32xf32>
    %197 = vector.shape_cast %196 : vector<16x32xf32> to vector<2x8x32xf32>
    %198 = vector.extract_strided_slice %193 {offsets = [0, 64], sizes = [16, 32], strides = [1, 1]} : vector<16x96xf32> to vector<16x32xf32>
    %199 = vector.shape_cast %198 : vector<16x32xf32> to vector<2x8x32xf32>
    %200 = vector.extract_strided_slice %195 {offsets = [0, 0, 0], sizes = [2, 8, 8], strides = [1, 1, 1]} : vector<2x8x32xf32> to vector<2x8x8xf32>
    %201 = vector.extract_strided_slice %197 {offsets = [0, 0, 0], sizes = [2, 8, 8], strides = [1, 1, 1]} : vector<2x8x32xf32> to vector<2x8x8xf32>
    %202 = vector.extract_strided_slice %199 {offsets = [0, 0, 0], sizes = [2, 8, 8], strides = [1, 1, 1]} : vector<2x8x32xf32> to vector<2x8x8xf32>
    "tpu.trace_start"() <{level = 10 : i32, message = "bqd,bkd->bqk"}> : () -> ()
    %cst_101 = arith.constant dense<0.000000e+00> : vector<2x8x8xf32>
    %203 = tpu.matmul %200, %201, %cst_101 {dimension_numbers = #tpu.dot_dimension_numbers<[2], [2], [1], [1], [0, 0, 0, 1, 1, 1], [0], [0]>} : vector<2x8x8xf32>, vector<2x8x8xf32>, vector<2x8x8xf32> -> vector<2x8x8xf32>
    "tpu.trace_stop"() : () -> ()
    %cst_102 = arith.constant 0.353553385 : f32
    %204 = vector.broadcast %cst_102 : f32 to vector<2x8x8xf32>
    %205 = arith.mulf %203, %204 : vector<2x8x8xf32>
    %206 = arith.addf %205, %18 : vector<2x8x8xf32>
    %cst_103 = arith.constant dense<0xFF800000> : vector<2x8xf32>
    %207 = vector.multi_reduction <maximumf>, %206, %cst_103 [2] : vector<2x8x8xf32> to vector<2x8xf32>
    %208 = vector.shape_cast %207 : vector<2x8xf32> to vector<2x8x1xf32>
    %209 = vector.broadcast %208 : vector<2x8x1xf32> to vector<2x8x8xf32>
    %210 = arith.subf %206, %209 : vector<2x8x8xf32>
    %211 = math.exp %210 : vector<2x8x8xf32>
    %cst_104 = arith.constant dense<0.000000e+00> : vector<2x8xf32>
    %212 = vector.multi_reduction <add>, %211, %cst_104 [2] : vector<2x8x8xf32> to vector<2x8xf32>
    %213 = vector.shape_cast %212 : vector<2x8xf32> to vector<2x8x1xf32>
    %214 = vector.broadcast %213 : vector<2x8x1xf32> to vector<2x8x8xf32>
    %215 = arith.divf %211, %214 : vector<2x8x8xf32>
    %c1_105 = arith.constant 1 : index
    %c0_106 = arith.constant 0 : index
    %c0_107 = arith.constant 0 : index
    %c0_108 = arith.constant 0 : index
    %216 = vector.load %arg17[%c1_105, %c0_106, %c0_107, %c0_108] : memref<2x2x32x8xf32, #tpu.memory_space<vmem>>, vector<1x2x8x8xf32>
    %217 = vector.shape_cast %216 : vector<1x2x8x8xf32> to vector<2x8x8xf32>
    %218 = vector.shape_cast %215 : vector<2x8x8xf32> to vector<1x2x8x8xf32>
    tpu.vector_store %arg17[%c1_105, %c0_106, %c0_107, %c0_108], %218 {strides = array<i32>} : memref<2x2x32x8xf32, #tpu.memory_space<vmem>>, vector<1x2x8x8xf32>,
    "tpu.trace_start"() <{level = 10 : i32, message = "bqk,bkd->bqd"}> : () -> ()
    %cst_109 = arith.constant dense<0.000000e+00> : vector<2x8x8xf32>
    %219 = tpu.matmul %215, %202, %cst_109 {dimension_numbers = #tpu.dot_dimension_numbers<[2], [1], [1], [2], [0, 0, 0, 1, 1, 2], [0], [0]>} : vector<2x8x8xf32>, vector<2x8x8xf32>, vector<2x8x8xf32> -> vector<2x8x8xf32>
    "tpu.trace_stop"() : () -> ()
    %220 = vector.extract_strided_slice %195 {offsets = [0, 0, 8], sizes = [2, 8, 8], strides = [1, 1, 1]} : vector<2x8x32xf32> to vector<2x8x8xf32>
    %221 = vector.extract_strided_slice %197 {offsets = [0, 0, 8], sizes = [2, 8, 8], strides = [1, 1, 1]} : vector<2x8x32xf32> to vector<2x8x8xf32>
    %222 = vector.extract_strided_slice %199 {offsets = [0, 0, 8], sizes = [2, 8, 8], strides = [1, 1, 1]} : vector<2x8x32xf32> to vector<2x8x8xf32>
    "tpu.trace_start"() <{level = 10 : i32, message = "bqd,bkd->bqk"}> : () -> ()
    %cst_110 = arith.constant dense<0.000000e+00> : vector<2x8x8xf32>
    %223 = tpu.matmul %220, %221, %cst_110 {dimension_numbers = #tpu.dot_dimension_numbers<[2], [2], [1], [1], [0, 0, 0, 1, 1, 1], [0], [0]>} : vector<2x8x8xf32>, vector<2x8x8xf32>, vector<2x8x8xf32> -> vector<2x8x8xf32>
    "tpu.trace_stop"() : () -> ()
    %cst_111 = arith.constant 0.353553385 : f32
    %224 = vector.broadcast %cst_111 : f32 to vector<2x8x8xf32>
    %225 = arith.mulf %223, %224 : vector<2x8x8xf32>
    %226 = arith.addf %225, %18 : vector<2x8x8xf32>
    %cst_112 = arith.constant dense<0xFF800000> : vector<2x8xf32>
    %227 = vector.multi_reduction <maximumf>, %226, %cst_112 [2] : vector<2x8x8xf32> to vector<2x8xf32>
    %228 = vector.shape_cast %227 : vector<2x8xf32> to vector<2x8x1xf32>
    %229 = vector.broadcast %228 : vector<2x8x1xf32> to vector<2x8x8xf32>
    %230 = arith.subf %226, %229 : vector<2x8x8xf32>
    %231 = math.exp %230 : vector<2x8x8xf32>
    %cst_113 = arith.constant dense<0.000000e+00> : vector<2x8xf32>
    %232 = vector.multi_reduction <add>, %231, %cst_113 [2] : vector<2x8x8xf32> to vector<2x8xf32>
    %233 = vector.shape_cast %232 : vector<2x8xf32> to vector<2x8x1xf32>
    %234 = vector.broadcast %233 : vector<2x8x1xf32> to vector<2x8x8xf32>
    %235 = arith.divf %231, %234 : vector<2x8x8xf32>
    %c1_114 = arith.constant 1 : index
    %c0_115 = arith.constant 0 : index
    %c8_116 = arith.constant 8 : index
    %c0_117 = arith.constant 0 : index
    %236 = vector.load %arg17[%c1_114, %c0_115, %c8_116, %c0_117] : memref<2x2x32x8xf32, #tpu.memory_space<vmem>>, vector<1x2x8x8xf32>
    %237 = vector.shape_cast %236 : vector<1x2x8x8xf32> to vector<2x8x8xf32>
    %238 = vector.shape_cast %235 : vector<2x8x8xf32> to vector<1x2x8x8xf32>
    tpu.vector_store %arg17[%c1_114, %c0_115, %c8_116, %c0_117], %238 {strides = array<i32>} : memref<2x2x32x8xf32, #tpu.memory_space<vmem>>, vector<1x2x8x8xf32>,
    "tpu.trace_start"() <{level = 10 : i32, message = "bqk,bkd->bqd"}> : () -> ()
    %cst_118 = arith.constant dense<0.000000e+00> : vector<2x8x8xf32>
    %239 = tpu.matmul %235, %222, %cst_118 {dimension_numbers = #tpu.dot_dimension_numbers<[2], [1], [1], [2], [0, 0, 0, 1, 1, 2], [0], [0]>} : vector<2x8x8xf32>, vector<2x8x8xf32>, vector<2x8x8xf32> -> vector<2x8x8xf32>
    "tpu.trace_stop"() : () -> ()
    %240 = vector.extract_strided_slice %195 {offsets = [0, 0, 16], sizes = [2, 8, 8], strides = [1, 1, 1]} : vector<2x8x32xf32> to vector<2x8x8xf32>
    %241 = vector.extract_strided_slice %197 {offsets = [0, 0, 16], sizes = [2, 8, 8], strides = [1, 1, 1]} : vector<2x8x32xf32> to vector<2x8x8xf32>
    %242 = vector.extract_strided_slice %199 {offsets = [0, 0, 16], sizes = [2, 8, 8], strides = [1, 1, 1]} : vector<2x8x32xf32> to vector<2x8x8xf32>
    "tpu.trace_start"() <{level = 10 : i32, message = "bqd,bkd->bqk"}> : () -> ()
    %cst_119 = arith.constant dense<0.000000e+00> : vector<2x8x8xf32>
    %243 = tpu.matmul %240, %241, %cst_119 {dimension_numbers = #tpu.dot_dimension_numbers<[2], [2], [1], [1], [0, 0, 0, 1, 1, 1], [0], [0]>} : vector<2x8x8xf32>, vector<2x8x8xf32>, vector<2x8x8xf32> -> vector<2x8x8xf32>
    "tpu.trace_stop"() : () -> ()
    %cst_120 = arith.constant 0.353553385 : f32
    %244 = vector.broadcast %cst_120 : f32 to vector<2x8x8xf32>
    %245 = arith.mulf %243, %244 : vector<2x8x8xf32>
    %246 = arith.addf %245, %18 : vector<2x8x8xf32>
    %cst_121 = arith.constant dense<0xFF800000> : vector<2x8xf32>
    %247 = vector.multi_reduction <maximumf>, %246, %cst_121 [2] : vector<2x8x8xf32> to vector<2x8xf32>
    %248 = vector.shape_cast %247 : vector<2x8xf32> to vector<2x8x1xf32>
    %249 = vector.broadcast %248 : vector<2x8x1xf32> to vector<2x8x8xf32>
    %250 = arith.subf %246, %249 : vector<2x8x8xf32>
    %251 = math.exp %250 : vector<2x8x8xf32>
    %cst_122 = arith.constant dense<0.000000e+00> : vector<2x8xf32>
    %252 = vector.multi_reduction <add>, %251, %cst_122 [2] : vector<2x8x8xf32> to vector<2x8xf32>
    %253 = vector.shape_cast %252 : vector<2x8xf32> to vector<2x8x1xf32>
    %254 = vector.broadcast %253 : vector<2x8x1xf32> to vector<2x8x8xf32>
    %255 = arith.divf %251, %254 : vector<2x8x8xf32>
    %c1_123 = arith.constant 1 : index
    %c0_124 = arith.constant 0 : index
    %c16_125 = arith.constant 16 : index
    %c0_126 = arith.constant 0 : index
    %256 = vector.load %arg17[%c1_123, %c0_124, %c16_125, %c0_126] : memref<2x2x32x8xf32, #tpu.memory_space<vmem>>, vector<1x2x8x8xf32>
    %257 = vector.shape_cast %256 : vector<1x2x8x8xf32> to vector<2x8x8xf32>
    %258 = vector.shape_cast %255 : vector<2x8x8xf32> to vector<1x2x8x8xf32>
    tpu.vector_store %arg17[%c1_123, %c0_124, %c16_125, %c0_126], %258 {strides = array<i32>} : memref<2x2x32x8xf32, #tpu.memory_space<vmem>>, vector<1x2x8x8xf32>,
    "tpu.trace_start"() <{level = 10 : i32, message = "bqk,bkd->bqd"}> : () -> ()
    %cst_127 = arith.constant dense<0.000000e+00> : vector<2x8x8xf32>
    %259 = tpu.matmul %255, %242, %cst_127 {dimension_numbers = #tpu.dot_dimension_numbers<[2], [1], [1], [2], [0, 0, 0, 1, 1, 2], [0], [0]>} : vector<2x8x8xf32>, vector<2x8x8xf32>, vector<2x8x8xf32> -> vector<2x8x8xf32>
    "tpu.trace_stop"() : () -> ()
    %260 = vector.extract_strided_slice %195 {offsets = [0, 0, 24], sizes = [2, 8, 8], strides = [1, 1, 1]} : vector<2x8x32xf32> to vector<2x8x8xf32>
    %261 = vector.extract_strided_slice %197 {offsets = [0, 0, 24], sizes = [2, 8, 8], strides = [1, 1, 1]} : vector<2x8x32xf32> to vector<2x8x8xf32>
    %262 = vector.extract_strided_slice %199 {offsets = [0, 0, 24], sizes = [2, 8, 8], strides = [1, 1, 1]} : vector<2x8x32xf32> to vector<2x8x8xf32>
    "tpu.trace_start"() <{level = 10 : i32, message = "bqd,bkd->bqk"}> : () -> ()
    %cst_128 = arith.constant dense<0.000000e+00> : vector<2x8x8xf32>
    %263 = tpu.matmul %260, %261, %cst_128 {dimension_numbers = #tpu.dot_dimension_numbers<[2], [2], [1], [1], [0, 0, 0, 1, 1, 1], [0], [0]>} : vector<2x8x8xf32>, vector<2x8x8xf32>, vector<2x8x8xf32> -> vector<2x8x8xf32>
    "tpu.trace_stop"() : () -> ()
    %cst_129 = arith.constant 0.353553385 : f32
    %264 = vector.broadcast %cst_129 : f32 to vector<2x8x8xf32>
    %265 = arith.mulf %263, %264 : vector<2x8x8xf32>
    %266 = arith.addf %265, %18 : vector<2x8x8xf32>
    %cst_130 = arith.constant dense<0xFF800000> : vector<2x8xf32>
    %267 = vector.multi_reduction <maximumf>, %266, %cst_130 [2] : vector<2x8x8xf32> to vector<2x8xf32>
    %268 = vector.shape_cast %267 : vector<2x8xf32> to vector<2x8x1xf32>
    %269 = vector.broadcast %268 : vector<2x8x1xf32> to vector<2x8x8xf32>
    %270 = arith.subf %266, %269 : vector<2x8x8xf32>
    %271 = math.exp %270 : vector<2x8x8xf32>
    %cst_131 = arith.constant dense<0.000000e+00> : vector<2x8xf32>
    %272 = vector.multi_reduction <add>, %271, %cst_131 [2] : vector<2x8x8xf32> to vector<2x8xf32>
    %273 = vector.shape_cast %272 : vector<2x8xf32> to vector<2x8x1xf32>
    %274 = vector.broadcast %273 : vector<2x8x1xf32> to vector<2x8x8xf32>
    %275 = arith.divf %271, %274 : vector<2x8x8xf32>
    %c1_132 = arith.constant 1 : index
    %c0_133 = arith.constant 0 : index
    %c24_134 = arith.constant 24 : index
    %c0_135 = arith.constant 0 : index
    %276 = vector.load %arg17[%c1_132, %c0_133, %c24_134, %c0_135] : memref<2x2x32x8xf32, #tpu.memory_space<vmem>>, vector<1x2x8x8xf32>
    %277 = vector.shape_cast %276 : vector<1x2x8x8xf32> to vector<2x8x8xf32>
    %278 = vector.shape_cast %275 : vector<2x8x8xf32> to vector<1x2x8x8xf32>
    tpu.vector_store %arg17[%c1_132, %c0_133, %c24_134, %c0_135], %278 {strides = array<i32>} : memref<2x2x32x8xf32, #tpu.memory_space<vmem>>, vector<1x2x8x8xf32>,
    "tpu.trace_start"() <{level = 10 : i32, message = "bqk,bkd->bqd"}> : () -> ()
    %cst_136 = arith.constant dense<0.000000e+00> : vector<2x8x8xf32>
    %279 = tpu.matmul %275, %262, %cst_136 {dimension_numbers = #tpu.dot_dimension_numbers<[2], [1], [1], [2], [0, 0, 0, 1, 1, 2], [0], [0]>} : vector<2x8x8xf32>, vector<2x8x8xf32>, vector<2x8x8xf32> -> vector<2x8x8xf32>
    "tpu.trace_stop"() : () -> ()
    %280 = tpu.concatenate %219, %239, %259, %279 in 2 : vector<2x8x8xf32>, vector<2x8x8xf32>, vector<2x8x8xf32>, vector<2x8x8xf32> -> vector<2x8x32xf32>
    %281 = vector.shape_cast %280 : vector<2x8x32xf32> to vector<16x32xf32>
    %c1_137 = arith.constant 1 : index
    %c0_138 = arith.constant 0 : index
    %c0_139 = arith.constant 0 : index
    %282 = vector.load %arg6[%c1_137, %c0_138, %c0_139] : memref<2x32x32xf32, #tpu.memory_space<vmem>>, vector<1x32x32xf32>
    %283 = vector.shape_cast %282 : vector<1x32x32xf32> to vector<32x32xf32>
    %cst_140 = arith.constant dense<0.000000e+00> : vector<16x32xf32>
    %284 = tpu.matmul %281, %283, %cst_140 {dimension_numbers = #tpu.dot_dimension_numbers<[1], [0], [0], [1], [0, 0, 1, 1], [], []>} : vector<16x32xf32>, vector<32x32xf32>, vector<16x32xf32> -> vector<16x32xf32>
    %c1_141 = arith.constant 1 : index
    %c0_142 = arith.constant 0 : index
    %c0_143 = arith.constant 0 : index
    %285 = vector.load %arg7[%c1_141, %c0_142, %c0_143] : memref<2x1x32xf32, #tpu.memory_space<vmem>>, vector<1x1x32xf32>
    %286 = vector.shape_cast %285 : vector<1x1x32xf32> to vector<1x32xf32>
    %287 = vector.broadcast %286 : vector<1x32xf32> to vector<16x32xf32>
    %288 = arith.addf %284, %287 : vector<16x32xf32>
    %289 = arith.addf %288, %186 : vector<16x32xf32>
    %c1_144 = arith.constant 1 : index
    %c0_145 = arith.constant 0 : index
    %c0_146 = arith.constant 0 : index
    %290 = vector.load %arg8[%c1_144, %c0_145, %c0_146] : memref<2x1x32xf32, #tpu.memory_space<vmem>>, vector<1x1x32xf32>
    %291 = vector.shape_cast %290 : vector<1x1x32xf32> to vector<1x32xf32>
    %c1_147 = arith.constant 1 : index
    %c0_148 = arith.constant 0 : index
    %c0_149 = arith.constant 0 : index
    %292 = vector.load %arg9[%c1_147, %c0_148, %c0_149] : memref<2x1x32xf32, #tpu.memory_space<vmem>>, vector<1x1x32xf32>
    %293 = vector.shape_cast %292 : vector<1x1x32xf32> to vector<1x32xf32>
    %cst_150 = arith.constant dense<0.000000e+00> : vector<16xf32>
    %294 = vector.multi_reduction <add>, %289, %cst_150 [1] : vector<16x32xf32> to vector<16xf32>
    %295 = vector.shape_cast %294 : vector<16xf32> to vector<16x1xf32>
    %cst_151 = arith.constant 3.200000e+01 : f32
    %296 = vector.broadcast %cst_151 : f32 to vector<16x1xf32>
    %297 = arith.divf %295, %296 : vector<16x1xf32>
    %298 = vector.broadcast %297 : vector<16x1xf32> to vector<16x32xf32>
    %299 = arith.subf %289, %298 : vector<16x32xf32>
    %300 = arith.mulf %299, %299 : vector<16x32xf32>
    %cst_152 = arith.constant dense<0.000000e+00> : vector<16xf32>
    %301 = vector.multi_reduction <add>, %300, %cst_152 [1] : vector<16x32xf32> to vector<16xf32>
    %302 = vector.shape_cast %301 : vector<16xf32> to vector<16x1xf32>
    %cst_153 = arith.constant 3.200000e+01 : f32
    %303 = vector.broadcast %cst_153 : f32 to vector<16x1xf32>
    %304 = arith.divf %302, %303 : vector<16x1xf32>
    %cst_154 = arith.constant 9.99999974E-6 : f32
    %305 = vector.broadcast %cst_154 : f32 to vector<16x1xf32>
    %306 = arith.addf %304, %305 : vector<16x1xf32>
    %307 = math.rsqrt %306 : vector<16x1xf32>
    %308 = vector.broadcast %307 : vector<16x1xf32> to vector<16x32xf32>
    %309 = arith.mulf %299, %308 : vector<16x32xf32>
    %310 = vector.broadcast %291 : vector<1x32xf32> to vector<16x32xf32>
    %311 = arith.mulf %309, %310 : vector<16x32xf32>
    %312 = vector.broadcast %293 : vector<1x32xf32> to vector<16x32xf32>
    %313 = arith.addf %311, %312 : vector<16x32xf32>
    %c1_155 = arith.constant 1 : index
    %c0_156 = arith.constant 0 : index
    %c0_157 = arith.constant 0 : index
    %314 = vector.load %arg10[%c1_155, %c0_156, %c0_157] : memref<2x32x64xf32, #tpu.memory_space<vmem>>, vector<1x32x64xf32>
    %315 = vector.shape_cast %314 : vector<1x32x64xf32> to vector<32x64xf32>
    %cst_158 = arith.constant dense<0.000000e+00> : vector<16x64xf32>
    %316 = tpu.matmul %313, %315, %cst_158 {dimension_numbers = #tpu.dot_dimension_numbers<[1], [0], [0], [1], [0, 0, 1, 1], [], []>} : vector<16x32xf32>, vector<32x64xf32>, vector<16x64xf32> -> vector<16x64xf32>
    %c1_159 = arith.constant 1 : index
    %c0_160 = arith.constant 0 : index
    %c0_161 = arith.constant 0 : index
    %317 = vector.load %arg11[%c1_159, %c0_160, %c0_161] : memref<2x1x64xf32, #tpu.memory_space<vmem>>, vector<1x1x64xf32>
    %318 = vector.shape_cast %317 : vector<1x1x64xf32> to vector<1x64xf32>
    %319 = vector.broadcast %318 : vector<1x64xf32> to vector<16x64xf32>
    %320 = arith.addf %316, %319 : vector<16x64xf32>
    %cst_162 = arith.constant 0.000000e+00 : f32
    %321 = vector.broadcast %cst_162 : f32 to vector<16x64xf32>
    %322 = arith.maximumf %320, %321 : vector<16x64xf32>
    %c1_163 = arith.constant 1 : index
    %c0_164 = arith.constant 0 : index
    %c0_165 = arith.constant 0 : index
    %323 = vector.load %arg12[%c1_163, %c0_164, %c0_165] : memref<2x64x32xf32, #tpu.memory_space<vmem>>, vector<1x64x32xf32>
    %324 = vector.shape_cast %323 : vector<1x64x32xf32> to vector<64x32xf32>
    %cst_166 = arith.constant dense<0.000000e+00> : vector<16x32xf32>
    %325 = tpu.matmul %322, %324, %cst_166 {dimension_numbers = #tpu.dot_dimension_numbers<[1], [0], [0], [1], [0, 0, 1, 1], [], []>} : vector<16x64xf32>, vector<64x32xf32>, vector<16x32xf32> -> vector<16x32xf32>
    %c1_167 = arith.constant 1 : index
    %c0_168 = arith.constant 0 : index
    %c0_169 = arith.constant 0 : index
    %326 = vector.load %arg13[%c1_167, %c0_168, %c0_169] : memref<2x1x32xf32, #tpu.memory_space<vmem>>, vector<1x1x32xf32>
    %327 = vector.shape_cast %326 : vector<1x1x32xf32> to vector<1x32xf32>
    %328 = vector.broadcast %327 : vector<1x32xf32> to vector<16x32xf32>
    %329 = arith.addf %325, %328 : vector<16x32xf32>
    %330 = arith.addf %329, %313 : vector<16x32xf32>
    %c1_170 = arith.constant 1 : index
    %c0_171 = arith.constant 0 : index
    %c0_172 = arith.constant 0 : index
    %331 = vector.load %arg14[%c1_170, %c0_171, %c0_172] : memref<2x1x32xf32, #tpu.memory_space<vmem>>, vector<1x1x32xf32>
    %332 = vector.shape_cast %331 : vector<1x1x32xf32> to vector<1x32xf32>
    %c1_173 = arith.constant 1 : index
    %c0_174 = arith.constant 0 : index
    %c0_175 = arith.constant 0 : index
    %333 = vector.load %arg15[%c1_173, %c0_174, %c0_175] : memref<2x1x32xf32, #tpu.memory_space<vmem>>, vector<1x1x32xf32>
    %334 = vector.shape_cast %333 : vector<1x1x32xf32> to vector<1x32xf32>
    %cst_176 = arith.constant dense<0.000000e+00> : vector<16xf32>
    %335 = vector.multi_reduction <add>, %330, %cst_176 [1] : vector<16x32xf32> to vector<16xf32>
    %336 = vector.shape_cast %335 : vector<16xf32> to vector<16x1xf32>
    %cst_177 = arith.constant 3.200000e+01 : f32
    %337 = vector.broadcast %cst_177 : f32 to vector<16x1xf32>
    %338 = arith.divf %336, %337 : vector<16x1xf32>
    %339 = vector.broadcast %338 : vector<16x1xf32> to vector<16x32xf32>
    %340 = arith.subf %330, %339 : vector<16x32xf32>
    %341 = arith.mulf %340, %340 : vector<16x32xf32>
    %cst_178 = arith.constant dense<0.000000e+00> : vector<16xf32>
    %342 = vector.multi_reduction <add>, %341, %cst_178 [1] : vector<16x32xf32> to vector<16xf32>
    %343 = vector.shape_cast %342 : vector<16xf32> to vector<16x1xf32>
    %cst_179 = arith.constant 3.200000e+01 : f32
    %344 = vector.broadcast %cst_179 : f32 to vector<16x1xf32>
    %345 = arith.divf %343, %344 : vector<16x1xf32>
    %cst_180 = arith.constant 9.99999974E-6 : f32
    %346 = vector.broadcast %cst_180 : f32 to vector<16x1xf32>
    %347 = arith.addf %345, %346 : vector<16x1xf32>
    %348 = math.rsqrt %347 : vector<16x1xf32>
    %349 = vector.broadcast %348 : vector<16x1xf32> to vector<16x32xf32>
    %350 = arith.mulf %340, %349 : vector<16x32xf32>
    %351 = vector.broadcast %332 : vector<1x32xf32> to vector<16x32xf32>
    %352 = arith.mulf %350, %351 : vector<16x32xf32>
    %353 = vector.broadcast %334 : vector<1x32xf32> to vector<16x32xf32>
    %354 = arith.addf %352, %353 : vector<16x32xf32>
    %c0_181 = arith.constant 0 : index
    %c0_182 = arith.constant 0 : index
    %355 = vector.load %arg16[%c0_181, %c0_182] : memref<16x32xf32, #tpu.memory_space<vmem>>, vector<16x32xf32>
    tpu.vector_store %arg16[%c0_181, %c0_182], %354 {strides = array<i32>} : memref<16x32xf32, #tpu.memory_space<vmem>>, vector<16x32xf32>,
    return
  }
}

</mosaic_0001>

<llo_original>
// kernel: encoder_forward.1
$region0: #{encoder_forward.1}
  #allocation0 [shape = 'u32[]', space=smem, size = 0x4, offset = 0x4, fixed_abs, tag = 'smem constant byte address 0x4 - core index']
  #allocation1 [shape = 'u32[144,128]{1,0:T(1,128)}', space=vmem, size = 0x12000, scoped, tag = 'internal scratch']
  %s0 = inlined_call_operand.vmem [shape: s32[16,1], index: 0, kind: input, shape index: {}]
  %s1 = inlined_call_operand.vmem [shape: f32[100,32], index: 1, kind: input, shape index: {}]
  %s2 = inlined_call_operand.vmem [shape: f32[16,32], index: 2, kind: input, shape index: {}]
  %s3 = inlined_call_operand.vmem [shape: f32[2,1,8], index: 3, kind: input, shape index: {}]
  %s4 = inlined_call_operand.vmem [shape: f32[2,32,96], index: 4, kind: input, shape index: {}]
  %s5 = inlined_call_operand.vmem [shape: f32[2,1,96], index: 5, kind: input, shape index: {}]
  %s6 = inlined_call_operand.vmem [shape: f32[2,32,32], index: 6, kind: input, shape index: {}]
  %s7 = inlined_call_operand.vmem [shape: f32[2,1,32], index: 7, kind: input, shape index: {}]
  %s8 = inlined_call_operand.vmem [shape: f32[2,1,32], index: 8, kind: input, shape index: {}]
  %s9 = inlined_call_operand.vmem [shape: f32[2,1,32], index: 9, kind: input, shape index: {}]
  %s10 = inlined_call_operand.vmem [shape: f32[2,32,64], index: 10, kind: input, shape index: {}]
  %s11 = inlined_call_operand.vmem [shape: f32[2,1,64], index: 11, kind: input, shape index: {}]
  %s12 = inlined_call_operand.vmem [shape: f32[2,64,32], index: 12, kind: input, shape index: {}]
  %s13 = inlined_call_operand.vmem [shape: f32[2,1,32], index: 13, kind: input, shape index: {}]
  %s14 = inlined_call_operand.vmem [shape: f32[2,1,32], index: 14, kind: input, shape index: {}]
  %s15 = inlined_call_operand.vmem [shape: f32[2,1,32], index: 15, kind: input, shape index: {}]
  %s16 = inlined_call_operand.hbm [shape: f32[16,32], index: 16, kind: output, shape index: {0}]
  %s17 = inlined_call_operand.vmem [shape: f32[2,2,32,8], index: 17, kind: output, shape index: {1}]
  %18 = xla_tuple %s16, %s17
  %s19 = sld [smem:[#allocation0]]
  $region82: #{encoder_forward.1} parent=0
    _
  %s21 = ssub.s32 1, %s19
  %s22 = scalar_select 0, %s21, %s19
  $region1: #{encoder_forward.1} parent=0
    #allocation2 [shape = 'u8[8192]{0}', space=vmem, size = 0x2000, scoped, tag = 'output window, operand 0, single buffered']
    #allocation3 [shape = 's32[1]{0}', space=sflag, size = 0x4, scoped, tag = 'scoped memory for encoder_forward.1']
    %23 = vsyncpa [#allocation3], 0
    // Predicated region
    $region2: #{encoder_forward.1} parent=1 // pred_check
      _
    $region3: #{encoder_forward.1} parent=1 // pred_check_branch
      %25 = sbr.rel (0) target = $region5
    $region4: #{encoder_forward.1} parent=1 // pred_region
      _
    $region5: #{encoder_forward.1} parent=1 // pred_fallthru
      _
    // Predicated region
    $region6: #{encoder_forward.1} parent=1 // pred_check
      _
    $region7: #{encoder_forward.1} parent=1 // pred_check_branch
      %27 = sbr.rel (0) target = $region9
    $region8: #{encoder_forward.1} parent=1 // pred_region
      _
    $region9: #{encoder_forward.1} parent=1 // pred_fallthru
      _
    // Predicated region
    $region10: #{encoder_forward.1} parent=1 // pred_check
      _
    $region11: #{encoder_forward.1} parent=1 // pred_check_branch
      %29 = sbr.rel (0) target = $region13
    $region12: #{encoder_forward.1} parent=1 // pred_region
      _
    $region13: #{encoder_forward.1} parent=1 // pred_fallthru
      _
    // Predicated region
    $region14: #{encoder_forward.1} parent=1 // pred_check
      _
    $region15: #{encoder_forward.1} parent=1 // pred_check_branch
      %31 = sbr.rel (0) target = $region17
    $region16: #{encoder_forward.1} parent=1 // pred_region
      _
    $region17: #{encoder_forward.1} parent=1 // pred_fallthru
      _
    // Predicated region
    $region18: #{encoder_forward.1} parent=1 // pred_check
      _
    $region19: #{encoder_forward.1} parent=1 // pred_check_branch
      %33 = sbr.rel (0) target = $region21
    $region20: #{encoder_forward.1} parent=1 // pred_region
      _
    $region21: #{encoder_forward.1} parent=1 // pred_fallthru
      _
    // Predicated region
    $region22: #{encoder_forward.1} parent=1 // pred_check
      _
    $region23: #{encoder_forward.1} parent=1 // pred_check_branch
      %35 = sbr.rel (0) target = $region25
    $region24: #{encoder_forward.1} parent=1 // pred_region
      _
    $region25: #{encoder_forward.1} parent=1 // pred_fallthru
      _
    // Predicated region
    $region26: #{encoder_forward.1} parent=1 // pred_check
      _
    $region27: #{encoder_forward.1} parent=1 // pred_check_branch
      %37 = sbr.rel (0) target = $region29
    $region28: #{encoder_forward.1} parent=1 // pred_region
      _
    $region29: #{encoder_forward.1} parent=1 // pred_fallthru
      _
    // Predicated region
    $region30: #{encoder_forward.1} parent=1 // pred_check
      _
    $region31: #{encoder_forward.1} parent=1 // pred_check_branch
      %39 = sbr.rel (0) target = $region33
    $region32: #{encoder_forward.1} parent=1 // pred_region
      _
    $region33: #{encoder_forward.1} parent=1 // pred_fallthru
      _
    // Predicated region
    $region34: #{encoder_forward.1} parent=1 // pred_check
      _
    $region35: #{encoder_forward.1} parent=1 // pred_check_branch
      %41 = sbr.rel (0) target = $region37
    $region36: #{encoder_forward.1} parent=1 // pred_region
      _
    $region37: #{encoder_forward.1} parent=1 // pred_fallthru
      _
    // Predicated region
    $region38: #{encoder_forward.1} parent=1 // pred_check
      _
    $region39: #{encoder_forward.1} parent=1 // pred_check_branch
      %43 = sbr.rel (0) target = $region41
    $region40: #{encoder_forward.1} parent=1 // pred_region
      _
    $region41: #{encoder_forward.1} parent=1 // pred_fallthru
      _
    // Predicated region
    $region42: #{encoder_forward.1} parent=1 // pred_check
      _
    $region43: #{encoder_forward.1} parent=1 // pred_check_branch
      %45 = sbr.rel (0) target = $region45
    $region44: #{encoder_forward.1} parent=1 // pred_region
      _
    $region45: #{encoder_forward.1} parent=1 // pred_fallthru
      _
    // Predicated region
    $region46: #{encoder_forward.1} parent=1 // pred_check
      _
    $region47: #{encoder_forward.1} parent=1 // pred_check_branch
      %47 = sbr.rel (0) target = $region49
    $region48: #{encoder_forward.1} parent=1 // pred_region
      _
    $region49: #{encoder_forward.1} parent=1 // pred_fallthru
      _
    // Predicated region
    $region50: #{encoder_forward.1} parent=1 // pred_check
      _
    $region51: #{encoder_forward.1} parent=1 // pred_check_branch
      %49 = sbr.rel (0) target = $region53
    $region52: #{encoder_forward.1} parent=1 // pred_region
      _
    $region53: #{encoder_forward.1} parent=1 // pred_fallthru
      _
    // Predicated region
    $region54: #{encoder_forward.1} parent=1 // pred_check
      _
    $region55: #{encoder_forward.1} parent=1 // pred_check_branch
      %51 = sbr.rel (0) target = $region57
    $region56: #{encoder_forward.1} parent=1 // pred_region
      _
    $region57: #{encoder_forward.1} parent=1 // pred_fallthru
      _
    // Predicated region
    $region58: #{encoder_forward.1} parent=1 // pred_check
      _
    $region59: #{encoder_forward.1} parent=1 // pred_check_branch
      %53 = sbr.rel (0) target = $region61
    $region60: #{encoder_forward.1} parent=1 // pred_region
      _
    $region61: #{encoder_forward.1} parent=1 // pred_fallthru
      _
    // Predicated region
    $region62: #{encoder_forward.1} parent=1 // pred_check
      _
    $region63: #{encoder_forward.1} parent=1 // pred_check_branch
      %55 = sbr.rel (0) target = $region65
    $region64: #{encoder_forward.1} parent=1 // pred_region
      _
    $region65: #{encoder_forward.1} parent=1 // pred_fallthru
      _
    %v56 = vld [vmem:[%s0] sm:$0xff]
    %v57 = vld [vmem:[%s0 + $0x8] sm:$0xff]
    %v58 = vlaneseq
    %v59 = vand.u32 %v58, 127
    %60 = vset.pattern.permute.xlu0 0
    %61 = vperm.xlu0 %60, %v56
    %v62 = vpop.permute.xlu0 %61
    %63 = vset.pattern.permute.xlu0 0
    %64 = vperm.xlu0 %63, %v57
    %v65 = vpop.permute.xlu0 %64
    %vm66 = vcmp.eq.s32.totalorder %v59, %v62
    %vm67 = vcmp.eq.s32.totalorder %v59, %v65
    %v68 = vsel %vm66, 1, 0
    %v69 = vsel %vm67, 1, 0
    %v70 = vcvt.s32.f32 %v68
    %v71 = vcvt.s32.f32 %v69
    %v72 = vld [vmem:[%s1] sm:$0xff]
    %v73 = vld [vmem:[%s1 + $0x8] sm:$0xff]
    %v74 = vld [vmem:[%s1 + $0x10] sm:$0xff]
    %v75 = vld [vmem:[%s1 + $0x18] sm:$0xff]
    %v76 = vld [vmem:[%s1 + $0x20] sm:$0xff]
    %v77 = vld [vmem:[%s1 + $0x28] sm:$0xff]
    %v78 = vld [vmem:[%s1 + $0x30] sm:$0xff]
    %v79 = vld [vmem:[%s1 + $0x38] sm:$0xff]
    %v80 = vld [vmem:[%s1 + $0x40] sm:$0xff]
    %v81 = vld [vmem:[%s1 + $0x48] sm:$0xff]
    %v82 = vld [vmem:[%s1 + $0x50] sm:$0xff]
    %v83 = vld [vmem:[%s1 + $0x58] sm:$0xff]
    %v84 = vld [vmem:[%s1 + $0x60] sm:$0xf]
    %vm85 = vcmask 818176
    %v87 = vsel %vm85, %v70, 0
    %v90 = vsel %vm85, %v71, 0
    %vm92 = vcmask 1043456
    %v94 = vsel %vm92, %v84, 0
    %96 = vmatprep.subr.mxu0 0.0
    %97 = vmatpush1.msra.mxu0 0.0
    %98 = vmatprep.subr.mxu0 0.0
    %99 = vmatpush1.msra.mxu0 0.0
    %100 = vmatprep.subr.mxu0 0.0
    %101 = vmatpush1.msra.mxu0 0.0
    %102 = vmatprep.subr.mxu0 0.0
    %103 = vmatpush1.msra.mxu0 %v94
    %104 = vmatprep.subr.mxu0 0.0
    %105 = vmatpush1.msra.mxu0 %v83
    %106 = vmatprep.subr.mxu0 0.0
    %107 = vmatpush1.msra.mxu0 %v82
    %108 = vmatprep.subr.mxu0 0.0
    %109 = vmatpush1.msra.mxu0 %v81
    %110 = vmatprep.subr.mxu0 0.0
    %111 = vmatpush1.msra.mxu0 %v80
    %112 = vmatprep.subr.mxu0 0.0
    %113 = vmatpush1.msra.mxu0 %v79
    %114 = vmatprep.subr.mxu0 0.0
    %115 = vmatpush1.msra.mxu0 %v78
    %116 = vmatprep.subr.mxu0 0.0
    %117 = vmatpush1.msra.mxu0 %v77
    %118 = vmatprep.subr.mxu0 0.0
    %119 = vmatpush1.msra.mxu0 %v76
    %120 = vmatprep.subr.mxu0 0.0
    %121 = vmatpush1.msra.mxu0 %v75
    %122 = vmatprep.subr.mxu0 0.0
    %123 = vmatpush1.msra.mxu0 %v74
    %124 = vmatprep.subr.mxu0 0.0
    %125 = vmatpush1.msra.mxu0 %v73
    %126 = vmatprep.subr.mxu0 0.0
    %127 = vmatpush1.msra.mxu0 %v72
    %128 = vmatprep.subr.mxu0 0.0
    %129 = vmatpush2.msra.mxu0 0.0
    %130 = vmatprep.subr.mxu0 0.0
    %131 = vmatpush2.msra.mxu0 0.0
    %132 = vmatprep.subr.mxu0 0.0
    %133 = vmatpush2.msra.mxu0 0.0
    %134 = vmatprep.subr.mxu0 0.0
    %135 = vmatpush2.msra.mxu0 0.0
    %136 = vmatprep.subr.mxu0 0.0
    %137 = vmatpush2.msra.mxu0 0.0
    %138 = vmatprep.subr.mxu0 0.0
    %139 = vmatpush2.msra.mxu0 0.0
    %140 = vmatprep.subr.mxu0 0.0
    %141 = vmatpush2.msra.mxu0 0.0
    %142 = vmatprep.subr.mxu0 0.0
    %143 = vmatpush2.msra.mxu0 0.0
    %144 = vmatprep.subr.mxu0 0.0
    %145 = vmatpush2.msra.mxu0 0.0
    %146 = vmatprep.subr.mxu0 0.0
    %147 = vmatpush2.msra.mxu0 0.0
    %148 = vmatprep.subr.mxu0 0.0
    %149 = vmatpush2.msra.mxu0 0.0
    %150 = vmatprep.subr.mxu0 0.0
    %151 = vmatpush2.msra.mxu0 0.0
    %152 = vmatprep.subr.mxu0 0.0
    %153 = vmatpush2.msra.mxu0 0.0
    %154 = vmatprep.subr.mxu0 0.0
    %155 = vmatpush2.msra.mxu0 0.0
    %156 = vmatprep.subr.mxu0 0.0
    %157 = vmatpush2.msra.mxu0 0.0
    %158 = vmatprep.subr.mxu0 0.0
    %159 = vmatpush2.msra.mxu0 0.0
    %160 = vmatprep.mubr.f32.mxu0 0.0
    %161 = vmatmul.mubr.f32.gmra.mxu0 %v87
    %v162 = vpop.f32.mrf.mxu0
    %v163 = vadd.f32 0.0, %v162
    %v164 = vpop.f32.mrf.mxu0
    %165 = vmatprep.mubr.f32.mxu0 0.0
    %166 = vmatmul.mubr.f32.gmra.mxu0 %v90
    %v167 = vpop.f32.mrf.mxu0
    %v168 = vadd.f32 0.0, %v167
    %v169 = vpop.f32.mrf.mxu0
    %170 = vdwg.mxu0
    %v171 = vmul.f32 %v163, 5.656854
    %v172 = vmul.f32 %v168, 5.656854
    %v173 = vld [vmem:[%s2] sm:$0xff]
    %v174 = vld [vmem:[%s2 + $0x8] sm:$0xff]
    %v175 = vadd.f32 %v171, %v173
    %v176 = vadd.f32 %v172, %v174
    %v177 = vld [vmem:[%s3] sm:$0x1]
    %v178 = vld [vmem:[%s3 + $0x1] sm:$0x1]
    %v179 = vsub.f32 %v177, 1.0
    %v180 = vsub.f32 %v178, 1.0
    %v181 = vmul.f32 %v179, 1e+09
    %v182 = vmul.f32 %v180, 1e+09
    %v185 = vlaneseq
    %v186 = vshrl.u32 %v185, 7
    %v187 = vsub.s32 0, %v186
    %v188 = vrot.slane %v181, %v187
    %v189 = vlaneseq
    %v190 = vshrl.u32 %v189, 7
    %v191 = vsub.s32 0, %v190
    %v192 = vrot.slane %v182, %v191
    %v195 = vld [vmem:[%s4] sm:$0xff]
    %v196 = vld [vmem:[%s4 + $0x8] sm:$0xff]
    %v197 = vld [vmem:[%s4 + $0x10] sm:$0xff]
    %v198 = vld [vmem:[%s4 + $0x18] sm:$0xff]
    %v199 = vld [vmem:[%s5] sm:$0x1]
    %v201 = vlaneseq
    %v202 = vshrl.u32 %v201, 7
    %v203 = vsub.s32 0, %v202
    %v204 = vrot.slane %v199, %v203
    %vm206 = vcmask 261120
    %v208 = vsel %vm206, %v175, 0
    %v211 = vsel %vm206, %v176, 0
    %213 = vmatprep.subr.mxu0 0.0
    %214 = vmatpush1.msra.mxu0 0.0
    %215 = vmatprep.subr.mxu0 0.0
    %216 = vmatpush1.msra.mxu0 0.0
    %217 = vmatprep.subr.mxu0 0.0
    %218 = vmatpush1.msra.mxu0 0.0
    %219 = vmatprep.subr.mxu0 0.0
    %220 = vmatpush1.msra.mxu0 0.0
    %221 = vmatprep.subr.mxu0 0.0
    %222 = vmatpush1.msra.mxu0 0.0
    %223 = vmatprep.subr.mxu0 0.0
    %224 = vmatpush1.msra.mxu0 0.0
    %225 = vmatprep.subr.mxu0 0.0
    %226 = vmatpush1.msra.mxu0 0.0
    %227 = vmatprep.subr.mxu0 0.0
    %228 = vmatpush1.msra.mxu0 0.0
    %229 = vmatprep.subr.mxu0 0.0
    %230 = vmatpush1.msra.mxu0 0.0
    %231 = vmatprep.subr.mxu0 0.0
    %232 = vmatpush1.msra.mxu0 0.0
    %233 = vmatprep.subr.mxu0 0.0
    %234 = vmatpush1.msra.mxu0 0.0
    %235 = vmatprep.subr.mxu0 0.0
    %236 = vmatpush1.msra.mxu0 0.0
    %237 = vmatprep.subr.mxu0 0.0
    %238 = vmatpush1.msra.mxu0 %v198
    %239 = vmatprep.subr.mxu0 0.0
    %240 = vmatpush1.msra.mxu0 %v197
    %241 = vmatprep.subr.mxu0 0.0
    %242 = vmatpush1.msra.mxu0 %v196
    %243 = vmatprep.subr.mxu0 0.0
    %244 = vmatpush1.msra.mxu0 %v195
    %245 = vmatprep.subr.mxu0 0.0
    %246 = vmatpush2.msra.mxu0 0.0
    %247 = vmatprep.subr.mxu0 0.0
    %248 = vmatpush2.msra.mxu0 0.0
    %249 = vmatprep.subr.mxu0 0.0
    %250 = vmatpush2.msra.mxu0 0.0
    %251 = vmatprep.subr.mxu0 0.0
    %252 = vmatpush2.msra.mxu0 0.0
    %253 = vmatprep.subr.mxu0 0.0
    %254 = vmatpush2.msra.mxu0 0.0
    %255 = vmatprep.subr.mxu0 0.0
    %256 = vmatpush2.msra.mxu0 0.0
    %257 = vmatprep.subr.mxu0 0.0
    %258 = vmatpush2.msra.mxu0 0.0
    %259 = vmatprep.subr.mxu0 0.0
    %260 = vmatpush2.msra.mxu0 0.0
    %261 = vmatprep.subr.mxu0 0.0
    %262 = vmatpush2.msra.mxu0 0.0
    %263 = vmatprep.subr.mxu0 0.0
    %264 = vmatpush2.msra.mxu0 0.0
    %265 = vmatprep.subr.mxu0 0.0
    %266 = vmatpush2.msra.mxu0 0.0
    %267 = vmatprep.subr.mxu0 0.0
    %268 = vmatpush2.msra.mxu0 0.0
    %269 = vmatprep.subr.mxu0 0.0
    %270 = vmatpush2.msra.mxu0 0.0
    %271 = vmatprep.subr.mxu0 0.0
    %272 = vmatpush2.msra.mxu0 0.0
    %273 = vmatprep.subr.mxu0 0.0
    %274 = vmatpush2.msra.mxu0 0.0
    %275 = vmatprep.subr.mxu0 0.0
    %276 = vmatpush2.msra.mxu0 0.0
    %277 = vmatprep.mubr.f32.mxu0 0.0
    %278 = vmatmul.mubr.f32.gmra.mxu0 %v208
    %v279 = vpop.f32.mrf.mxu0
    %v280 = vadd.f32 %v204, %v279
    %v281 = vpop.f32.mrf.mxu0
    %282 = vmatprep.mubr.f32.mxu0 0.0
    %283 = vmatmul.mubr.f32.gmra.mxu0 %v211
    %v284 = vpop.f32.mrf.mxu0
    %v285 = vadd.f32 %v204, %v284
    %v286 = vpop.f32.mrf.mxu0
    %287 = vdwg.mxu0
    %289 = vrot.lane.b32.xlu0 %v280, 96
    %v290 = vpop.permute.xlu0 %289
    %vm291 = vcmask 64512
    %v292 = vsel %vm291, %v280, 0
    %v294 = vsel %vm291, %v290, 0
    %296 = vmatprep.subr.mxu0 0.0
    %297 = vmatpush1.xpose.msra.mxu0 0.0
    %298 = vmatprep.subr.mxu0 0.0
    %299 = vmatpush1.xpose.msra.mxu0 0.0
    %300 = vmatprep.subr.mxu0 0.0
    %301 = vmatpush1.xpose.msra.mxu0 0.0
    %302 = vmatprep.subr.mxu0 0.0
    %303 = vmatpush1.xpose.msra.mxu0 0.0
    %304 = vmatprep.subr.mxu0 0.0
    %305 = vmatpush1.xpose.msra.mxu0 0.0
    %306 = vmatprep.subr.mxu0 0.0
    %307 = vmatpush1.xpose.msra.mxu0 0.0
    %308 = vmatprep.subr.mxu0 0.0
    %309 = vmatpush1.xpose.msra.mxu0 0.0
    %310 = vmatprep.subr.mxu0 0.0
    %311 = vmatpush1.xpose.msra.mxu0 0.0
    %312 = vmatprep.subr.mxu0 0.0
    %313 = vmatpush1.xpose.msra.mxu0 0.0
    %314 = vmatprep.subr.mxu0 0.0
    %315 = vmatpush1.xpose.msra.mxu0 0.0
    %316 = vmatprep.subr.mxu0 0.0
    %317 = vmatpush1.xpose.msra.mxu0 0.0
    %318 = vmatprep.subr.mxu0 0.0
    %319 = vmatpush1.xpose.msra.mxu0 0.0
    %320 = vmatprep.subr.mxu0 0.0
    %321 = vmatpush1.xpose.msra.mxu0 0.0
    %322 = vmatprep.subr.mxu0 0.0
    %323 = vmatpush1.xpose.msra.mxu0 0.0
    %324 = vmatprep.subr.mxu0 0.0
    %325 = vmatpush1.xpose.msra.mxu0 0.0
    %326 = vmatprep.subr.mxu0 0.0
    %327 = vmatpush1.xpose.msra.mxu0 %v294
    %328 = vmatprep.subr.mxu0 0.0
    %329 = vmatpush2.xpose.msra.mxu0 0.0
    %330 = vmatprep.subr.mxu0 0.0
    %331 = vmatpush2.xpose.msra.mxu0 0.0
    %332 = vmatprep.subr.mxu0 0.0
    %333 = vmatpush2.xpose.msra.mxu0 0.0
    %334 = vmatprep.subr.mxu0 0.0
    %335 = vmatpush2.xpose.msra.mxu0 0.0
    %336 = vmatprep.subr.mxu0 0.0
    %337 = vmatpush2.xpose.msra.mxu0 0.0
    %338 = vmatprep.subr.mxu0 0.0
    %339 = vmatpush2.xpose.msra.mxu0 0.0
    %340 = vmatprep.subr.mxu0 0.0
    %341 = vmatpush2.xpose.msra.mxu0 0.0
    %342 = vmatprep.subr.mxu0 0.0
    %343 = vmatpush2.xpose.msra.mxu0 0.0
    %344 = vmatprep.subr.mxu0 0.0
    %345 = vmatpush2.xpose.msra.mxu0 0.0
    %346 = vmatprep.subr.mxu0 0.0
    %347 = vmatpush2.xpose.msra.mxu0 0.0
    %348 = vmatprep.subr.mxu0 0.0
    %349 = vmatpush2.xpose.msra.mxu0 0.0
    %350 = vmatprep.subr.mxu0 0.0
    %351 = vmatpush2.xpose.msra.mxu0 0.0
    %352 = vmatprep.subr.mxu0 0.0
    %353 = vmatpush2.xpose.msra.mxu0 0.0
    %354 = vmatprep.subr.mxu0 0.0
    %355 = vmatpush2.xpose.msra.mxu0 0.0
    %356 = vmatprep.subr.mxu0 0.0
    %357 = vmatpush2.xpose.msra.mxu0 0.0
    %358 = vmatprep.subr.mxu0 0.0
    %359 = vmatpush2.xpose.msra.mxu0 0.0
    %360 = vmatprep.mubr.f32.mxu0 0.0
    %361 = vmatmul.mubr.f32.gmra.mxu0 %v292
    %v362 = vpop.f32.mrf.mxu0
    %v363 = vadd.f32 0.0, %v362
    %v364 = vpop.f32.mrf.mxu0
    %365 = vdwg.mxu0
    %367 = vrot.lane.b32.xlu0 %v285, 96
    %v368 = vpop.permute.xlu0 %367
    %v369 = vsel %vm291, %v285, 0
    %v371 = vsel %vm291, %v368, 0
    %373 = vmatprep.subr.mxu0 0.0
    %374 = vmatpush1.xpose.msra.mxu0 0.0
    %375 = vmatprep.subr.mxu0 0.0
    %376 = vmatpush1.xpose.msra.mxu0 0.0
    %377 = vmatprep.subr.mxu0 0.0
    %378 = vmatpush1.xpose.msra.mxu0 0.0
    %379 = vmatprep.subr.mxu0 0.0
    %380 = vmatpush1.xpose.msra.mxu0 0.0
    %381 = vmatprep.subr.mxu0 0.0
    %382 = vmatpush1.xpose.msra.mxu0 0.0
    %383 = vmatprep.subr.mxu0 0.0
    %384 = vmatpush1.xpose.msra.mxu0 0.0
    %385 = vmatprep.subr.mxu0 0.0
    %386 = vmatpush1.xpose.msra.mxu0 0.0
    %387 = vmatprep.subr.mxu0 0.0
    %388 = vmatpush1.xpose.msra.mxu0 0.0
    %389 = vmatprep.subr.mxu0 0.0
    %390 = vmatpush1.xpose.msra.mxu0 0.0
    %391 = vmatprep.subr.mxu0 0.0
    %392 = vmatpush1.xpose.msra.mxu0 0.0
    %393 = vmatprep.subr.mxu0 0.0
    %394 = vmatpush1.xpose.msra.mxu0 0.0
    %395 = vmatprep.subr.mxu0 0.0
    %396 = vmatpush1.xpose.msra.mxu0 0.0
    %397 = vmatprep.subr.mxu0 0.0
    %398 = vmatpush1.xpose.msra.mxu0 0.0
    %399 = vmatprep.subr.mxu0 0.0
    %400 = vmatpush1.xpose.msra.mxu0 0.0
    %401 = vmatprep.subr.mxu0 0.0
    %402 = vmatpush1.xpose.msra.mxu0 0.0
    %403 = vmatprep.subr.mxu0 0.0
    %404 = vmatpush1.xpose.msra.mxu0 %v371
    %405 = vmatprep.subr.mxu0 0.0
    %406 = vmatpush2.xpose.msra.mxu0 0.0
    %407 = vmatprep.subr.mxu0 0.0
    %408 = vmatpush2.xpose.msra.mxu0 0.0
    %409 = vmatprep.subr.mxu0 0.0
    %410 = vmatpush2.xpose.msra.mxu0 0.0
    %411 = vmatprep.subr.mxu0 0.0
    %412 = vmatpush2.xpose.msra.mxu0 0.0
    %413 = vmatprep.subr.mxu0 0.0
    %414 = vmatpush2.xpose.msra.mxu0 0.0
    %415 = vmatprep.subr.mxu0 0.0
    %416 = vmatpush2.xpose.msra.mxu0 0.0
    %417 = vmatprep.subr.mxu0 0.0
    %418 = vmatpush2.xpose.msra.mxu0 0.0
    %419 = vmatprep.subr.mxu0 0.0
    %420 = vmatpush2.xpose.msra.mxu0 0.0
    %421 = vmatprep.subr.mxu0 0.0
    %422 = vmatpush2.xpose.msra.mxu0 0.0
    %423 = vmatprep.subr.mxu0 0.0
    %424 = vmatpush2.xpose.msra.mxu0 0.0
    %425 = vmatprep.subr.mxu0 0.0
    %426 = vmatpush2.xpose.msra.mxu0 0.0
    %427 = vmatprep.subr.mxu0 0.0
    %428 = vmatpush2.xpose.msra.mxu0 0.0
    %429 = vmatprep.subr.mxu0 0.0
    %430 = vmatpush2.xpose.msra.mxu0 0.0
    %431 = vmatprep.subr.mxu0 0.0
    %432 = vmatpush2.xpose.msra.mxu0 0.0
    %433 = vmatprep.subr.mxu0 0.0
    %434 = vmatpush2.xpose.msra.mxu0 0.0
    %435 = vmatprep.subr.mxu0 0.0
    %436 = vmatpush2.xpose.msra.mxu0 0.0
    %437 = vmatprep.mubr.f32.mxu0 0.0
    %438 = vmatmul.mubr.f32.gmra.mxu0 %v369
    %v439 = vpop.f32.mrf.mxu0
    %v440 = vadd.f32 0.0, %v439
    %v441 = vpop.f32.mrf.mxu0
    %442 = vdwg.mxu0
    %v443 = vmul.f32 %v363, 0.35355338
    %v444 = vmul.f32 %v440, 0.35355338
    %v445 = vadd.f32 %v443, %v188
    %v446 = vadd.f32 %v444, %v192
    %v447 = vsel %vm291, %v445, -inf
    %448 = vmax.xlane.f32.xlu0 %v447
    %v449 = vpop.xlane.xlu0 %448
    %v450 = vsel %vm291, %v446, -inf
    %451 = vmax.xlane.f32.xlu0 %v450
    %v452 = vpop.xlane.xlu0 %451
    %v453 = vsub.f32 %v445, %v449
    %v454 = vsub.f32 %v446, %v452
    %v455 = vmul.f32 %v453, 1.442695
    %v456 = vpow.pop %v455
    %v457 = vmul.f32 %v454, 1.442695
    %v458 = vpow.pop %v457
    %v459 = vsel %vm291, %v456, 0.0
    %460 = vadd.xlane.f32.xlu0 %v459
    %v461 = vpop.xlane.xlu0 %460
    %v462 = vsel %vm291, %v458, 0.0
    %463 = vadd.xlane.f32.xlu0 %v462
    %v464 = vpop.xlane.xlu0 %463
    %v465 = vrcp.pop %v461
    %v466 = vmul.f32 %v456, %v465
    %v467 = vrcp.pop %v464
    %v468 = vmul.f32 %v458, %v467
    %469 = vst.msk [vmem:[%s17] sm:$0xff] %vm291, %v466
    %470 = vst.msk [vmem:[%s17 + $0x20] sm:$0xff] %vm291, %v468
    %471 = vrot.lane.b32.xlu0 %v280, 64
    %v472 = vpop.permute.xlu0 %471
    %v475 = vsel %vm291, %v466, 0
    %477 = vmatprep.subr.mxu0 0.0
    %478 = vmatpush1.msra.mxu0 0.0
    %479 = vmatprep.subr.mxu0 0.0
    %480 = vmatpush1.msra.mxu0 0.0
    %481 = vmatprep.subr.mxu0 0.0
    %482 = vmatpush1.msra.mxu0 0.0
    %483 = vmatprep.subr.mxu0 0.0
    %484 = vmatpush1.msra.mxu0 0.0
    %485 = vmatprep.subr.mxu0 0.0
    %486 = vmatpush1.msra.mxu0 0.0
    %487 = vmatprep.subr.mxu0 0.0
    %488 = vmatpush1.msra.mxu0 0.0
    %489 = vmatprep.subr.mxu0 0.0
    %490 = vmatpush1.msra.mxu0 0.0
    %491 = vmatprep.subr.mxu0 0.0
    %492 = vmatpush1.msra.mxu0 0.0
    %493 = vmatprep.subr.mxu0 0.0
    %494 = vmatpush1.msra.mxu0 0.0
    %495 = vmatprep.subr.mxu0 0.0
    %496 = vmatpush1.msra.mxu0 0.0
    %497 = vmatprep.subr.mxu0 0.0
    %498 = vmatpush1.msra.mxu0 0.0
    %499 = vmatprep.subr.mxu0 0.0
    %500 = vmatpush1.msra.mxu0 0.0
    %501 = vmatprep.subr.mxu0 0.0
    %502 = vmatpush1.msra.mxu0 0.0
    %503 = vmatprep.subr.mxu0 0.0
    %504 = vmatpush1.msra.mxu0 0.0
    %505 = vmatprep.subr.mxu0 0.0
    %506 = vmatpush1.msra.mxu0 0.0
    %507 = vmatprep.subr.mxu0 0.0
    %508 = vmatpush1.msra.mxu0 %v472
    %509 = vmatprep.subr.mxu0 0.0
    %510 = vmatpush2.msra.mxu0 0.0
    %511 = vmatprep.subr.mxu0 0.0
    %512 = vmatpush2.msra.mxu0 0.0
    %513 = vmatprep.subr.mxu0 0.0
    %514 = vmatpush2.msra.mxu0 0.0
    %515 = vmatprep.subr.mxu0 0.0
    %516 = vmatpush2.msra.mxu0 0.0
    %517 = vmatprep.subr.mxu0 0.0
    %518 = vmatpush2.msra.mxu0 0.0
    %519 = vmatprep.subr.mxu0 0.0
    %520 = vmatpush2.msra.mxu0 0.0
    %521 = vmatprep.subr.mxu0 0.0
    %522 = vmatpush2.msra.mxu0 0.0
    %523 = vmatprep.subr.mxu0 0.0
    %524 = vmatpush2.msra.mxu0 0.0
    %525 = vmatprep.subr.mxu0 0.0
    %526 = vmatpush2.msra.mxu0 0.0
    %527 = vmatprep.subr.mxu0 0.0
    %528 = vmatpush2.msra.mxu0 0.0
    %529 = vmatprep.subr.mxu0 0.0
    %530 = vmatpush2.msra.mxu0 0.0
    %531 = vmatprep.subr.mxu0 0.0
    %532 = vmatpush2.msra.mxu0 0.0
    %533 = vmatprep.subr.mxu0 0.0
    %534 = vmatpush2.msra.mxu0 0.0
    %535 = vmatprep.subr.mxu0 0.0
    %536 = vmatpush2.msra.mxu0 0.0
    %537 = vmatprep.subr.mxu0 0.0
    %538 = vmatpush2.msra.mxu0 0.0
    %539 = vmatprep.subr.mxu0 0.0
    %540 = vmatpush2.msra.mxu0 0.0
    %541 = vmatprep.mubr.f32.mxu0 0.0
    %542 = vmatmul.mubr.f32.gmra.mxu0 %v475
    %v543 = vpop.f32.mrf.mxu0
    %v544 = vadd.f32 0.0, %v543
    %v545 = vpop.f32.mrf.mxu0
    %546 = vdwg.mxu0
    %547 = vrot.lane.b32.xlu0 %v285, 64
    %v548 = vpop.permute.xlu0 %547
    %v551 = vsel %vm291, %v468, 0
    %553 = vmatprep.subr.mxu0 0.0
    %554 = vmatpush1.msra.mxu0 0.0
    %555 = vmatprep.subr.mxu0 0.0
    %556 = vmatpush1.msra.mxu0 0.0
    %557 = vmatprep.subr.mxu0 0.0
    %558 = vmatpush1.msra.mxu0 0.0
    %559 = vmatprep.subr.mxu0 0.0
    %560 = vmatpush1.msra.mxu0 0.0
    %561 = vmatprep.subr.mxu0 0.0
    %562 = vmatpush1.msra.mxu0 0.0
    %563 = vmatprep.subr.mxu0 0.0
    %564 = vmatpush1.msra.mxu0 0.0
    %565 = vmatprep.subr.mxu0 0.0
    %566 = vmatpush1.msra.mxu0 0.0
    %567 = vmatprep.subr.mxu0 0.0
    %568 = vmatpush1.msra.mxu0 0.0
    %569 = vmatprep.subr.mxu0 0.0
    %570 = vmatpush1.msra.mxu0 0.0
    %571 = vmatprep.subr.mxu0 0.0
    %572 = vmatpush1.msra.mxu0 0.0
    %573 = vmatprep.subr.mxu0 0.0
    %574 = vmatpush1.msra.mxu0 0.0
    %575 = vmatprep.subr.mxu0 0.0
    %576 = vmatpush1.msra.mxu0 0.0
    %577 = vmatprep.subr.mxu0 0.0
    %578 = vmatpush1.msra.mxu0 0.0
    %579 = vmatprep.subr.mxu0 0.0
    %580 = vmatpush1.msra.mxu0 0.0
    %581 = vmatprep.subr.mxu0 0.0
    %582 = vmatpush1.msra.mxu0 0.0
    %583 = vmatprep.subr.mxu0 0.0
    %584 = vmatpush1.msra.mxu0 %v548
    %585 = vmatprep.subr.mxu0 0.0
    %586 = vmatpush2.msra.mxu0 0.0
    %587 = vmatprep.subr.mxu0 0.0
    %588 = vmatpush2.msra.mxu0 0.0
    %589 = vmatprep.subr.mxu0 0.0
    %590 = vmatpush2.msra.mxu0 0.0
    %591 = vmatprep.subr.mxu0 0.0
    %592 = vmatpush2.msra.mxu0 0.0
    %593 = vmatprep.subr.mxu0 0.0
    %594 = vmatpush2.msra.mxu0 0.0
    %595 = vmatprep.subr.mxu0 0.0
    %596 = vmatpush2.msra.mxu0 0.0
    %597 = vmatprep.subr.mxu0 0.0
    %598 = vmatpush2.msra.mxu0 0.0
    %599 = vmatprep.subr.mxu0 0.0
    %600 = vmatpush2.msra.mxu0 0.0
    %601 = vmatprep.subr.mxu0 0.0
    %602 = vmatpush2.msra.mxu0 0.0
    %603 = vmatprep.subr.mxu0 0.0
    %604 = vmatpush2.msra.mxu0 0.0
    %605 = vmatprep.subr.mxu0 0.0
    %606 = vmatpush2.msra.mxu0 0.0
    %607 = vmatprep.subr.mxu0 0.0
    %608 = vmatpush2.msra.mxu0 0.0
    %609 = vmatprep.subr.mxu0 0.0
    %610 = vmatpush2.msra.mxu0 0.0
    %611 = vmatprep.subr.mxu0 0.0
    %612 = vmatpush2.msra.mxu0 0.0
    %613 = vmatprep.subr.mxu0 0.0
    %614 = vmatpush2.msra.mxu0 0.0
    %615 = vmatprep.subr.mxu0 0.0
    %616 = vmatpush2.msra.mxu0 0.0
    %617 = vmatprep.mubr.f32.mxu0 0.0
    %618 = vmatmul.mubr.f32.gmra.mxu0 %v551
    %v619 = vpop.f32.mrf.mxu0
    %v620 = vadd.f32 0.0, %v619
    %v621 = vpop.f32.mrf.mxu0
    %622 = vdwg.mxu0
    %623 = vrot.lane.b32.xlu0 %v280, 120
    %v624 = vpop.permute.xlu0 %623
    %625 = vrot.lane.b32.xlu0 %v280, 88
    %v626 = vpop.permute.xlu0 %625
    %v627 = vsel %vm291, %v624, 0
    %v629 = vsel %vm291, %v626, 0
    %631 = vmatprep.subr.mxu0 0.0
    %632 = vmatpush1.xpose.msra.mxu0 0.0
    %633 = vmatprep.subr.mxu0 0.0
    %634 = vmatpush1.xpose.msra.mxu0 0.0
    %635 = vmatprep.subr.mxu0 0.0
    %636 = vmatpush1.xpose.msra.mxu0 0.0
    %637 = vmatprep.subr.mxu0 0.0
    %638 = vmatpush1.xpose.msra.mxu0 0.0
    %639 = vmatprep.subr.mxu0 0.0
    %640 = vmatpush1.xpose.msra.mxu0 0.0
    %641 = vmatprep.subr.mxu0 0.0
    %642 = vmatpush1.xpose.msra.mxu0 0.0
    %643 = vmatprep.subr.mxu0 0.0
    %644 = vmatpush1.xpose.msra.mxu0 0.0
    %645 = vmatprep.subr.mxu0 0.0
    %646 = vmatpush1.xpose.msra.mxu0 0.0
    %647 = vmatprep.subr.mxu0 0.0
    %648 = vmatpush1.xpose.msra.mxu0 0.0
    %649 = vmatprep.subr.mxu0 0.0
    %650 = vmatpush1.xpose.msra.mxu0 0.0
    %651 = vmatprep.subr.mxu0 0.0
    %652 = vmatpush1.xpose.msra.mxu0 0.0
    %653 = vmatprep.subr.mxu0 0.0
    %654 = vmatpush1.xpose.msra.mxu0 0.0
    %655 = vmatprep.subr.mxu0 0.0
    %656 = vmatpush1.xpose.msra.mxu0 0.0
    %657 = vmatprep.subr.mxu0 0.0
    %658 = vmatpush1.xpose.msra.mxu0 0.0
    %659 = vmatprep.subr.mxu0 0.0
    %660 = vmatpush1.xpose.msra.mxu0 0.0
    %661 = vmatprep.subr.mxu0 0.0
    %662 = vmatpush1.xpose.msra.mxu0 %v629
    %663 = vmatprep.subr.mxu0 0.0
    %664 = vmatpush2.xpose.msra.mxu0 0.0
    %665 = vmatprep.subr.mxu0 0.0
    %666 = vmatpush2.xpose.msra.mxu0 0.0
    %667 = vmatprep.subr.mxu0 0.0
    %668 = vmatpush2.xpose.msra.mxu0 0.0
    %669 = vmatprep.subr.mxu0 0.0
    %670 = vmatpush2.xpose.msra.mxu0 0.0
    %671 = vmatprep.subr.mxu0 0.0
    %672 = vmatpush2.xpose.msra.mxu0 0.0
    %673 = vmatprep.subr.mxu0 0.0
    %674 = vmatpush2.xpose.msra.mxu0 0.0
    %675 = vmatprep.subr.mxu0 0.0
    %676 = vmatpush2.xpose.msra.mxu0 0.0
    %677 = vmatprep.subr.mxu0 0.0
    %678 = vmatpush2.xpose.msra.mxu0 0.0
    %679 = vmatprep.subr.mxu0 0.0
    %680 = vmatpush2.xpose.msra.mxu0 0.0
    %681 = vmatprep.subr.mxu0 0.0
    %682 = vmatpush2.xpose.msra.mxu0 0.0
    %683 = vmatprep.subr.mxu0 0.0
    %684 = vmatpush2.xpose.msra.mxu0 0.0
    %685 = vmatprep.subr.mxu0 0.0
    %686 = vmatpush2.xpose.msra.mxu0 0.0
    %687 = vmatprep.subr.mxu0 0.0
    %688 = vmatpush2.xpose.msra.mxu0 0.0
    %689 = vmatprep.subr.mxu0 0.0
    %690 = vmatpush2.xpose.msra.mxu0 0.0
    %691 = vmatprep.subr.mxu0 0.0
    %692 = vmatpush2.xpose.msra.mxu0 0.0
    %693 = vmatprep.subr.mxu0 0.0
    %694 = vmatpush2.xpose.msra.mxu0 0.0
    %695 = vmatprep.mubr.f32.mxu0 0.0
    %696 = vmatmul.mubr.f32.gmra.mxu0 %v627
    %v697 = vpop.f32.mrf.mxu0
    %v698 = vadd.f32 0.0, %v697
    %v699 = vpop.f32.mrf.mxu0
    %700 = vdwg.mxu0
    %701 = vrot.lane.b32.xlu0 %v285, 120
    %v702 = vpop.permute.xlu0 %701
    %703 = vrot.lane.b32.xlu0 %v285, 88
    %v704 = vpop.permute.xlu0 %703
    %v705 = vsel %vm291, %v702, 0
    %v707 = vsel %vm291, %v704, 0
    %709 = vmatprep.subr.mxu0 0.0
    %710 = vmatpush1.xpose.msra.mxu0 0.0
    %711 = vmatprep.subr.mxu0 0.0
    %712 = vmatpush1.xpose.msra.mxu0 0.0
    %713 = vmatprep.subr.mxu0 0.0
    %714 = vmatpush1.xpose.msra.mxu0 0.0
    %715 = vmatprep.subr.mxu0 0.0
    %716 = vmatpush1.xpose.msra.mxu0 0.0
    %717 = vmatprep.subr.mxu0 0.0
    %718 = vmatpush1.xpose.msra.mxu0 0.0
    %719 = vmatprep.subr.mxu0 0.0
    %720 = vmatpush1.xpose.msra.mxu0 0.0
    %721 = vmatprep.subr.mxu0 0.0
    %722 = vmatpush1.xpose.msra.mxu0 0.0
    %723 = vmatprep.subr.mxu0 0.0
    %724 = vmatpush1.xpose.msra.mxu0 0.0
    %725 = vmatprep.subr.mxu0 0.0
    %726 = vmatpush1.xpose.msra.mxu0 0.0
    %727 = vmatprep.subr.mxu0 0.0
    %728 = vmatpush1.xpose.msra.mxu0 0.0
    %729 = vmatprep.subr.mxu0 0.0
    %730 = vmatpush1.xpose.msra.mxu0 0.0
    %731 = vmatprep.subr.mxu0 0.0
    %732 = vmatpush1.xpose.msra.mxu0 0.0
    %733 = vmatprep.subr.mxu0 0.0
    %734 = vmatpush1.xpose.msra.mxu0 0.0
    %735 = vmatprep.subr.mxu0 0.0
    %736 = vmatpush1.xpose.msra.mxu0 0.0
    %737 = vmatprep.subr.mxu0 0.0
    %738 = vmatpush1.xpose.msra.mxu0 0.0
    %739 = vmatprep.subr.mxu0 0.0
    %740 = vmatpush1.xpose.msra.mxu0 %v707
    %741 = vmatprep.subr.mxu0 0.0
    %742 = vmatpush2.xpose.msra.mxu0 0.0
    %743 = vmatprep.subr.mxu0 0.0
    %744 = vmatpush2.xpose.msra.mxu0 0.0
    %745 = vmatprep.subr.mxu0 0.0
    %746 = vmatpush2.xpose.msra.mxu0 0.0
    %747 = vmatprep.subr.mxu0 0.0
    %748 = vmatpush2.xpose.msra.mxu0 0.0
    %749 = vmatprep.subr.mxu0 0.0
    %750 = vmatpush2.xpose.msra.mxu0 0.0
    %751 = vmatprep.subr.mxu0 0.0
    %752 = vmatpush2.xpose.msra.mxu0 0.0
    %753 = vmatprep.subr.mxu0 0.0
    %754 = vmatpush2.xpose.msra.mxu0 0.0
    %755 = vmatprep.subr.mxu0 0.0
    %756 = vmatpush2.xpose.msra.mxu0 0.0
    %757 = vmatprep.subr.mxu0 0.0
    %758 = vmatpush2.xpose.msra.mxu0 0.0
    %759 = vmatprep.subr.mxu0 0.0
    %760 = vmatpush2.xpose.msra.mxu0 0.0
    %761 = vmatprep.subr.mxu0 0.0
    %762 = vmatpush2.xpose.msra.mxu0 0.0
    %763 = vmatprep.subr.mxu0 0.0
    %764 = vmatpush2.xpose.msra.mxu0 0.0
    %765 = vmatprep.subr.mxu0 0.0
    %766 = vmatpush2.xpose.msra.mxu0 0.0
    %767 = vmatprep.subr.mxu0 0.0
    %768 = vmatpush2.xpose.msra.mxu0 0.0
    %769 = vmatprep.subr.mxu0 0.0
    %770 = vmatpush2.xpose.msra.mxu0 0.0
    %771 = vmatprep.subr.mxu0 0.0
    %772 = vmatpush2.xpose.msra.mxu0 0.0
    %773 = vmatprep.mubr.f32.mxu0 0.0
    %774 = vmatmul.mubr.f32.gmra.mxu0 %v705
    %v775 = vpop.f32.mrf.mxu0
    %v776 = vadd.f32 0.0, %v775
    %v777 = vpop.f32.mrf.mxu0
    %778 = vdwg.mxu0
    %v779 = vmul.f32 %v698, 0.35355338
    %v780 = vmul.f32 %v776, 0.35355338
    %v781 = vadd.f32 %v779, %v188
    %v782 = vadd.f32 %v780, %v192
    %v783 = vsel %vm291, %v781, -inf
    %784 = vmax.xlane.f32.xlu0 %v783
    %v785 = vpop.xlane.xlu0 %784
    %v786 = vsel %vm291, %v782, -inf
    %787 = vmax.xlane.f32.xlu0 %v786
    %v788 = vpop.xlane.xlu0 %787
    %v789 = vsub.f32 %v781, %v785
    %v790 = vsub.f32 %v782, %v788
    %v791 = vmul.f32 %v789, 1.442695
    %v792 = vpow.pop %v791
    %v793 = vmul.f32 %v790, 1.442695
    %v794 = vpow.pop %v793
    %v795 = vsel %vm291, %v792, 0.0
    %796 = vadd.xlane.f32.xlu0 %v795
    %v797 = vpop.xlane.xlu0 %796
    %v798 = vsel %vm291, %v794, 0.0
    %799 = vadd.xlane.f32.xlu0 %v798
    %v800 = vpop.xlane.xlu0 %799
    %v801 = vrcp.pop %v797
    %v802 = vmul.f32 %v792, %v801
    %v803 = vrcp.pop %v800
    %v804 = vmul.f32 %v794, %v803
    %805 = vst.msk [vmem:[%s17 + $0x8] sm:$0xff] %vm291, %v802
    %806 = vst.msk [vmem:[%s17 + $0x28] sm:$0xff] %vm291, %v804
    %807 = vrot.lane.b32.xlu0 %v280, 56
    %v808 = vpop.permute.xlu0 %807
    %v811 = vsel %vm291, %v802, 0
    %813 = vmatprep.subr.mxu0 0.0
    %814 = vmatpush1.msra.mxu0 0.0
    %815 = vmatprep.subr.mxu0 0.0
    %816 = vmatpush1.msra.mxu0 0.0
    %817 = vmatprep.subr.mxu0 0.0
    %818 = vmatpush1.msra.mxu0 0.0
    %819 = vmatprep.subr.mxu0 0.0
    %820 = vmatpush1.msra.mxu0 0.0
    %821 = vmatprep.subr.mxu0 0.0
    %822 = vmatpush1.msra.mxu0 0.0
    %823 = vmatprep.subr.mxu0 0.0
    %824 = vmatpush1.msra.mxu0 0.0
    %825 = vmatprep.subr.mxu0 0.0
    %826 = vmatpush1.msra.mxu0 0.0
    %827 = vmatprep.subr.mxu0 0.0
    %828 = vmatpush1.msra.mxu0 0.0
    %829 = vmatprep.subr.mxu0 0.0
    %830 = vmatpush1.msra.mxu0 0.0
    %831 = vmatprep.subr.mxu0 0.0
    %832 = vmatpush1.msra.mxu0 0.0
    %833 = vmatprep.subr.mxu0 0.0
    %834 = vmatpush1.msra.mxu0 0.0
    %835 = vmatprep.subr.mxu0 0.0
    %836 = vmatpush1.msra.mxu0 0.0
    %837 = vmatprep.subr.mxu0 0.0
    %838 = vmatpush1.msra.mxu0 0.0
    %839 = vmatprep.subr.mxu0 0.0
    %840 = vmatpush1.msra.mxu0 0.0
    %841 = vmatprep.subr.mxu0 0.0
    %842 = vmatpush1.msra.mxu0 0.0
    %843 = vmatprep.subr.mxu0 0.0
    %844 = vmatpush1.msra.mxu0 %v808
    %845 = vmatprep.subr.mxu0 0.0
    %846 = vmatpush2.msra.mxu0 0.0
    %847 = vmatprep.subr.mxu0 0.0
    %848 = vmatpush2.msra.mxu0 0.0
    %849 = vmatprep.subr.mxu0 0.0
    %850 = vmatpush2.msra.mxu0 0.0
    %851 = vmatprep.subr.mxu0 0.0
    %852 = vmatpush2.msra.mxu0 0.0
    %853 = vmatprep.subr.mxu0 0.0
    %854 = vmatpush2.msra.mxu0 0.0
    %855 = vmatprep.subr.mxu0 0.0
    %856 = vmatpush2.msra.mxu0 0.0
    %857 = vmatprep.subr.mxu0 0.0
    %858 = vmatpush2.msra.mxu0 0.0
    %859 = vmatprep.subr.mxu0 0.0
    %860 = vmatpush2.msra.mxu0 0.0
    %861 = vmatprep.subr.mxu0 0.0
    %862 = vmatpush2.msra.mxu0 0.0
    %863 = vmatprep.subr.mxu0 0.0
    %864 = vmatpush2.msra.mxu0 0.0
    %865 = vmatprep.subr.mxu0 0.0
    %866 = vmatpush2.msra.mxu0 0.0
    %867 = vmatprep.subr.mxu0 0.0
    %868 = vmatpush2.msra.mxu0 0.0
    %869 = vmatprep.subr.mxu0 0.0
    %870 = vmatpush2.msra.mxu0 0.0
    %871 = vmatprep.subr.mxu0 0.0
    %872 = vmatpush2.msra.mxu0 0.0
    %873 = vmatprep.subr.mxu0 0.0
    %874 = vmatpush2.msra.mxu0 0.0
    %875 = vmatprep.subr.mxu0 0.0
    %876 = vmatpush2.msra.mxu0 0.0
    %877 = vmatprep.mubr.f32.mxu0 0.0
    %878 = vmatmul.mubr.f32.gmra.mxu0 %v811
    %v879 = vpop.f32.mrf.mxu0
    %v880 = vadd.f32 0.0, %v879
    %v881 = vpop.f32.mrf.mxu0
    %882 = vdwg.mxu0
    %883 = vrot.lane.b32.xlu0 %v285, 56
    %v884 = vpop.permute.xlu0 %883
    %v887 = vsel %vm291, %v804, 0
    %889 = vmatprep.subr.mxu0 0.0
    %890 = vmatpush1.msra.mxu0 0.0
    %891 = vmatprep.subr.mxu0 0.0
    %892 = vmatpush1.msra.mxu0 0.0
    %893 = vmatprep.subr.mxu0 0.0
    %894 = vmatpush1.msra.mxu0 0.0
    %895 = vmatprep.subr.mxu0 0.0
    %896 = vmatpush1.msra.mxu0 0.0
    %897 = vmatprep.subr.mxu0 0.0
    %898 = vmatpush1.msra.mxu0 0.0
    %899 = vmatprep.subr.mxu0 0.0
    %900 = vmatpush1.msra.mxu0 0.0
    %901 = vmatprep.subr.mxu0 0.0
    %902 = vmatpush1.msra.mxu0 0.0
    %903 = vmatprep.subr.mxu0 0.0
    %904 = vmatpush1.msra.mxu0 0.0
    %905 = vmatprep.subr.mxu0 0.0
    %906 = vmatpush1.msra.mxu0 0.0
    %907 = vmatprep.subr.mxu0 0.0
    %908 = vmatpush1.msra.mxu0 0.0
    %909 = vmatprep.subr.mxu0 0.0
    %910 = vmatpush1.msra.mxu0 0.0
    %911 = vmatprep.subr.mxu0 0.0
    %912 = vmatpush1.msra.mxu0 0.0
    %913 = vmatprep.subr.mxu0 0.0
    %914 = vmatpush1.msra.mxu0 0.0
    %915 = vmatprep.subr.mxu0 0.0
    %916 = vmatpush1.msra.mxu0 0.0
    %917 = vmatprep.subr.mxu0 0.0
    %918 = vmatpush1.msra.mxu0 0.0
    %919 = vmatprep.subr.mxu0 0.0
    %920 = vmatpush1.msra.mxu0 %v884
    %921 = vmatprep.subr.mxu0 0.0
    %922 = vmatpush2.msra.mxu0 0.0
    %923 = vmatprep.subr.mxu0 0.0
    %924 = vmatpush2.msra.mxu0 0.0
    %925 = vmatprep.subr.mxu0 0.0
    %926 = vmatpush2.msra.mxu0 0.0
    %927 = vmatprep.subr.mxu0 0.0
    %928 = vmatpush2.msra.mxu0 0.0
    %929 = vmatprep.subr.mxu0 0.0
    %930 = vmatpush2.msra.mxu0 0.0
    %931 = vmatprep.subr.mxu0 0.0
    %932 = vmatpush2.msra.mxu0 0.0
    %933 = vmatprep.subr.mxu0 0.0
    %934 = vmatpush2.msra.mxu0 0.0
    %935 = vmatprep.subr.mxu0 0.0
    %936 = vmatpush2.msra.mxu0 0.0
    %937 = vmatprep.subr.mxu0 0.0
    %938 = vmatpush2.msra.mxu0 0.0
    %939 = vmatprep.subr.mxu0 0.0
    %940 = vmatpush2.msra.mxu0 0.0
    %941 = vmatprep.subr.mxu0 0.0
    %942 = vmatpush2.msra.mxu0 0.0
    %943 = vmatprep.subr.mxu0 0.0
    %944 = vmatpush2.msra.mxu0 0.0
    %945 = vmatprep.subr.mxu0 0.0
    %946 = vmatpush2.msra.mxu0 0.0
    %947 = vmatprep.subr.mxu0 0.0
    %948 = vmatpush2.msra.mxu0 0.0
    %949 = vmatprep.subr.mxu0 0.0
    %950 = vmatpush2.msra.mxu0 0.0
    %951 = vmatprep.subr.mxu0 0.0
    %952 = vmatpush2.msra.mxu0 0.0
    %953 = vmatprep.mubr.f32.mxu0 0.0
    %954 = vmatmul.mubr.f32.gmra.mxu0 %v887
    %v955 = vpop.f32.mrf.mxu0
    %v956 = vadd.f32 0.0, %v955
    %v957 = vpop.f32.mrf.mxu0
    %958 = vdwg.mxu0
    %959 = vrot.lane.b32.xlu0 %v280, 112
    %v960 = vpop.permute.xlu0 %959
    %961 = vrot.lane.b32.xlu0 %v280, 80
    %v962 = vpop.permute.xlu0 %961
    %v963 = vsel %vm291, %v960, 0
    %v965 = vsel %vm291, %v962, 0
    %967 = vmatprep.subr.mxu0 0.0
    %968 = vmatpush1.xpose.msra.mxu0 0.0
    %969 = vmatprep.subr.mxu0 0.0
    %970 = vmatpush1.xpose.msra.mxu0 0.0
    %971 = vmatprep.subr.mxu0 0.0
    %972 = vmatpush1.xpose.msra.mxu0 0.0
    %973 = vmatprep.subr.mxu0 0.0
    %974 = vmatpush1.xpose.msra.mxu0 0.0
    %975 = vmatprep.subr.mxu0 0.0
    %976 = vmatpush1.xpose.msra.mxu0 0.0
    %977 = vmatprep.subr.mxu0 0.0
    %978 = vmatpush1.xpose.msra.mxu0 0.0
    %979 = vmatprep.subr.mxu0 0.0
    %980 = vmatpush1.xpose.msra.mxu0 0.0
    %981 = vmatprep.subr.mxu0 0.0
    %982 = vmatpush1.xpose.msra.mxu0 0.0
    %983 = vmatprep.subr.mxu0 0.0
    %984 = vmatpush1.xpose.msra.mxu0 0.0
    %985 = vmatprep.subr.mxu0 0.0
    %986 = vmatpush1.xpose.msra.mxu0 0.0
    %987 = vmatprep.subr.mxu0 0.0
    %988 = vmatpush1.xpose.msra.mxu0 0.0
    %989 = vmatprep.subr.mxu0 0.0
    %990 = vmatpush1.xpose.msra.mxu0 0.0
    %991 = vmatprep.subr.mxu0 0.0
    %992 = vmatpush1.xpose.msra.mxu0 0.0
    %993 = vmatprep.subr.mxu0 0.0
    %994 = vmatpush1.xpose.msra.mxu0 0.0
    %995 = vmatprep.subr.mxu0 0.0
    %996 = vmatpush1.xpose.msra.mxu0 0.0
    %997 = vmatprep.subr.mxu0 0.0
    %998 = vmatpush1.xpose.msra.mxu0 %v965
    %999 = vmatprep.subr.mxu0 0.0
    %1000 = vmatpush2.xpose.msra.mxu0 0.0
    %1001 = vmatprep.subr.mxu0 0.0
    %1002 = vmatpush2.xpose.msra.mxu0 0.0
    %1003 = vmatprep.subr.mxu0 0.0
    %1004 = vmatpush2.xpose.msra.mxu0 0.0
    %1005 = vmatprep.subr.mxu0 0.0
    %1006 = vmatpush2.xpose.msra.mxu0 0.0
    %1007 = vmatprep.subr.mxu0 0.0
    %1008 = vmatpush2.xpose.msra.mxu0 0.0
    %1009 = vmatprep.subr.mxu0 0.0
    %1010 = vmatpush2.xpose.msra.mxu0 0.0
    %1011 = vmatprep.subr.mxu0 0.0
    %1012 = vmatpush2.xpose.msra.mxu0 0.0
    %1013 = vmatprep.subr.mxu0 0.0
    %1014 = vmatpush2.xpose.msra.mxu0 0.0
    %1015 = vmatprep.subr.mxu0 0.0
    %1016 = vmatpush2.xpose.msra.mxu0 0.0
    %1017 = vmatprep.subr.mxu0 0.0
    %1018 = vmatpush2.xpose.msra.mxu0 0.0
    %1019 = vmatprep.subr.mxu0 0.0
    %1020 = vmatpush2.xpose.msra.mxu0 0.0
    %1021 = vmatprep.subr.mxu0 0.0
    %1022 = vmatpush2.xpose.msra.mxu0 0.0
    %1023 = vmatprep.subr.mxu0 0.0
    %1024 = vmatpush2.xpose.msra.mxu0 0.0
    %1025 = vmatprep.subr.mxu0 0.0
    %1026 = vmatpush2.xpose.msra.mxu0 0.0
    %1027 = vmatprep.subr.mxu0 0.0
    %1028 = vmatpush2.xpose.msra.mxu0 0.0
    %1029 = vmatprep.subr.mxu0 0.0
    %1030 = vmatpush2.xpose.msra.mxu0 0.0
    %1031 = vmatprep.mubr.f32.mxu0 0.0
    %1032 = vmatmul.mubr.f32.gmra.mxu0 %v963
    %v1033 = vpop.f32.mrf.mxu0
    %v1034 = vadd.f32 0.0, %v1033
    %v1035 = vpop.f32.mrf.mxu0
    %1036 = vdwg.mxu0
    %1037 = vrot.lane.b32.xlu0 %v285, 112
    %v1038 = vpop.permute.xlu0 %1037
    %1039 = vrot.lane.b32.xlu0 %v285, 80
    %v1040 = vpop.permute.xlu0 %1039
    %v1041 = vsel %vm291, %v1038, 0
    %v1043 = vsel %vm291, %v1040, 0
    %1045 = vmatprep.subr.mxu0 0.0
    %1046 = vmatpush1.xpose.msra.mxu0 0.0
    %1047 = vmatprep.subr.mxu0 0.0
    %1048 = vmatpush1.xpose.msra.mxu0 0.0
    %1049 = vmatprep.subr.mxu0 0.0
    %1050 = vmatpush1.xpose.msra.mxu0 0.0
    %1051 = vmatprep.subr.mxu0 0.0
    %1052 = vmatpush1.xpose.msra.mxu0 0.0
    %1053 = vmatprep.subr.mxu0 0.0
    %1054 = vmatpush1.xpose.msra.mxu0 0.0
    %1055 = vmatprep.subr.mxu0 0.0
    %1056 = vmatpush1.xpose.msra.mxu0 0.0
    %1057 = vmatprep.subr.mxu0 0.0
    %1058 = vmatpush1.xpose.msra.mxu0 0.0
    %1059 = vmatprep.subr.mxu0 0.0
    %1060 = vmatpush1.xpose.msra.mxu0 0.0
    %1061 = vmatprep.subr.mxu0 0.0
    %1062 = vmatpush1.xpose.msra.mxu0 0.0
    %1063 = vmatprep.subr.mxu0 0.0
    %1064 = vmatpush1.xpose.msra.mxu0 0.0
    %1065 = vmatprep.subr.mxu0 0.0
    %1066 = vmatpush1.xpose.msra.mxu0 0.0
    %1067 = vmatprep.subr.mxu0 0.0
    %1068 = vmatpush1.xpose.msra.mxu0 0.0
    %1069 = vmatprep.subr.mxu0 0.0
    %1070 = vmatpush1.xpose.msra.mxu0 0.0
    %1071 = vmatprep.subr.mxu0 0.0
    %1072 = vmatpush1.xpose.msra.mxu0 0.0
    %1073 = vmatprep.subr.mxu0 0.0
    %1074 = vmatpush1.xpose.msra.mxu0 0.0
    %1075 = vmatprep.subr.mxu0 0.0
    %1076 = vmatpush1.xpose.msra.mxu0 %v1043
    %1077 = vmatprep.subr.mxu0 0.0
    %1078 = vmatpush2.xpose.msra.mxu0 0.0
    %1079 = vmatprep.subr.mxu0 0.0
    %1080 = vmatpush2.xpose.msra.mxu0 0.0
    %1081 = vmatprep.subr.mxu0 0.0
    %1082 = vmatpush2.xpose.msra.mxu0 0.0
    %1083 = vmatprep.subr.mxu0 0.0
    %1084 = vmatpush2.xpose.msra.mxu0 0.0
    %1085 = vmatprep.subr.mxu0 0.0
    %1086 = vmatpush2.xpose.msra.mxu0 0.0
    %1087 = vmatprep.subr.mxu0 0.0
    %1088 = vmatpush2.xpose.msra.mxu0 0.0
    %1089 = vmatprep.subr.mxu0 0.0
    %1090 = vmatpush2.xpose.msra.mxu0 0.0
    %1091 = vmatprep.subr.mxu0 0.0
    %1092 = vmatpush2.xpose.msra.mxu0 0.0
    %1093 = vmatprep.subr.mxu0 0.0
    %1094 = vmatpush2.xpose.msra.mxu0 0.0
    %1095 = vmatprep.subr.mxu0 0.0
    %1096 = vmatpush2.xpose.msra.mxu0 0.0
    %1097 = vmatprep.subr.mxu0 0.0
    %1098 = vmatpush2.xpose.msra.mxu0 0.0
    %1099 = vmatprep.subr.mxu0 0.0
    %1100 = vmatpush2.xpose.msra.mxu0 0.0
    %1101 = vmatprep.subr.mxu0 0.0
    %1102 = vmatpush2.xpose.msra.mxu0 0.0
    %1103 = vmatprep.subr.mxu0 0.0
    %1104 = vmatpush2.xpose.msra.mxu0 0.0
    %1105 = vmatprep.subr.mxu0 0.0
    %1106 = vmatpush2.xpose.msra.mxu0 0.0
    %1107 = vmatprep.subr.mxu0 0.0
    %1108 = vmatpush2.xpose.msra.mxu0 0.0
    %1109 = vmatprep.mubr.f32.mxu0 0.0
    %1110 = vmatmul.mubr.f32.gmra.mxu0 %v1041
    %v1111 = vpop.f32.mrf.mxu0
    %v1112 = vadd.f32 0.0, %v1111
    %v1113 = vpop.f32.mrf.mxu0
    %1114 = vdwg.mxu0
    %v1115 = vmul.f32 %v1034, 0.35355338
    %v1116 = vmul.f32 %v1112, 0.35355338
    %v1117 = vadd.f32 %v1115, %v188
    %v1118 = vadd.f32 %v1116, %v192
    %v1119 = vsel %vm291, %v1117, -inf
    %1120 = vmax.xlane.f32.xlu0 %v1119
    %v1121 = vpop.xlane.xlu0 %1120
    %v1122 = vsel %vm291, %v1118, -inf
    %1123 = vmax.xlane.f32.xlu0 %v1122
    %v1124 = vpop.xlane.xlu0 %1123
    %v1125 = vsub.f32 %v1117, %v1121
    %v1126 = vsub.f32 %v1118, %v1124
    %v1127 = vmul.f32 %v1125, 1.442695
    %v1128 = vpow.pop %v1127
    %v1129 = vmul.f32 %v1126, 1.442695
    %v1130 = vpow.pop %v1129
    %v1131 = vsel %vm291, %v1128, 0.0
    %1132 = vadd.xlane.f32.xlu0 %v1131
    %v1133 = vpop.xlane.xlu0 %1132
    %v1134 = vsel %vm291, %v1130, 0.0
    %1135 = vadd.xlane.f32.xlu0 %v1134
    %v1136 = vpop.xlane.xlu0 %1135
    %v1137 = vrcp.pop %v1133
    %v1138 = vmul.f32 %v1128, %v1137
    %v1139 = vrcp.pop %v1136
    %v1140 = vmul.f32 %v1130, %v1139
    %1141 = vst.msk [vmem:[%s17 + $0x10] sm:$0xff] %vm291, %v1138
    %1142 = vst.msk [vmem:[%s17 + $0x30] sm:$0xff] %vm291, %v1140
    %1143 = vrot.lane.b32.xlu0 %v280, 48
    %v1144 = vpop.permute.xlu0 %1143
    %v1147 = vsel %vm291, %v1138, 0
    %1149 = vmatprep.subr.mxu0 0.0
    %1150 = vmatpush1.msra.mxu0 0.0
    %1151 = vmatprep.subr.mxu0 0.0
    %1152 = vmatpush1.msra.mxu0 0.0
    %1153 = vmatprep.subr.mxu0 0.0
    %1154 = vmatpush1.msra.mxu0 0.0
    %1155 = vmatprep.subr.mxu0 0.0
    %1156 = vmatpush1.msra.mxu0 0.0
    %1157 = vmatprep.subr.mxu0 0.0
    %1158 = vmatpush1.msra.mxu0 0.0
    %1159 = vmatprep.subr.mxu0 0.0
    %1160 = vmatpush1.msra.mxu0 0.0
    %1161 = vmatprep.subr.mxu0 0.0
    %1162 = vmatpush1.msra.mxu0 0.0
    %1163 = vmatprep.subr.mxu0 0.0
    %1164 = vmatpush1.msra.mxu0 0.0
    %1165 = vmatprep.subr.mxu0 0.0
    %1166 = vmatpush1.msra.mxu0 0.0
    %1167 = vmatprep.subr.mxu0 0.0
    %1168 = vmatpush1.msra.mxu0 0.0
    %1169 = vmatprep.subr.mxu0 0.0
    %1170 = vmatpush1.msra.mxu0 0.0
    %1171 = vmatprep.subr.mxu0 0.0
    %1172 = vmatpush1.msra.mxu0 0.0
    %1173 = vmatprep.subr.mxu0 0.0
    %1174 = vmatpush1.msra.mxu0 0.0
    %1175 = vmatprep.subr.mxu0 0.0
    %1176 = vmatpush1.msra.mxu0 0.0
    %1177 = vmatprep.subr.mxu0 0.0
    %1178 = vmatpush1.msra.mxu0 0.0
    %1179 = vmatprep.subr.mxu0 0.0
    %1180 = vmatpush1.msra.mxu0 %v1144
    %1181 = vmatprep.subr.mxu0 0.0
    %1182 = vmatpush2.msra.mxu0 0.0
    %1183 = vmatprep.subr.mxu0 0.0
    %1184 = vmatpush2.msra.mxu0 0.0
    %1185 = vmatprep.subr.mxu0 0.0
    %1186 = vmatpush2.msra.mxu0 0.0
    %1187 = vmatprep.subr.mxu0 0.0
    %1188 = vmatpush2.msra.mxu0 0.0
    %1189 = vmatprep.subr.mxu0 0.0
    %1190 = vmatpush2.msra.mxu0 0.0
    %1191 = vmatprep.subr.mxu0 0.0
    %1192 = vmatpush2.msra.mxu0 0.0
    %1193 = vmatprep.subr.mxu0 0.0
    %1194 = vmatpush2.msra.mxu0 0.0
    %1195 = vmatprep.subr.mxu0 0.0
    %1196 = vmatpush2.msra.mxu0 0.0
    %1197 = vmatprep.subr.mxu0 0.0
    %1198 = vmatpush2.msra.mxu0 0.0
    %1199 = vmatprep.subr.mxu0 0.0
    %1200 = vmatpush2.msra.mxu0 0.0
    %1201 = vmatprep.subr.mxu0 0.0
    %1202 = vmatpush2.msra.mxu0 0.0
    %1203 = vmatprep.subr.mxu0 0.0
    %1204 = vmatpush2.msra.mxu0 0.0
    %1205 = vmatprep.subr.mxu0 0.0
    %1206 = vmatpush2.msra.mxu0 0.0
    %1207 = vmatprep.subr.mxu0 0.0
    %1208 = vmatpush2.msra.mxu0 0.0
    %1209 = vmatprep.subr.mxu0 0.0
    %1210 = vmatpush2.msra.mxu0 0.0
    %1211 = vmatprep.subr.mxu0 0.0
    %1212 = vmatpush2.msra.mxu0 0.0
    %1213 = vmatprep.mubr.f32.mxu0 0.0
    %1214 = vmatmul.mubr.f32.gmra.mxu0 %v1147
    %v1215 = vpop.f32.mrf.mxu0
    %v1216 = vadd.f32 0.0, %v1215
    %v1217 = vpop.f32.mrf.mxu0
    %1218 = vdwg.mxu0
    %1219 = vrot.lane.b32.xlu0 %v285, 48
    %v1220 = vpop.permute.xlu0 %1219
    %v1223 = vsel %vm291, %v1140, 0
    %1225 = vmatprep.subr.mxu0 0.0
    %1226 = vmatpush1.msra.mxu0 0.0
    %1227 = vmatprep.subr.mxu0 0.0
    %1228 = vmatpush1.msra.mxu0 0.0
    %1229 = vmatprep.subr.mxu0 0.0
    %1230 = vmatpush1.msra.mxu0 0.0
    %1231 = vmatprep.subr.mxu0 0.0
    %1232 = vmatpush1.msra.mxu0 0.0
    %1233 = vmatprep.subr.mxu0 0.0
    %1234 = vmatpush1.msra.mxu0 0.0
    %1235 = vmatprep.subr.mxu0 0.0
    %1236 = vmatpush1.msra.mxu0 0.0
    %1237 = vmatprep.subr.mxu0 0.0
    %1238 = vmatpush1.msra.mxu0 0.0
    %1239 = vmatprep.subr.mxu0 0.0
    %1240 = vmatpush1.msra.mxu0 0.0
    %1241 = vmatprep.subr.mxu0 0.0
    %1242 = vmatpush1.msra.mxu0 0.0
    %1243 = vmatprep.subr.mxu0 0.0
    %1244 = vmatpush1.msra.mxu0 0.0
    %1245 = vmatprep.subr.mxu0 0.0
    %1246 = vmatpush1.msra.mxu0 0.0
    %1247 = vmatprep.subr.mxu0 0.0
    %1248 = vmatpush1.msra.mxu0 0.0
    %1249 = vmatprep.subr.mxu0 0.0
    %1250 = vmatpush1.msra.mxu0 0.0
    %1251 = vmatprep.subr.mxu0 0.0
    %1252 = vmatpush1.msra.mxu0 0.0
    %1253 = vmatprep.subr.mxu0 0.0
    %1254 = vmatpush1.msra.mxu0 0.0
    %1255 = vmatprep.subr.mxu0 0.0
    %1256 = vmatpush1.msra.mxu0 %v1220
    %1257 = vmatprep.subr.mxu0 0.0
    %1258 = vmatpush2.msra.mxu0 0.0
    %1259 = vmatprep.subr.mxu0 0.0
    %1260 = vmatpush2.msra.mxu0 0.0
    %1261 = vmatprep.subr.mxu0 0.0
    %1262 = vmatpush2.msra.mxu0 0.0
    %1263 = vmatprep.subr.mxu0 0.0
    %1264 = vmatpush2.msra.mxu0 0.0
    %1265 = vmatprep.subr.mxu0 0.0
    %1266 = vmatpush2.msra.mxu0 0.0
    %1267 = vmatprep.subr.mxu0 0.0
    %1268 = vmatpush2.msra.mxu0 0.0
    %1269 = vmatprep.subr.mxu0 0.0
    %1270 = vmatpush2.msra.mxu0 0.0
    %1271 = vmatprep.subr.mxu0 0.0
    %1272 = vmatpush2.msra.mxu0 0.0
    %1273 = vmatprep.subr.mxu0 0.0
    %1274 = vmatpush2.msra.mxu0 0.0
    %1275 = vmatprep.subr.mxu0 0.0
    %1276 = vmatpush2.msra.mxu0 0.0
    %1277 = vmatprep.subr.mxu0 0.0
    %1278 = vmatpush2.msra.mxu0 0.0
    %1279 = vmatprep.subr.mxu0 0.0
    %1280 = vmatpush2.msra.mxu0 0.0
    %1281 = vmatprep.subr.mxu0 0.0
    %1282 = vmatpush2.msra.mxu0 0.0
    %1283 = vmatprep.subr.mxu0 0.0
    %1284 = vmatpush2.msra.mxu0 0.0
    %1285 = vmatprep.subr.mxu0 0.0
    %1286 = vmatpush2.msra.mxu0 0.0
    %1287 = vmatprep.subr.mxu0 0.0
    %1288 = vmatpush2.msra.mxu0 0.0
    %1289 = vmatprep.mubr.f32.mxu0 0.0
    %1290 = vmatmul.mubr.f32.gmra.mxu0 %v1223
    %v1291 = vpop.f32.mrf.mxu0
    %v1292 = vadd.f32 0.0, %v1291
    %v1293 = vpop.f32.mrf.mxu0
    %1294 = vdwg.mxu0
    %1295 = vrot.lane.b32.xlu0 %v280, 104
    %v1296 = vpop.permute.xlu0 %1295
    %1297 = vrot.lane.b32.xlu0 %v280, 72
    %v1298 = vpop.permute.xlu0 %1297
    %v1299 = vsel %vm291, %v1296, 0
    %v1301 = vsel %vm291, %v1298, 0
    %1303 = vmatprep.subr.mxu0 0.0
    %1304 = vmatpush1.xpose.msra.mxu0 0.0
    %1305 = vmatprep.subr.mxu0 0.0
    %1306 = vmatpush1.xpose.msra.mxu0 0.0
    %1307 = vmatprep.subr.mxu0 0.0
    %1308 = vmatpush1.xpose.msra.mxu0 0.0
    %1309 = vmatprep.subr.mxu0 0.0
    %1310 = vmatpush1.xpose.msra.mxu0 0.0
    %1311 = vmatprep.subr.mxu0 0.0
    %1312 = vmatpush1.xpose.msra.mxu0 0.0
    %1313 = vmatprep.subr.mxu0 0.0
    %1314 = vmatpush1.xpose.msra.mxu0 0.0
    %1315 = vmatprep.subr.mxu0 0.0
    %1316 = vmatpush1.xpose.msra.mxu0 0.0
    %1317 = vmatprep.subr.mxu0 0.0
    %1318 = vmatpush1.xpose.msra.mxu0 0.0
    %1319 = vmatprep.subr.mxu0 0.0
    %1320 = vmatpush1.xpose.msra.mxu0 0.0
    %1321 = vmatprep.subr.mxu0 0.0
    %1322 = vmatpush1.xpose.msra.mxu0 0.0
    %1323 = vmatprep.subr.mxu0 0.0
    %1324 = vmatpush1.xpose.msra.mxu0 0.0
    %1325 = vmatprep.subr.mxu0 0.0
    %1326 = vmatpush1.xpose.msra.mxu0 0.0
    %1327 = vmatprep.subr.mxu0 0.0
    %1328 = vmatpush1.xpose.msra.mxu0 0.0
    %1329 = vmatprep.subr.mxu0 0.0
    %1330 = vmatpush1.xpose.msra.mxu0 0.0
    %1331 = vmatprep.subr.mxu0 0.0
    %1332 = vmatpush1.xpose.msra.mxu0 0.0
    %1333 = vmatprep.subr.mxu0 0.0
    %1334 = vmatpush1.xpose.msra.mxu0 %v1301
    %1335 = vmatprep.subr.mxu0 0.0
    %1336 = vmatpush2.xpose.msra.mxu0 0.0
    %1337 = vmatprep.subr.mxu0 0.0
    %1338 = vmatpush2.xpose.msra.mxu0 0.0
    %1339 = vmatprep.subr.mxu0 0.0
    %1340 = vmatpush2.xpose.msra.mxu0 0.0
    %1341 = vmatprep.subr.mxu0 0.0
    %1342 = vmatpush2.xpose.msra.mxu0 0.0
    %1343 = vmatprep.subr.mxu0 0.0
    %1344 = vmatpush2.xpose.msra.mxu0 0.0
    %1345 = vmatprep.subr.mxu0 0.0
    %1346 = vmatpush2.xpose.msra.mxu0 0.0
    %1347 = vmatprep.subr.mxu0 0.0
    %1348 = vmatpush2.xpose.msra.mxu0 0.0
    %1349 = vmatprep.subr.mxu0 0.0
    %1350 = vmatpush2.xpose.msra.mxu0 0.0
    %1351 = vmatprep.subr.mxu0 0.0
    %1352 = vmatpush2.xpose.msra.mxu0 0.0
    %1353 = vmatprep.subr.mxu0 0.0
    %1354 = vmatpush2.xpose.msra.mxu0 0.0
    %1355 = vmatprep.subr.mxu0 0.0
    %1356 = vmatpush2.xpose.msra.mxu0 0.0
    %1357 = vmatprep.subr.mxu0 0.0
    %1358 = vmatpush2.xpose.msra.mxu0 0.0
    %1359 = vmatprep.subr.mxu0 0.0
    %1360 = vmatpush2.xpose.msra.mxu0 0.0
    %1361 = vmatprep.subr.mxu0 0.0
    %1362 = vmatpush2.xpose.msra.mxu0 0.0
    %1363 = vmatprep.subr.mxu0 0.0
    %1364 = vmatpush2.xpose.msra.mxu0 0.0
    %1365 = vmatprep.subr.mxu0 0.0
    %1366 = vmatpush2.xpose.msra.mxu0 0.0
    %1367 = vmatprep.mubr.f32.mxu0 0.0
    %1368 = vmatmul.mubr.f32.gmra.mxu0 %v1299
    %v1369 = vpop.f32.mrf.mxu0
    %v1370 = vadd.f32 0.0, %v1369
    %v1371 = vpop.f32.mrf.mxu0
    %1372 = vdwg.mxu0
    %1373 = vrot.lane.b32.xlu0 %v285, 104
    %v1374 = vpop.permute.xlu0 %1373
    %1375 = vrot.lane.b32.xlu0 %v285, 72
    %v1376 = vpop.permute.xlu0 %1375
    %v1377 = vsel %vm291, %v1374, 0
    %v1379 = vsel %vm291, %v1376, 0
    %1381 = vmatprep.subr.mxu0 0.0
    %1382 = vmatpush1.xpose.msra.mxu0 0.0
    %1383 = vmatprep.subr.mxu0 0.0
    %1384 = vmatpush1.xpose.msra.mxu0 0.0
    %1385 = vmatprep.subr.mxu0 0.0
    %1386 = vmatpush1.xpose.msra.mxu0 0.0
    %1387 = vmatprep.subr.mxu0 0.0
    %1388 = vmatpush1.xpose.msra.mxu0 0.0
    %1389 = vmatprep.subr.mxu0 0.0
    %1390 = vmatpush1.xpose.msra.mxu0 0.0
    %1391 = vmatprep.subr.mxu0 0.0
    %1392 = vmatpush1.xpose.msra.mxu0 0.0
    %1393 = vmatprep.subr.mxu0 0.0
    %1394 = vmatpush1.xpose.msra.mxu0 0.0
    %1395 = vmatprep.subr.mxu0 0.0
    %1396 = vmatpush1.xpose.msra.mxu0 0.0
    %1397 = vmatprep.subr.mxu0 0.0
    %1398 = vmatpush1.xpose.msra.mxu0 0.0
    %1399 = vmatprep.subr.mxu0 0.0
    %1400 = vmatpush1.xpose.msra.mxu0 0.0
    %1401 = vmatprep.subr.mxu0 0.0
    %1402 = vmatpush1.xpose.msra.mxu0 0.0
    %1403 = vmatprep.subr.mxu0 0.0
    %1404 = vmatpush1.xpose.msra.mxu0 0.0
    %1405 = vmatprep.subr.mxu0 0.0
    %1406 = vmatpush1.xpose.msra.mxu0 0.0
    %1407 = vmatprep.subr.mxu0 0.0
    %1408 = vmatpush1.xpose.msra.mxu0 0.0
    %1409 = vmatprep.subr.mxu0 0.0
    %1410 = vmatpush1.xpose.msra.mxu0 0.0
    %1411 = vmatprep.subr.mxu0 0.0
    %1412 = vmatpush1.xpose.msra.mxu0 %v1379
    %1413 = vmatprep.subr.mxu0 0.0
    %1414 = vmatpush2.xpose.msra.mxu0 0.0
    %1415 = vmatprep.subr.mxu0 0.0
    %1416 = vmatpush2.xpose.msra.mxu0 0.0
    %1417 = vmatprep.subr.mxu0 0.0
    %1418 = vmatpush2.xpose.msra.mxu0 0.0
    %1419 = vmatprep.subr.mxu0 0.0
    %1420 = vmatpush2.xpose.msra.mxu0 0.0
    %1421 = vmatprep.subr.mxu0 0.0
    %1422 = vmatpush2.xpose.msra.mxu0 0.0
    %1423 = vmatprep.subr.mxu0 0.0
    %1424 = vmatpush2.xpose.msra.mxu0 0.0
    %1425 = vmatprep.subr.mxu0 0.0
    %1426 = vmatpush2.xpose.msra.mxu0 0.0
    %1427 = vmatprep.subr.mxu0 0.0
    %1428 = vmatpush2.xpose.msra.mxu0 0.0
    %1429 = vmatprep.subr.mxu0 0.0
    %1430 = vmatpush2.xpose.msra.mxu0 0.0
    %1431 = vmatprep.subr.mxu0 0.0
    %1432 = vmatpush2.xpose.msra.mxu0 0.0
    %1433 = vmatprep.subr.mxu0 0.0
    %1434 = vmatpush2.xpose.msra.mxu0 0.0
    %1435 = vmatprep.subr.mxu0 0.0
    %1436 = vmatpush2.xpose.msra.mxu0 0.0
    %1437 = vmatprep.subr.mxu0 0.0
    %1438 = vmatpush2.xpose.msra.mxu0 0.0
    %1439 = vmatprep.subr.mxu0 0.0
    %1440 = vmatpush2.xpose.msra.mxu0 0.0
    %1441 = vmatprep.subr.mxu0 0.0
    %1442 = vmatpush2.xpose.msra.mxu0 0.0
    %1443 = vmatprep.subr.mxu0 0.0
    %1444 = vmatpush2.xpose.msra.mxu0 0.0
    %1445 = vmatprep.mubr.f32.mxu0 0.0
    %1446 = vmatmul.mubr.f32.gmra.mxu0 %v1377
    %v1447 = vpop.f32.mrf.mxu0
    %v1448 = vadd.f32 0.0, %v1447
    %v1449 = vpop.f32.mrf.mxu0
    %1450 = vdwg.mxu0
    %v1451 = vmul.f32 %v1370, 0.35355338
    %v1452 = vmul.f32 %v1448, 0.35355338
    %v1453 = vadd.f32 %v1451, %v188
    %v1454 = vadd.f32 %v1452, %v192
    %v1455 = vsel %vm291, %v1453, -inf
    %1456 = vmax.xlane.f32.xlu0 %v1455
    %v1457 = vpop.xlane.xlu0 %1456
    %v1458 = vsel %vm291, %v1454, -inf
    %1459 = vmax.xlane.f32.xlu0 %v1458
    %v1460 = vpop.xlane.xlu0 %1459
    %v1461 = vsub.f32 %v1453, %v1457
    %v1462 = vsub.f32 %v1454, %v1460
    %v1463 = vmul.f32 %v1461, 1.442695
    %v1464 = vpow.pop %v1463
    %v1465 = vmul.f32 %v1462, 1.442695
    %v1466 = vpow.pop %v1465
    %v1467 = vsel %vm291, %v1464, 0.0
    %1468 = vadd.xlane.f32.xlu0 %v1467
    %v1469 = vpop.xlane.xlu0 %1468
    %v1470 = vsel %vm291, %v1466, 0.0
    %1471 = vadd.xlane.f32.xlu0 %v1470
    %v1472 = vpop.xlane.xlu0 %1471
    %v1473 = vrcp.pop %v1469
    %v1474 = vmul.f32 %v1464, %v1473
    %v1475 = vrcp.pop %v1472
    %v1476 = vmul.f32 %v1466, %v1475
    %1477 = vst.msk [vmem:[%s17 + $0x18] sm:$0xff] %vm291, %v1474
    %1478 = vst.msk [vmem:[%s17 + $0x38] sm:$0xff] %vm291, %v1476
    %1479 = vrot.lane.b32.xlu0 %v280, 40
    %v1480 = vpop.permute.xlu0 %1479
    %v1483 = vsel %vm291, %v1474, 0
    %1485 = vmatprep.subr.mxu0 0.0
    %1486 = vmatpush1.msra.mxu0 0.0
    %1487 = vmatprep.subr.mxu0 0.0
    %1488 = vmatpush1.msra.mxu0 0.0
    %1489 = vmatprep.subr.mxu0 0.0
    %1490 = vmatpush1.msra.mxu0 0.0
    %1491 = vmatprep.subr.mxu0 0.0
    %1492 = vmatpush1.msra.mxu0 0.0
    %1493 = vmatprep.subr.mxu0 0.0
    %1494 = vmatpush1.msra.mxu0 0.0
    %1495 = vmatprep.subr.mxu0 0.0
    %1496 = vmatpush1.msra.mxu0 0.0
    %1497 = vmatprep.subr.mxu0 0.0
    %1498 = vmatpush1.msra.mxu0 0.0
    %1499 = vmatprep.subr.mxu0 0.0
    %1500 = vmatpush1.msra.mxu0 0.0
    %1501 = vmatprep.subr.mxu0 0.0
    %1502 = vmatpush1.msra.mxu0 0.0
    %1503 = vmatprep.subr.mxu0 0.0
    %1504 = vmatpush1.msra.mxu0 0.0
    %1505 = vmatprep.subr.mxu0 0.0
    %1506 = vmatpush1.msra.mxu0 0.0
    %1507 = vmatprep.subr.mxu0 0.0
    %1508 = vmatpush1.msra.mxu0 0.0
    %1509 = vmatprep.subr.mxu0 0.0
    %1510 = vmatpush1.msra.mxu0 0.0
    %1511 = vmatprep.subr.mxu0 0.0
    %1512 = vmatpush1.msra.mxu0 0.0
    %1513 = vmatprep.subr.mxu0 0.0
    %1514 = vmatpush1.msra.mxu0 0.0
    %1515 = vmatprep.subr.mxu0 0.0
    %1516 = vmatpush1.msra.mxu0 %v1480
    %1517 = vmatprep.subr.mxu0 0.0
    %1518 = vmatpush2.msra.mxu0 0.0
    %1519 = vmatprep.subr.mxu0 0.0
    %1520 = vmatpush2.msra.mxu0 0.0
    %1521 = vmatprep.subr.mxu0 0.0
    %1522 = vmatpush2.msra.mxu0 0.0
    %1523 = vmatprep.subr.mxu0 0.0
    %1524 = vmatpush2.msra.mxu0 0.0
    %1525 = vmatprep.subr.mxu0 0.0
    %1526 = vmatpush2.msra.mxu0 0.0
    %1527 = vmatprep.subr.mxu0 0.0
    %1528 = vmatpush2.msra.mxu0 0.0
    %1529 = vmatprep.subr.mxu0 0.0
    %1530 = vmatpush2.msra.mxu0 0.0
    %1531 = vmatprep.subr.mxu0 0.0
    %1532 = vmatpush2.msra.mxu0 0.0
    %1533 = vmatprep.subr.mxu0 0.0
    %1534 = vmatpush2.msra.mxu0 0.0
    %1535 = vmatprep.subr.mxu0 0.0
    %1536 = vmatpush2.msra.mxu0 0.0
    %1537 = vmatprep.subr.mxu0 0.0
    %1538 = vmatpush2.msra.mxu0 0.0
    %1539 = vmatprep.subr.mxu0 0.0
    %1540 = vmatpush2.msra.mxu0 0.0
    %1541 = vmatprep.subr.mxu0 0.0
    %1542 = vmatpush2.msra.mxu0 0.0
    %1543 = vmatprep.subr.mxu0 0.0
    %1544 = vmatpush2.msra.mxu0 0.0
    %1545 = vmatprep.subr.mxu0 0.0
    %1546 = vmatpush2.msra.mxu0 0.0
    %1547 = vmatprep.subr.mxu0 0.0
    %1548 = vmatpush2.msra.mxu0 0.0
    %1549 = vmatprep.mubr.f32.mxu0 0.0
    %1550 = vmatmul.mubr.f32.gmra.mxu0 %v1483
    %v1551 = vpop.f32.mrf.mxu0
    %v1552 = vadd.f32 0.0, %v1551
    %v1553 = vpop.f32.mrf.mxu0
    %1554 = vdwg.mxu0
    %1555 = vrot.lane.b32.xlu0 %v285, 40
    %v1556 = vpop.permute.xlu0 %1555
    %v1559 = vsel %vm291, %v1476, 0
    %1561 = vmatprep.subr.mxu0 0.0
    %1562 = vmatpush1.msra.mxu0 0.0
    %1563 = vmatprep.subr.mxu0 0.0
    %1564 = vmatpush1.msra.mxu0 0.0
    %1565 = vmatprep.subr.mxu0 0.0
    %1566 = vmatpush1.msra.mxu0 0.0
    %1567 = vmatprep.subr.mxu0 0.0
    %1568 = vmatpush1.msra.mxu0 0.0
    %1569 = vmatprep.subr.mxu0 0.0
    %1570 = vmatpush1.msra.mxu0 0.0
    %1571 = vmatprep.subr.mxu0 0.0
    %1572 = vmatpush1.msra.mxu0 0.0
    %1573 = vmatprep.subr.mxu0 0.0
    %1574 = vmatpush1.msra.mxu0 0.0
    %1575 = vmatprep.subr.mxu0 0.0
    %1576 = vmatpush1.msra.mxu0 0.0
    %1577 = vmatprep.subr.mxu0 0.0
    %1578 = vmatpush1.msra.mxu0 0.0
    %1579 = vmatprep.subr.mxu0 0.0
    %1580 = vmatpush1.msra.mxu0 0.0
    %1581 = vmatprep.subr.mxu0 0.0
    %1582 = vmatpush1.msra.mxu0 0.0
    %1583 = vmatprep.subr.mxu0 0.0
    %1584 = vmatpush1.msra.mxu0 0.0
    %1585 = vmatprep.subr.mxu0 0.0
    %1586 = vmatpush1.msra.mxu0 0.0
    %1587 = vmatprep.subr.mxu0 0.0
    %1588 = vmatpush1.msra.mxu0 0.0
    %1589 = vmatprep.subr.mxu0 0.0
    %1590 = vmatpush1.msra.mxu0 0.0
    %1591 = vmatprep.subr.mxu0 0.0
    %1592 = vmatpush1.msra.mxu0 %v1556
    %1593 = vmatprep.subr.mxu0 0.0
    %1594 = vmatpush2.msra.mxu0 0.0
    %1595 = vmatprep.subr.mxu0 0.0
    %1596 = vmatpush2.msra.mxu0 0.0
    %1597 = vmatprep.subr.mxu0 0.0
    %1598 = vmatpush2.msra.mxu0 0.0
    %1599 = vmatprep.subr.mxu0 0.0
    %1600 = vmatpush2.msra.mxu0 0.0
    %1601 = vmatprep.subr.mxu0 0.0
    %1602 = vmatpush2.msra.mxu0 0.0
    %1603 = vmatprep.subr.mxu0 0.0
    %1604 = vmatpush2.msra.mxu0 0.0
    %1605 = vmatprep.subr.mxu0 0.0
    %1606 = vmatpush2.msra.mxu0 0.0
    %1607 = vmatprep.subr.mxu0 0.0
    %1608 = vmatpush2.msra.mxu0 0.0
    %1609 = vmatprep.subr.mxu0 0.0
    %1610 = vmatpush2.msra.mxu0 0.0
    %1611 = vmatprep.subr.mxu0 0.0
    %1612 = vmatpush2.msra.mxu0 0.0
    %1613 = vmatprep.subr.mxu0 0.0
    %1614 = vmatpush2.msra.mxu0 0.0
    %1615 = vmatprep.subr.mxu0 0.0
    %1616 = vmatpush2.msra.mxu0 0.0
    %1617 = vmatprep.subr.mxu0 0.0
    %1618 = vmatpush2.msra.mxu0 0.0
    %1619 = vmatprep.subr.mxu0 0.0
    %1620 = vmatpush2.msra.mxu0 0.0
    %1621 = vmatprep.subr.mxu0 0.0
    %1622 = vmatpush2.msra.mxu0 0.0
    %1623 = vmatprep.subr.mxu0 0.0
    %1624 = vmatpush2.msra.mxu0 0.0
    %1625 = vmatprep.mubr.f32.mxu0 0.0
    %1626 = vmatmul.mubr.f32.gmra.mxu0 %v1559
    %v1627 = vpop.f32.mrf.mxu0
    %v1628 = vadd.f32 0.0, %v1627
    %v1629 = vpop.f32.mrf.mxu0
    %1630 = vdwg.mxu0
    %1633 = vrot.lane.b32.xlu0 %v880, 8
    %v1634 = vpop.permute.xlu0 %1633
    %1635 = vrot.lane.b32.xlu0 %v956, 8
    %v1636 = vpop.permute.xlu0 %1635
    %1641 = vrot.lane.b32.xlu0 %v1216, 16
    %v1642 = vpop.permute.xlu0 %1641
    %1643 = vrot.lane.b32.xlu0 %v1292, 16
    %v1644 = vpop.permute.xlu0 %1643
    %1649 = vrot.lane.b32.xlu0 %v1552, 24
    %v1650 = vpop.permute.xlu0 %1649
    %1651 = vrot.lane.b32.xlu0 %v1628, 24
    %v1652 = vpop.permute.xlu0 %1651
    %v1655 = vsel %vm291, %v544, %v1634
    %v1656 = vsel %vm291, %v620, %v1636
    %vm1657 = vcmask 130048
    %v1658 = vsel %vm1657, %v1655, %v1642
    %v1659 = vsel %vm1657, %v1656, %v1644
    %vm1660 = vcmask 195584
    %v1661 = vsel %vm1660, %v1658, %v1650
    %v1662 = vsel %vm1660, %v1659, %v1652
    %v1663 = vld [vmem:[%s6] sm:$0xff]
    %v1664 = vld [vmem:[%s6 + $0x8] sm:$0xff]
    %v1665 = vld [vmem:[%s6 + $0x10] sm:$0xff]
    %v1666 = vld [vmem:[%s6 + $0x18] sm:$0xff]
    %v1667 = vld [vmem:[%s7] sm:$0x1]
    %v1669 = vlaneseq
    %v1670 = vshrl.u32 %v1669, 7
    %v1671 = vsub.s32 0, %v1670
    %v1672 = vrot.slane %v1667, %v1671
    %v1675 = vsel %vm206, %v1661, 0
    %v1678 = vsel %vm206, %v1662, 0
    %1680 = vmatprep.subr.mxu0 0.0
    %1681 = vmatpush1.msra.mxu0 0.0
    %1682 = vmatprep.subr.mxu0 0.0
    %1683 = vmatpush1.msra.mxu0 0.0
    %1684 = vmatprep.subr.mxu0 0.0
    %1685 = vmatpush1.msra.mxu0 0.0
    %1686 = vmatprep.subr.mxu0 0.0
    %1687 = vmatpush1.msra.mxu0 0.0
    %1688 = vmatprep.subr.mxu0 0.0
    %1689 = vmatpush1.msra.mxu0 0.0
    %1690 = vmatprep.subr.mxu0 0.0
    %1691 = vmatpush1.msra.mxu0 0.0
    %1692 = vmatprep.subr.mxu0 0.0
    %1693 = vmatpush1.msra.mxu0 0.0
    %1694 = vmatprep.subr.mxu0 0.0
    %1695 = vmatpush1.msra.mxu0 0.0
    %1696 = vmatprep.subr.mxu0 0.0
    %1697 = vmatpush1.msra.mxu0 0.0
    %1698 = vmatprep.subr.mxu0 0.0
    %1699 = vmatpush1.msra.mxu0 0.0
    %1700 = vmatprep.subr.mxu0 0.0
    %1701 = vmatpush1.msra.mxu0 0.0
    %1702 = vmatprep.subr.mxu0 0.0
    %1703 = vmatpush1.msra.mxu0 0.0
    %1704 = vmatprep.subr.mxu0 0.0
    %1705 = vmatpush1.msra.mxu0 %v1666
    %1706 = vmatprep.subr.mxu0 0.0
    %1707 = vmatpush1.msra.mxu0 %v1665
    %1708 = vmatprep.subr.mxu0 0.0
    %1709 = vmatpush1.msra.mxu0 %v1664
    %1710 = vmatprep.subr.mxu0 0.0
    %1711 = vmatpush1.msra.mxu0 %v1663
    %1712 = vmatprep.subr.mxu0 0.0
    %1713 = vmatpush2.msra.mxu0 0.0
    %1714 = vmatprep.subr.mxu0 0.0
    %1715 = vmatpush2.msra.mxu0 0.0
    %1716 = vmatprep.subr.mxu0 0.0
    %1717 = vmatpush2.msra.mxu0 0.0
    %1718 = vmatprep.subr.mxu0 0.0
    %1719 = vmatpush2.msra.mxu0 0.0
    %1720 = vmatprep.subr.mxu0 0.0
    %1721 = vmatpush2.msra.mxu0 0.0
    %1722 = vmatprep.subr.mxu0 0.0
    %1723 = vmatpush2.msra.mxu0 0.0
    %1724 = vmatprep.subr.mxu0 0.0
    %1725 = vmatpush2.msra.mxu0 0.0
    %1726 = vmatprep.subr.mxu0 0.0
    %1727 = vmatpush2.msra.mxu0 0.0
    %1728 = vmatprep.subr.mxu0 0.0
    %1729 = vmatpush2.msra.mxu0 0.0
    %1730 = vmatprep.subr.mxu0 0.0
    %1731 = vmatpush2.msra.mxu0 0.0
    %1732 = vmatprep.subr.mxu0 0.0
    %1733 = vmatpush2.msra.mxu0 0.0
    %1734 = vmatprep.subr.mxu0 0.0
    %1735 = vmatpush2.msra.mxu0 0.0
    %1736 = vmatprep.subr.mxu0 0.0
    %1737 = vmatpush2.msra.mxu0 0.0
    %1738 = vmatprep.subr.mxu0 0.0
    %1739 = vmatpush2.msra.mxu0 0.0
    %1740 = vmatprep.subr.mxu0 0.0
    %1741 = vmatpush2.msra.mxu0 0.0
    %1742 = vmatprep.subr.mxu0 0.0
    %1743 = vmatpush2.msra.mxu0 0.0
    %1744 = vmatprep.mubr.f32.mxu0 0.0
    %1745 = vmatmul.mubr.f32.gmra.mxu0 %v1675
    %v1746 = vpop.f32.mrf.mxu0
    %v1747 = vadd.f32 %v1672, %v1746
    %v1748 = vpop.f32.mrf.mxu0
    %1749 = vmatprep.mubr.f32.mxu0 0.0
    %1750 = vmatmul.mubr.f32.gmra.mxu0 %v1678
    %v1751 = vpop.f32.mrf.mxu0
    %v1752 = vadd.f32 %v1672, %v1751
    %v1753 = vpop.f32.mrf.mxu0
    %1754 = vdwg.mxu0
    %v1755 = vadd.f32 %v1747, %v175
    %v1756 = vadd.f32 %v1752, %v176
    %v1757 = vld [vmem:[%s8] sm:$0x1]
    %v1758 = vld [vmem:[%s9] sm:$0x1]
    %v1759 = vsel %vm206, %v1755, 0.0
    %1760 = vadd.xlane.f32.xlu0 %v1759
    %v1761 = vpop.xlane.xlu0 %1760
    %v1762 = vsel %vm206, %v1756, 0.0
    %1763 = vadd.xlane.f32.xlu0 %v1762
    %v1764 = vpop.xlane.xlu0 %1763
    %v1765 = vrcp.pop 32.0
    %v1766 = vmul.f32 %v1761, %v1765
    %v1767 = vmul.f32 %v1764, %v1765
    %v1768 = vsub.f32 %v1755, %v1766
    %v1769 = vsub.f32 %v1756, %v1767
    %v1770 = vmul.f32 %v1768, %v1768
    %v1771 = vmul.f32 %v1769, %v1769
    %v1772 = vsel %vm206, %v1770, 0.0
    %1773 = vadd.xlane.f32.xlu0 %v1772
    %v1774 = vpop.xlane.xlu0 %1773
    %v1775 = vsel %vm206, %v1771, 0.0
    %1776 = vadd.xlane.f32.xlu0 %v1775
    %v1777 = vpop.xlane.xlu0 %1776
    %v1778 = vmul.f32 %v1774, %v1765
    %v1779 = vmul.f32 %v1777, %v1765
    %v1780 = vadd.f32 %v1778, 1e-05
    %v1781 = vadd.f32 %v1779, 1e-05
    %v1782 = vrsqrt.pop %v1780
    %v1783 = vrsqrt.pop %v1781
    %v1784 = vmul.f32 %v1768, %v1782
    %v1785 = vmul.f32 %v1769, %v1783
    %v1787 = vlaneseq
    %v1788 = vshrl.u32 %v1787, 7
    %v1789 = vsub.s32 0, %v1788
    %v1790 = vrot.slane %v1757, %v1789
    %v1792 = vmul.f32 %v1784, %v1790
    %v1793 = vmul.f32 %v1785, %v1790
    %v1795 = vlaneseq
    %v1796 = vshrl.u32 %v1795, 7
    %v1797 = vsub.s32 0, %v1796
    %v1798 = vrot.slane %v1758, %v1797
    %v1800 = vadd.f32 %v1792, %v1798
    %v1801 = vadd.f32 %v1793, %v1798
    %v1802 = vld [vmem:[%s10] sm:$0xff]
    %v1803 = vld [vmem:[%s10 + $0x8] sm:$0xff]
    %v1804 = vld [vmem:[%s10 + $0x10] sm:$0xff]
    %v1805 = vld [vmem:[%s10 + $0x18] sm:$0xff]
    %v1806 = vld [vmem:[%s11] sm:$0x1]
    %v1808 = vlaneseq
    %v1809 = vshrl.u32 %v1808, 7
    %v1810 = vsub.s32 0, %v1809
    %v1811 = vrot.slane %v1806, %v1810
    %v1814 = vsel %vm206, %v1800, 0
    %v1817 = vsel %vm206, %v1801, 0
    %1819 = vmatprep.subr.mxu0 0.0
    %1820 = vmatpush1.msra.mxu0 0.0
    %1821 = vmatprep.subr.mxu0 0.0
    %1822 = vmatpush1.msra.mxu0 0.0
    %1823 = vmatprep.subr.mxu0 0.0
    %1824 = vmatpush1.msra.mxu0 0.0
    %1825 = vmatprep.subr.mxu0 0.0
    %1826 = vmatpush1.msra.mxu0 0.0
    %1827 = vmatprep.subr.mxu0 0.0
    %1828 = vmatpush1.msra.mxu0 0.0
    %1829 = vmatprep.subr.mxu0 0.0
    %1830 = vmatpush1.msra.mxu0 0.0
    %1831 = vmatprep.subr.mxu0 0.0
    %1832 = vmatpush1.msra.mxu0 0.0
    %1833 = vmatprep.subr.mxu0 0.0
    %1834 = vmatpush1.msra.mxu0 0.0
    %1835 = vmatprep.subr.mxu0 0.0
    %1836 = vmatpush1.msra.mxu0 0.0
    %1837 = vmatprep.subr.mxu0 0.0
    %1838 = vmatpush1.msra.mxu0 0.0
    %1839 = vmatprep.subr.mxu0 0.0
    %1840 = vmatpush1.msra.mxu0 0.0
    %1841 = vmatprep.subr.mxu0 0.0
    %1842 = vmatpush1.msra.mxu0 0.0
    %1843 = vmatprep.subr.mxu0 0.0
    %1844 = vmatpush1.msra.mxu0 %v1805
    %1845 = vmatprep.subr.mxu0 0.0
    %1846 = vmatpush1.msra.mxu0 %v1804
    %1847 = vmatprep.subr.mxu0 0.0
    %1848 = vmatpush1.msra.mxu0 %v1803
    %1849 = vmatprep.subr.mxu0 0.0
    %1850 = vmatpush1.msra.mxu0 %v1802
    %1851 = vmatprep.subr.mxu0 0.0
    %1852 = vmatpush2.msra.mxu0 0.0
    %1853 = vmatprep.subr.mxu0 0.0
    %1854 = vmatpush2.msra.mxu0 0.0
    %1855 = vmatprep.subr.mxu0 0.0
    %1856 = vmatpush2.msra.mxu0 0.0
    %1857 = vmatprep.subr.mxu0 0.0
    %1858 = vmatpush2.msra.mxu0 0.0
    %1859 = vmatprep.subr.mxu0 0.0
    %1860 = vmatpush2.msra.mxu0 0.0
    %1861 = vmatprep.subr.mxu0 0.0
    %1862 = vmatpush2.msra.mxu0 0.0
    %1863 = vmatprep.subr.mxu0 0.0
    %1864 = vmatpush2.msra.mxu0 0.0
    %1865 = vmatprep.subr.mxu0 0.0
    %1866 = vmatpush2.msra.mxu0 0.0
    %1867 = vmatprep.subr.mxu0 0.0
    %1868 = vmatpush2.msra.mxu0 0.0
    %1869 = vmatprep.subr.mxu0 0.0
    %1870 = vmatpush2.msra.mxu0 0.0
    %1871 = vmatprep.subr.mxu0 0.0
    %1872 = vmatpush2.msra.mxu0 0.0
    %1873 = vmatprep.subr.mxu0 0.0
    %1874 = vmatpush2.msra.mxu0 0.0
    %1875 = vmatprep.subr.mxu0 0.0
    %1876 = vmatpush2.msra.mxu0 0.0
    %1877 = vmatprep.subr.mxu0 0.0
    %1878 = vmatpush2.msra.mxu0 0.0
    %1879 = vmatprep.subr.mxu0 0.0
    %1880 = vmatpush2.msra.mxu0 0.0
    %1881 = vmatprep.subr.mxu0 0.0
    %1882 = vmatpush2.msra.mxu0 0.0
    %1883 = vmatprep.mubr.f32.mxu0 0.0
    %1884 = vmatmul.mubr.f32.gmra.mxu0 %v1814
    %v1885 = vpop.f32.mrf.mxu0
    %v1886 = vadd.f32 %v1811, %v1885
    %v1887 = vpop.f32.mrf.mxu0
    %1888 = vmatprep.mubr.f32.mxu0 0.0
    %1889 = vmatmul.mubr.f32.gmra.mxu0 %v1817
    %v1890 = vpop.f32.mrf.mxu0
    %v1891 = vadd.f32 %v1811, %v1890
    %v1892 = vpop.f32.mrf.mxu0
    %1893 = vdwg.mxu0
    %v1894 = vmax.f32 %v1886, 0.0
    %v1895 = vmax.f32 %v1891, 0.0
    %v1896 = vld [vmem:[%s12] sm:$0xff]
    %v1897 = vld [vmem:[%s12 + $0x8] sm:$0xff]
    %v1898 = vld [vmem:[%s12 + $0x10] sm:$0xff]
    %v1899 = vld [vmem:[%s12 + $0x18] sm:$0xff]
    %v1900 = vld [vmem:[%s12 + $0x20] sm:$0xff]
    %v1901 = vld [vmem:[%s12 + $0x28] sm:$0xff]
    %v1902 = vld [vmem:[%s12 + $0x30] sm:$0xff]
    %v1903 = vld [vmem:[%s12 + $0x38] sm:$0xff]
    %v1904 = vld [vmem:[%s13] sm:$0x1]
    %v1906 = vlaneseq
    %v1907 = vshrl.u32 %v1906, 7
    %v1908 = vsub.s32 0, %v1907
    %v1909 = vrot.slane %v1904, %v1908
    %vm1911 = vcmask 523264
    %v1913 = vsel %vm1911, %v1894, 0
    %v1916 = vsel %vm1911, %v1895, 0
    %1918 = vmatprep.subr.mxu0 0.0
    %1919 = vmatpush1.msra.mxu0 0.0
    %1920 = vmatprep.subr.mxu0 0.0
    %1921 = vmatpush1.msra.mxu0 0.0
    %1922 = vmatprep.subr.mxu0 0.0
    %1923 = vmatpush1.msra.mxu0 0.0
    %1924 = vmatprep.subr.mxu0 0.0
    %1925 = vmatpush1.msra.mxu0 0.0
    %1926 = vmatprep.subr.mxu0 0.0
    %1927 = vmatpush1.msra.mxu0 0.0
    %1928 = vmatprep.subr.mxu0 0.0
    %1929 = vmatpush1.msra.mxu0 0.0
    %1930 = vmatprep.subr.mxu0 0.0
    %1931 = vmatpush1.msra.mxu0 0.0
    %1932 = vmatprep.subr.mxu0 0.0
    %1933 = vmatpush1.msra.mxu0 0.0
    %1934 = vmatprep.subr.mxu0 0.0
    %1935 = vmatpush1.msra.mxu0 %v1903
    %1936 = vmatprep.subr.mxu0 0.0
    %1937 = vmatpush1.msra.mxu0 %v1902
    %1938 = vmatprep.subr.mxu0 0.0
    %1939 = vmatpush1.msra.mxu0 %v1901
    %1940 = vmatprep.subr.mxu0 0.0
    %1941 = vmatpush1.msra.mxu0 %v1900
    %1942 = vmatprep.subr.mxu0 0.0
    %1943 = vmatpush1.msra.mxu0 %v1899
    %1944 = vmatprep.subr.mxu0 0.0
    %1945 = vmatpush1.msra.mxu0 %v1898
    %1946 = vmatprep.subr.mxu0 0.0
    %1947 = vmatpush1.msra.mxu0 %v1897
    %1948 = vmatprep.subr.mxu0 0.0
    %1949 = vmatpush1.msra.mxu0 %v1896
    %1950 = vmatprep.subr.mxu0 0.0
    %1951 = vmatpush2.msra.mxu0 0.0
    %1952 = vmatprep.subr.mxu0 0.0
    %1953 = vmatpush2.msra.mxu0 0.0
    %1954 = vmatprep.subr.mxu0 0.0
    %1955 = vmatpush2.msra.mxu0 0.0
    %1956 = vmatprep.subr.mxu0 0.0
    %1957 = vmatpush2.msra.mxu0 0.0
    %1958 = vmatprep.subr.mxu0 0.0
    %1959 = vmatpush2.msra.mxu0 0.0
    %1960 = vmatprep.subr.mxu0 0.0
    %1961 = vmatpush2.msra.mxu0 0.0
    %1962 = vmatprep.subr.mxu0 0.0
    %1963 = vmatpush2.msra.mxu0 0.0
    %1964 = vmatprep.subr.mxu0 0.0
    %1965 = vmatpush2.msra.mxu0 0.0
    %1966 = vmatprep.subr.mxu0 0.0
    %1967 = vmatpush2.msra.mxu0 0.0
    %1968 = vmatprep.subr.mxu0 0.0
    %1969 = vmatpush2.msra.mxu0 0.0
    %1970 = vmatprep.subr.mxu0 0.0
    %1971 = vmatpush2.msra.mxu0 0.0
    %1972 = vmatprep.subr.mxu0 0.0
    %1973 = vmatpush2.msra.mxu0 0.0
    %1974 = vmatprep.subr.mxu0 0.0
    %1975 = vmatpush2.msra.mxu0 0.0
    %1976 = vmatprep.subr.mxu0 0.0
    %1977 = vmatpush2.msra.mxu0 0.0
    %1978 = vmatprep.subr.mxu0 0.0
    %1979 = vmatpush2.msra.mxu0 0.0
    %1980 = vmatprep.subr.mxu0 0.0
    %1981 = vmatpush2.msra.mxu0 0.0
    %1982 = vmatprep.mubr.f32.mxu0 0.0
    %1983 = vmatmul.mubr.f32.gmra.mxu0 %v1913
    %v1984 = vpop.f32.mrf.mxu0
    %v1985 = vadd.f32 %v1909, %v1984
    %v1986 = vpop.f32.mrf.mxu0
    %1987 = vmatprep.mubr.f32.mxu0 0.0
    %1988 = vmatmul.mubr.f32.gmra.mxu0 %v1916
    %v1989 = vpop.f32.mrf.mxu0
    %v1990 = vadd.f32 %v1909, %v1989
    %v1991 = vpop.f32.mrf.mxu0
    %1992 = vdwg.mxu0
    %v1993 = vadd.f32 %v1985, %v1800
    %v1994 = vadd.f32 %v1990, %v1801
    %v1995 = vld [vmem:[%s14] sm:$0x1]
    %v1996 = vld [vmem:[%s15] sm:$0x1]
    %v1997 = vsel %vm206, %v1993, 0.0
    %1998 = vadd.xlane.f32.xlu0 %v1997
    %v1999 = vpop.xlane.xlu0 %1998
    %v2000 = vsel %vm206, %v1994, 0.0
    %2001 = vadd.xlane.f32.xlu0 %v2000
    %v2002 = vpop.xlane.xlu0 %2001
    %v2003 = vmul.f32 %v1999, %v1765
    %v2004 = vmul.f32 %v2002, %v1765
    %v2005 = vsub.f32 %v1993, %v2003
    %v2006 = vsub.f32 %v1994, %v2004
    %v2007 = vmul.f32 %v2005, %v2005
    %v2008 = vmul.f32 %v2006, %v2006
    %v2009 = vsel %vm206, %v2007, 0.0
    %2010 = vadd.xlane.f32.xlu0 %v2009
    %v2011 = vpop.xlane.xlu0 %2010
    %v2012 = vsel %vm206, %v2008, 0.0
    %2013 = vadd.xlane.f32.xlu0 %v2012
    %v2014 = vpop.xlane.xlu0 %2013
    %v2015 = vmul.f32 %v2011, %v1765
    %v2016 = vmul.f32 %v2014, %v1765
    %v2017 = vadd.f32 %v2015, 1e-05
    %v2018 = vadd.f32 %v2016, 1e-05
    %v2019 = vrsqrt.pop %v2017
    %v2020 = vrsqrt.pop %v2018
    %v2021 = vmul.f32 %v2005, %v2019
    %v2022 = vmul.f32 %v2006, %v2020
    %v2024 = vlaneseq
    %v2025 = vshrl.u32 %v2024, 7
    %v2026 = vsub.s32 0, %v2025
    %v2027 = vrot.slane %v1995, %v2026
    %v2029 = vmul.f32 %v2021, %v2027
    %v2030 = vmul.f32 %v2022, %v2027
    %v2032 = vlaneseq
    %v2033 = vshrl.u32 %v2032, 7
    %v2034 = vsub.s32 0, %v2033
    %v2035 = vrot.slane %v1996, %v2034
    %v2037 = vadd.f32 %v2029, %v2035
    %v2038 = vadd.f32 %v2030, %v2035
    %s2039 = scalar_lea.vmem %s4, 32
    %v2040 = vld [vmem:[%s2039] sm:$0xff]
    %v2041 = vld [vmem:[%s2039 + $0x8] sm:$0xff]
    %v2042 = vld [vmem:[%s2039 + $0x10] sm:$0xff]
    %v2043 = vld [vmem:[%s2039 + $0x18] sm:$0xff]
    %s2044 = scalar_lea.vmem %s5, 1
    %v2045 = vld [vmem:[%s2044] sm:$0x1]
    %v2047 = vlaneseq
    %v2048 = vshrl.u32 %v2047, 7
    %v2049 = vsub.s32 0, %v2048
    %v2050 = vrot.slane %v2045, %v2049
    %v2053 = vsel %vm206, %v2037, 0
    %v2056 = vsel %vm206, %v2038, 0
    %2058 = vmatprep.subr.mxu0 0.0
    %2059 = vmatpush1.msra.mxu0 0.0
    %2060 = vmatprep.subr.mxu0 0.0
    %2061 = vmatpush1.msra.mxu0 0.0
    %2062 = vmatprep.subr.mxu0 0.0
    %2063 = vmatpush1.msra.mxu0 0.0
    %2064 = vmatprep.subr.mxu0 0.0
    %2065 = vmatpush1.msra.mxu0 0.0
    %2066 = vmatprep.subr.mxu0 0.0
    %2067 = vmatpush1.msra.mxu0 0.0
    %2068 = vmatprep.subr.mxu0 0.0
    %2069 = vmatpush1.msra.mxu0 0.0
    %2070 = vmatprep.subr.mxu0 0.0
    %2071 = vmatpush1.msra.mxu0 0.0
    %2072 = vmatprep.subr.mxu0 0.0
    %2073 = vmatpush1.msra.mxu0 0.0
    %2074 = vmatprep.subr.mxu0 0.0
    %2075 = vmatpush1.msra.mxu0 0.0
    %2076 = vmatprep.subr.mxu0 0.0
    %2077 = vmatpush1.msra.mxu0 0.0
    %2078 = vmatprep.subr.mxu0 0.0
    %2079 = vmatpush1.msra.mxu0 0.0
    %2080 = vmatprep.subr.mxu0 0.0
    %2081 = vmatpush1.msra.mxu0 0.0
    %2082 = vmatprep.subr.mxu0 0.0
    %2083 = vmatpush1.msra.mxu0 %v2043
    %2084 = vmatprep.subr.mxu0 0.0
    %2085 = vmatpush1.msra.mxu0 %v2042
    %2086 = vmatprep.subr.mxu0 0.0
    %2087 = vmatpush1.msra.mxu0 %v2041
    %2088 = vmatprep.subr.mxu0 0.0
    %2089 = vmatpush1.msra.mxu0 %v2040
    %2090 = vmatprep.subr.mxu0 0.0
    %2091 = vmatpush2.msra.mxu0 0.0
    %2092 = vmatprep.subr.mxu0 0.0
    %2093 = vmatpush2.msra.mxu0 0.0
    %2094 = vmatprep.subr.mxu0 0.0
    %2095 = vmatpush2.msra.mxu0 0.0
    %2096 = vmatprep.subr.mxu0 0.0
    %2097 = vmatpush2.msra.mxu0 0.0
    %2098 = vmatprep.subr.mxu0 0.0
    %2099 = vmatpush2.msra.mxu0 0.0
    %2100 = vmatprep.subr.mxu0 0.0
    %2101 = vmatpush2.msra.mxu0 0.0
    %2102 = vmatprep.subr.mxu0 0.0
    %2103 = vmatpush2.msra.mxu0 0.0
    %2104 = vmatprep.subr.mxu0 0.0
    %2105 = vmatpush2.msra.mxu0 0.0
    %2106 = vmatprep.subr.mxu0 0.0
    %2107 = vmatpush2.msra.mxu0 0.0
    %2108 = vmatprep.subr.mxu0 0.0
    %2109 = vmatpush2.msra.mxu0 0.0
    %2110 = vmatprep.subr.mxu0 0.0
    %2111 = vmatpush2.msra.mxu0 0.0
    %2112 = vmatprep.subr.mxu0 0.0
    %2113 = vmatpush2.msra.mxu0 0.0
    %2114 = vmatprep.subr.mxu0 0.0
    %2115 = vmatpush2.msra.mxu0 0.0
    %2116 = vmatprep.subr.mxu0 0.0
    %2117 = vmatpush2.msra.mxu0 0.0
    %2118 = vmatprep.subr.mxu0 0.0
    %2119 = vmatpush2.msra.mxu0 0.0
    %2120 = vmatprep.subr.mxu0 0.0
    %2121 = vmatpush2.msra.mxu0 0.0
    %2122 = vmatprep.mubr.f32.mxu0 0.0
    %2123 = vmatmul.mubr.f32.gmra.mxu0 %v2053
    %v2124 = vpop.f32.mrf.mxu0
    %v2125 = vadd.f32 %v2050, %v2124
    %v2126 = vpop.f32.mrf.mxu0
    %2127 = vmatprep.mubr.f32.mxu0 0.0
    %2128 = vmatmul.mubr.f32.gmra.mxu0 %v2056
    %v2129 = vpop.f32.mrf.mxu0
    %v2130 = vadd.f32 %v2050, %v2129
    %v2131 = vpop.f32.mrf.mxu0
    %2132 = vdwg.mxu0
    %2134 = vrot.lane.b32.xlu0 %v2125, 96
    %v2135 = vpop.permute.xlu0 %2134
    %v2136 = vsel %vm291, %v2125, 0
    %v2138 = vsel %vm291, %v2135, 0
    %2140 = vmatprep.subr.mxu0 0.0
    %2141 = vmatpush1.xpose.msra.mxu0 0.0
    %2142 = vmatprep.subr.mxu0 0.0
    %2143 = vmatpush1.xpose.msra.mxu0 0.0
    %2144 = vmatprep.subr.mxu0 0.0
    %2145 = vmatpush1.xpose.msra.mxu0 0.0
    %2146 = vmatprep.subr.mxu0 0.0
    %2147 = vmatpush1.xpose.msra.mxu0 0.0
    %2148 = vmatprep.subr.mxu0 0.0
    %2149 = vmatpush1.xpose.msra.mxu0 0.0
    %2150 = vmatprep.subr.mxu0 0.0
    %2151 = vmatpush1.xpose.msra.mxu0 0.0
    %2152 = vmatprep.subr.mxu0 0.0
    %2153 = vmatpush1.xpose.msra.mxu0 0.0
    %2154 = vmatprep.subr.mxu0 0.0
    %2155 = vmatpush1.xpose.msra.mxu0 0.0
    %2156 = vmatprep.subr.mxu0 0.0
    %2157 = vmatpush1.xpose.msra.mxu0 0.0
    %2158 = vmatprep.subr.mxu0 0.0
    %2159 = vmatpush1.xpose.msra.mxu0 0.0
    %2160 = vmatprep.subr.mxu0 0.0
    %2161 = vmatpush1.xpose.msra.mxu0 0.0
    %2162 = vmatprep.subr.mxu0 0.0
    %2163 = vmatpush1.xpose.msra.mxu0 0.0
    %2164 = vmatprep.subr.mxu0 0.0
    %2165 = vmatpush1.xpose.msra.mxu0 0.0
    %2166 = vmatprep.subr.mxu0 0.0
    %2167 = vmatpush1.xpose.msra.mxu0 0.0
    %2168 = vmatprep.subr.mxu0 0.0
    %2169 = vmatpush1.xpose.msra.mxu0 0.0
    %2170 = vmatprep.subr.mxu0 0.0
    %2171 = vmatpush1.xpose.msra.mxu0 %v2138
    %2172 = vmatprep.subr.mxu0 0.0
    %2173 = vmatpush2.xpose.msra.mxu0 0.0
    %2174 = vmatprep.subr.mxu0 0.0
    %2175 = vmatpush2.xpose.msra.mxu0 0.0
    %2176 = vmatprep.subr.mxu0 0.0
    %2177 = vmatpush2.xpose.msra.mxu0 0.0
    %2178 = vmatprep.subr.mxu0 0.0
    %2179 = vmatpush2.xpose.msra.mxu0 0.0
    %2180 = vmatprep.subr.mxu0 0.0
    %2181 = vmatpush2.xpose.msra.mxu0 0.0
    %2182 = vmatprep.subr.mxu0 0.0
    %2183 = vmatpush2.xpose.msra.mxu0 0.0
    %2184 = vmatprep.subr.mxu0 0.0
    %2185 = vmatpush2.xpose.msra.mxu0 0.0
    %2186 = vmatprep.subr.mxu0 0.0
    %2187 = vmatpush2.xpose.msra.mxu0 0.0
    %2188 = vmatprep.subr.mxu0 0.0
    %2189 = vmatpush2.xpose.msra.mxu0 0.0
    %2190 = vmatprep.subr.mxu0 0.0
    %2191 = vmatpush2.xpose.msra.mxu0 0.0
    %2192 = vmatprep.subr.mxu0 0.0
    %2193 = vmatpush2.xpose.msra.mxu0 0.0
    %2194 = vmatprep.subr.mxu0 0.0
    %2195 = vmatpush2.xpose.msra.mxu0 0.0
    %2196 = vmatprep.subr.mxu0 0.0
    %2197 = vmatpush2.xpose.msra.mxu0 0.0
    %2198 = vmatprep.subr.mxu0 0.0
    %2199 = vmatpush2.xpose.msra.mxu0 0.0
    %2200 = vmatprep.subr.mxu0 0.0
    %2201 = vmatpush2.xpose.msra.mxu0 0.0
    %2202 = vmatprep.subr.mxu0 0.0
    %2203 = vmatpush2.xpose.msra.mxu0 0.0
    %2204 = vmatprep.mubr.f32.mxu0 0.0
    %2205 = vmatmul.mubr.f32.gmra.mxu0 %v2136
    %v2206 = vpop.f32.mrf.mxu0
    %v2207 = vadd.f32 0.0, %v2206
    %v2208 = vpop.f32.mrf.mxu0
    %2209 = vdwg.mxu0
    %2211 = vrot.lane.b32.xlu0 %v2130, 96
    %v2212 = vpop.permute.xlu0 %2211
    %v2213 = vsel %vm291, %v2130, 0
    %v2215 = vsel %vm291, %v2212, 0
    %2217 = vmatprep.subr.mxu0 0.0
    %2218 = vmatpush1.xpose.msra.mxu0 0.0
    %2219 = vmatprep.subr.mxu0 0.0
    %2220 = vmatpush1.xpose.msra.mxu0 0.0
    %2221 = vmatprep.subr.mxu0 0.0
    %2222 = vmatpush1.xpose.msra.mxu0 0.0
    %2223 = vmatprep.subr.mxu0 0.0
    %2224 = vmatpush1.xpose.msra.mxu0 0.0
    %2225 = vmatprep.subr.mxu0 0.0
    %2226 = vmatpush1.xpose.msra.mxu0 0.0
    %2227 = vmatprep.subr.mxu0 0.0
    %2228 = vmatpush1.xpose.msra.mxu0 0.0
    %2229 = vmatprep.subr.mxu0 0.0
    %2230 = vmatpush1.xpose.msra.mxu0 0.0
    %2231 = vmatprep.subr.mxu0 0.0
    %2232 = vmatpush1.xpose.msra.mxu0 0.0
    %2233 = vmatprep.subr.mxu0 0.0
    %2234 = vmatpush1.xpose.msra.mxu0 0.0
    %2235 = vmatprep.subr.mxu0 0.0
    %2236 = vmatpush1.xpose.msra.mxu0 0.0
    %2237 = vmatprep.subr.mxu0 0.0
    %2238 = vmatpush1.xpose.msra.mxu0 0.0
    %2239 = vmatprep.subr.mxu0 0.0
    %2240 = vmatpush1.xpose.msra.mxu0 0.0
    %2241 = vmatprep.subr.mxu0 0.0
    %2242 = vmatpush1.xpose.msra.mxu0 0.0
    %2243 = vmatprep.subr.mxu0 0.0
    %2244 = vmatpush1.xpose.msra.mxu0 0.0
    %2245 = vmatprep.subr.mxu0 0.0
    %2246 = vmatpush1.xpose.msra.mxu0 0.0
    %2247 = vmatprep.subr.mxu0 0.0
    %2248 = vmatpush1.xpose.msra.mxu0 %v2215
    %2249 = vmatprep.subr.mxu0 0.0
    %2250 = vmatpush2.xpose.msra.mxu0 0.0
    %2251 = vmatprep.subr.mxu0 0.0
    %2252 = vmatpush2.xpose.msra.mxu0 0.0
    %2253 = vmatprep.subr.mxu0 0.0
    %2254 = vmatpush2.xpose.msra.mxu0 0.0
    %2255 = vmatprep.subr.mxu0 0.0
    %2256 = vmatpush2.xpose.msra.mxu0 0.0
    %2257 = vmatprep.subr.mxu0 0.0
    %2258 = vmatpush2.xpose.msra.mxu0 0.0
    %2259 = vmatprep.subr.mxu0 0.0
    %2260 = vmatpush2.xpose.msra.mxu0 0.0
    %2261 = vmatprep.subr.mxu0 0.0
    %2262 = vmatpush2.xpose.msra.mxu0 0.0
    %2263 = vmatprep.subr.mxu0 0.0
    %2264 = vmatpush2.xpose.msra.mxu0 0.0
    %2265 = vmatprep.subr.mxu0 0.0
    %2266 = vmatpush2.xpose.msra.mxu0 0.0
    %2267 = vmatprep.subr.mxu0 0.0
    %2268 = vmatpush2.xpose.msra.mxu0 0.0
    %2269 = vmatprep.subr.mxu0 0.0
    %2270 = vmatpush2.xpose.msra.mxu0 0.0
    %2271 = vmatprep.subr.mxu0 0.0
    %2272 = vmatpush2.xpose.msra.mxu0 0.0
    %2273 = vmatprep.subr.mxu0 0.0
    %2274 = vmatpush2.xpose.msra.mxu0 0.0
    %2275 = vmatprep.subr.mxu0 0.0
    %2276 = vmatpush2.xpose.msra.mxu0 0.0
    %2277 = vmatprep.subr.mxu0 0.0
    %2278 = vmatpush2.xpose.msra.mxu0 0.0
    %2279 = vmatprep.subr.mxu0 0.0
    %2280 = vmatpush2.xpose.msra.mxu0 0.0
    %2281 = vmatprep.mubr.f32.mxu0 0.0
    %2282 = vmatmul.mubr.f32.gmra.mxu0 %v2213
    %v2283 = vpop.f32.mrf.mxu0
    %v2284 = vadd.f32 0.0, %v2283
    %v2285 = vpop.f32.mrf.mxu0
    %2286 = vdwg.mxu0
    %v2287 = vmul.f32 %v2207, 0.35355338
    %v2288 = vmul.f32 %v2284, 0.35355338
    %v2289 = vadd.f32 %v2287, %v188
    %v2290 = vadd.f32 %v2288, %v192
    %v2291 = vsel %vm291, %v2289, -inf
    %2292 = vmax.xlane.f32.xlu0 %v2291
    %v2293 = vpop.xlane.xlu0 %2292
    %v2294 = vsel %vm291, %v2290, -inf
    %2295 = vmax.xlane.f32.xlu0 %v2294
    %v2296 = vpop.xlane.xlu0 %2295
    %v2297 = vsub.f32 %v2289, %v2293
    %v2298 = vsub.f32 %v2290, %v2296
    %v2299 = vmul.f32 %v2297, 1.442695
    %v2300 = vpow.pop %v2299
    %v2301 = vmul.f32 %v2298, 1.442695
    %v2302 = vpow.pop %v2301
    %v2303 = vsel %vm291, %v2300, 0.0
    %2304 = vadd.xlane.f32.xlu0 %v2303
    %v2305 = vpop.xlane.xlu0 %2304
    %v2306 = vsel %vm291, %v2302, 0.0
    %2307 = vadd.xlane.f32.xlu0 %v2306
    %v2308 = vpop.xlane.xlu0 %2307
    %v2309 = vrcp.pop %v2305
    %v2310 = vmul.f32 %v2300, %v2309
    %v2311 = vrcp.pop %v2308
    %v2312 = vmul.f32 %v2302, %v2311
    %s2313 = scalar_lea.vmem %s17, 64
    %2314 = vst.msk [vmem:[%s2313] sm:$0xff] %vm291, %v2310
    %2315 = vst.msk [vmem:[%s2313 + $0x20] sm:$0xff] %vm291, %v2312
    %2316 = vrot.lane.b32.xlu0 %v2125, 64
    %v2317 = vpop.permute.xlu0 %2316
    %v2320 = vsel %vm291, %v2310, 0
    %2322 = vmatprep.subr.mxu0 0.0
    %2323 = vmatpush1.msra.mxu0 0.0
    %2324 = vmatprep.subr.mxu0 0.0
    %2325 = vmatpush1.msra.mxu0 0.0
    %2326 = vmatprep.subr.mxu0 0.0
    %2327 = vmatpush1.msra.mxu0 0.0
    %2328 = vmatprep.subr.mxu0 0.0
    %2329 = vmatpush1.msra.mxu0 0.0
    %2330 = vmatprep.subr.mxu0 0.0
    %2331 = vmatpush1.msra.mxu0 0.0
    %2332 = vmatprep.subr.mxu0 0.0
    %2333 = vmatpush1.msra.mxu0 0.0
    %2334 = vmatprep.subr.mxu0 0.0
    %2335 = vmatpush1.msra.mxu0 0.0
    %2336 = vmatprep.subr.mxu0 0.0
    %2337 = vmatpush1.msra.mxu0 0.0
    %2338 = vmatprep.subr.mxu0 0.0
    %2339 = vmatpush1.msra.mxu0 0.0
    %2340 = vmatprep.subr.mxu0 0.0
    %2341 = vmatpush1.msra.mxu0 0.0
    %2342 = vmatprep.subr.mxu0 0.0
    %2343 = vmatpush1.msra.mxu0 0.0
    %2344 = vmatprep.subr.mxu0 0.0
    %2345 = vmatpush1.msra.mxu0 0.0
    %2346 = vmatprep.subr.mxu0 0.0
    %2347 = vmatpush1.msra.mxu0 0.0
    %2348 = vmatprep.subr.mxu0 0.0
    %2349 = vmatpush1.msra.mxu0 0.0
    %2350 = vmatprep.subr.mxu0 0.0
    %2351 = vmatpush1.msra.mxu0 0.0
    %2352 = vmatprep.subr.mxu0 0.0
    %2353 = vmatpush1.msra.mxu0 %v2317
    %2354 = vmatprep.subr.mxu0 0.0
    %2355 = vmatpush2.msra.mxu0 0.0
    %2356 = vmatprep.subr.mxu0 0.0
    %2357 = vmatpush2.msra.mxu0 0.0
    %2358 = vmatprep.subr.mxu0 0.0
    %2359 = vmatpush2.msra.mxu0 0.0
    %2360 = vmatprep.subr.mxu0 0.0
    %2361 = vmatpush2.msra.mxu0 0.0
    %2362 = vmatprep.subr.mxu0 0.0
    %2363 = vmatpush2.msra.mxu0 0.0
    %2364 = vmatprep.subr.mxu0 0.0
    %2365 = vmatpush2.msra.mxu0 0.0
    %2366 = vmatprep.subr.mxu0 0.0
    %2367 = vmatpush2.msra.mxu0 0.0
    %2368 = vmatprep.subr.mxu0 0.0
    %2369 = vmatpush2.msra.mxu0 0.0
    %2370 = vmatprep.subr.mxu0 0.0
    %2371 = vmatpush2.msra.mxu0 0.0
    %2372 = vmatprep.subr.mxu0 0.0
    %2373 = vmatpush2.msra.mxu0 0.0
    %2374 = vmatprep.subr.mxu0 0.0
    %2375 = vmatpush2.msra.mxu0 0.0
    %2376 = vmatprep.subr.mxu0 0.0
    %2377 = vmatpush2.msra.mxu0 0.0
    %2378 = vmatprep.subr.mxu0 0.0
    %2379 = vmatpush2.msra.mxu0 0.0
    %2380 = vmatprep.subr.mxu0 0.0
    %2381 = vmatpush2.msra.mxu0 0.0
    %2382 = vmatprep.subr.mxu0 0.0
    %2383 = vmatpush2.msra.mxu0 0.0
    %2384 = vmatprep.subr.mxu0 0.0
    %2385 = vmatpush2.msra.mxu0 0.0
    %2386 = vmatprep.mubr.f32.mxu0 0.0
    %2387 = vmatmul.mubr.f32.gmra.mxu0 %v2320
    %v2388 = vpop.f32.mrf.mxu0
    %v2389 = vadd.f32 0.0, %v2388
    %v2390 = vpop.f32.mrf.mxu0
    %2391 = vdwg.mxu0
    %2392 = vrot.lane.b32.xlu0 %v2130, 64
    %v2393 = vpop.permute.xlu0 %2392
    %v2396 = vsel %vm291, %v2312, 0
    %2398 = vmatprep.subr.mxu0 0.0
    %2399 = vmatpush1.msra.mxu0 0.0
    %2400 = vmatprep.subr.mxu0 0.0
    %2401 = vmatpush1.msra.mxu0 0.0
    %2402 = vmatprep.subr.mxu0 0.0
    %2403 = vmatpush1.msra.mxu0 0.0
    %2404 = vmatprep.subr.mxu0 0.0
    %2405 = vmatpush1.msra.mxu0 0.0
    %2406 = vmatprep.subr.mxu0 0.0
    %2407 = vmatpush1.msra.mxu0 0.0
    %2408 = vmatprep.subr.mxu0 0.0
    %2409 = vmatpush1.msra.mxu0 0.0
    %2410 = vmatprep.subr.mxu0 0.0
    %2411 = vmatpush1.msra.mxu0 0.0
    %2412 = vmatprep.subr.mxu0 0.0
    %2413 = vmatpush1.msra.mxu0 0.0
    %2414 = vmatprep.subr.mxu0 0.0
    %2415 = vmatpush1.msra.mxu0 0.0
    %2416 = vmatprep.subr.mxu0 0.0
    %2417 = vmatpush1.msra.mxu0 0.0
    %2418 = vmatprep.subr.mxu0 0.0
    %2419 = vmatpush1.msra.mxu0 0.0
    %2420 = vmatprep.subr.mxu0 0.0
    %2421 = vmatpush1.msra.mxu0 0.0
    %2422 = vmatprep.subr.mxu0 0.0
    %2423 = vmatpush1.msra.mxu0 0.0
    %2424 = vmatprep.subr.mxu0 0.0
    %2425 = vmatpush1.msra.mxu0 0.0
    %2426 = vmatprep.subr.mxu0 0.0
    %2427 = vmatpush1.msra.mxu0 0.0
    %2428 = vmatprep.subr.mxu0 0.0
    %2429 = vmatpush1.msra.mxu0 %v2393
    %2430 = vmatprep.subr.mxu0 0.0
    %2431 = vmatpush2.msra.mxu0 0.0
    %2432 = vmatprep.subr.mxu0 0.0
    %2433 = vmatpush2.msra.mxu0 0.0
    %2434 = vmatprep.subr.mxu0 0.0
    %2435 = vmatpush2.msra.mxu0 0.0
    %2436 = vmatprep.subr.mxu0 0.0
    %2437 = vmatpush2.msra.mxu0 0.0
    %2438 = vmatprep.subr.mxu0 0.0
    %2439 = vmatpush2.msra.mxu0 0.0
    %2440 = vmatprep.subr.mxu0 0.0
    %2441 = vmatpush2.msra.mxu0 0.0
    %2442 = vmatprep.subr.mxu0 0.0
    %2443 = vmatpush2.msra.mxu0 0.0
    %2444 = vmatprep.subr.mxu0 0.0
    %2445 = vmatpush2.msra.mxu0 0.0
    %2446 = vmatprep.subr.mxu0 0.0
    %2447 = vmatpush2.msra.mxu0 0.0
    %2448 = vmatprep.subr.mxu0 0.0
    %2449 = vmatpush2.msra.mxu0 0.0
    %2450 = vmatprep.subr.mxu0 0.0
    %2451 = vmatpush2.msra.mxu0 0.0
    %2452 = vmatprep.subr.mxu0 0.0
    %2453 = vmatpush2.msra.mxu0 0.0
    %2454 = vmatprep.subr.mxu0 0.0
    %2455 = vmatpush2.msra.mxu0 0.0
    %2456 = vmatprep.subr.mxu0 0.0
    %2457 = vmatpush2.msra.mxu0 0.0
    %2458 = vmatprep.subr.mxu0 0.0
    %2459 = vmatpush2.msra.mxu0 0.0
    %2460 = vmatprep.subr.mxu0 0.0
    %2461 = vmatpush2.msra.mxu0 0.0
    %2462 = vmatprep.mubr.f32.mxu0 0.0
    %2463 = vmatmul.mubr.f32.gmra.mxu0 %v2396
    %v2464 = vpop.f32.mrf.mxu0
    %v2465 = vadd.f32 0.0, %v2464
    %v2466 = vpop.f32.mrf.mxu0
    %2467 = vdwg.mxu0
    %2468 = vrot.lane.b32.xlu0 %v2125, 120
    %v2469 = vpop.permute.xlu0 %2468
    %2470 = vrot.lane.b32.xlu0 %v2125, 88
    %v2471 = vpop.permute.xlu0 %2470
    %v2472 = vsel %vm291, %v2469, 0
    %v2474 = vsel %vm291, %v2471, 0
    %2476 = vmatprep.subr.mxu0 0.0
    %2477 = vmatpush1.xpose.msra.mxu0 0.0
    %2478 = vmatprep.subr.mxu0 0.0
    %2479 = vmatpush1.xpose.msra.mxu0 0.0
    %2480 = vmatprep.subr.mxu0 0.0
    %2481 = vmatpush1.xpose.msra.mxu0 0.0
    %2482 = vmatprep.subr.mxu0 0.0
    %2483 = vmatpush1.xpose.msra.mxu0 0.0
    %2484 = vmatprep.subr.mxu0 0.0
    %2485 = vmatpush1.xpose.msra.mxu0 0.0
    %2486 = vmatprep.subr.mxu0 0.0
    %2487 = vmatpush1.xpose.msra.mxu0 0.0
    %2488 = vmatprep.subr.mxu0 0.0
    %2489 = vmatpush1.xpose.msra.mxu0 0.0
    %2490 = vmatprep.subr.mxu0 0.0
    %2491 = vmatpush1.xpose.msra.mxu0 0.0
    %2492 = vmatprep.subr.mxu0 0.0
    %2493 = vmatpush1.xpose.msra.mxu0 0.0
    %2494 = vmatprep.subr.mxu0 0.0
    %2495 = vmatpush1.xpose.msra.mxu0 0.0
    %2496 = vmatprep.subr.mxu0 0.0
    %2497 = vmatpush1.xpose.msra.mxu0 0.0
    %2498 = vmatprep.subr.mxu0 0.0
    %2499 = vmatpush1.xpose.msra.mxu0 0.0
    %2500 = vmatprep.subr.mxu0 0.0
    %2501 = vmatpush1.xpose.msra.mxu0 0.0
    %2502 = vmatprep.subr.mxu0 0.0
    %2503 = vmatpush1.xpose.msra.mxu0 0.0
    %2504 = vmatprep.subr.mxu0 0.0
    %2505 = vmatpush1.xpose.msra.mxu0 0.0
    %2506 = vmatprep.subr.mxu0 0.0
    %2507 = vmatpush1.xpose.msra.mxu0 %v2474
    %2508 = vmatprep.subr.mxu0 0.0
    %2509 = vmatpush2.xpose.msra.mxu0 0.0
    %2510 = vmatprep.subr.mxu0 0.0
    %2511 = vmatpush2.xpose.msra.mxu0 0.0
    %2512 = vmatprep.subr.mxu0 0.0
    %2513 = vmatpush2.xpose.msra.mxu0 0.0
    %2514 = vmatprep.subr.mxu0 0.0
    %2515 = vmatpush2.xpose.msra.mxu0 0.0
    %2516 = vmatprep.subr.mxu0 0.0
    %2517 = vmatpush2.xpose.msra.mxu0 0.0
    %2518 = vmatprep.subr.mxu0 0.0
    %2519 = vmatpush2.xpose.msra.mxu0 0.0
    %2520 = vmatprep.subr.mxu0 0.0
    %2521 = vmatpush2.xpose.msra.mxu0 0.0
    %2522 = vmatprep.subr.mxu0 0.0
    %2523 = vmatpush2.xpose.msra.mxu0 0.0
    %2524 = vmatprep.subr.mxu0 0.0
    %2525 = vmatpush2.xpose.msra.mxu0 0.0
    %2526 = vmatprep.subr.mxu0 0.0
    %2527 = vmatpush2.xpose.msra.mxu0 0.0
    %2528 = vmatprep.subr.mxu0 0.0
    %2529 = vmatpush2.xpose.msra.mxu0 0.0
    %2530 = vmatprep.subr.mxu0 0.0
    %2531 = vmatpush2.xpose.msra.mxu0 0.0
    %2532 = vmatprep.subr.mxu0 0.0
    %2533 = vmatpush2.xpose.msra.mxu0 0.0
    %2534 = vmatprep.subr.mxu0 0.0
    %2535 = vmatpush2.xpose.msra.mxu0 0.0
    %2536 = vmatprep.subr.mxu0 0.0
    %2537 = vmatpush2.xpose.msra.mxu0 0.0
    %2538 = vmatprep.subr.mxu0 0.0
    %2539 = vmatpush2.xpose.msra.mxu0 0.0
    %2540 = vmatprep.mubr.f32.mxu0 0.0
    %2541 = vmatmul.mubr.f32.gmra.mxu0 %v2472
    %v2542 = vpop.f32.mrf.mxu0
    %v2543 = vadd.f32 0.0, %v2542
    %v2544 = vpop.f32.mrf.mxu0
    %2545 = vdwg.mxu0
    %2546 = vrot.lane.b32.xlu0 %v2130, 120
    %v2547 = vpop.permute.xlu0 %2546
    %2548 = vrot.lane.b32.xlu0 %v2130, 88
    %v2549 = vpop.permute.xlu0 %2548
    %v2550 = vsel %vm291, %v2547, 0
    %v2552 = vsel %vm291, %v2549, 0
    %2554 = vmatprep.subr.mxu0 0.0
    %2555 = vmatpush1.xpose.msra.mxu0 0.0
    %2556 = vmatprep.subr.mxu0 0.0
    %2557 = vmatpush1.xpose.msra.mxu0 0.0
    %2558 = vmatprep.subr.mxu0 0.0
    %2559 = vmatpush1.xpose.msra.mxu0 0.0
    %2560 = vmatprep.subr.mxu0 0.0
    %2561 = vmatpush1.xpose.msra.mxu0 0.0
    %2562 = vmatprep.subr.mxu0 0.0
    %2563 = vmatpush1.xpose.msra.mxu0 0.0
    %2564 = vmatprep.subr.mxu0 0.0
    %2565 = vmatpush1.xpose.msra.mxu0 0.0
    %2566 = vmatprep.subr.mxu0 0.0
    %2567 = vmatpush1.xpose.msra.mxu0 0.0
    %2568 = vmatprep.subr.mxu0 0.0
    %2569 = vmatpush1.xpose.msra.mxu0 0.0
    %2570 = vmatprep.subr.mxu0 0.0
    %2571 = vmatpush1.xpose.msra.mxu0 0.0
    %2572 = vmatprep.subr.mxu0 0.0
    %2573 = vmatpush1.xpose.msra.mxu0 0.0
    %2574 = vmatprep.subr.mxu0 0.0
    %2575 = vmatpush1.xpose.msra.mxu0 0.0
    %2576 = vmatprep.subr.mxu0 0.0
    %2577 = vmatpush1.xpose.msra.mxu0 0.0
    %2578 = vmatprep.subr.mxu0 0.0
    %2579 = vmatpush1.xpose.msra.mxu0 0.0
    %2580 = vmatprep.subr.mxu0 0.0
    %2581 = vmatpush1.xpose.msra.mxu0 0.0
    %2582 = vmatprep.subr.mxu0 0.0
    %2583 = vmatpush1.xpose.msra.mxu0 0.0
    %2584 = vmatprep.subr.mxu0 0.0
    %2585 = vmatpush1.xpose.msra.mxu0 %v2552
    %2586 = vmatprep.subr.mxu0 0.0
    %2587 = vmatpush2.xpose.msra.mxu0 0.0
    %2588 = vmatprep.subr.mxu0 0.0
    %2589 = vmatpush2.xpose.msra.mxu0 0.0
    %2590 = vmatprep.subr.mxu0 0.0
    %2591 = vmatpush2.xpose.msra.mxu0 0.0
    %2592 = vmatprep.subr.mxu0 0.0
    %2593 = vmatpush2.xpose.msra.mxu0 0.0
    %2594 = vmatprep.subr.mxu0 0.0
    %2595 = vmatpush2.xpose.msra.mxu0 0.0
    %2596 = vmatprep.subr.mxu0 0.0
    %2597 = vmatpush2.xpose.msra.mxu0 0.0
    %2598 = vmatprep.subr.mxu0 0.0
    %2599 = vmatpush2.xpose.msra.mxu0 0.0
    %2600 = vmatprep.subr.mxu0 0.0
    %2601 = vmatpush2.xpose.msra.mxu0 0.0
    %2602 = vmatprep.subr.mxu0 0.0
    %2603 = vmatpush2.xpose.msra.mxu0 0.0
    %2604 = vmatprep.subr.mxu0 0.0
    %2605 = vmatpush2.xpose.msra.mxu0 0.0
    %2606 = vmatprep.subr.mxu0 0.0
    %2607 = vmatpush2.xpose.msra.mxu0 0.0
    %2608 = vmatprep.subr.mxu0 0.0
    %2609 = vmatpush2.xpose.msra.mxu0 0.0
    %2610 = vmatprep.subr.mxu0 0.0
    %2611 = vmatpush2.xpose.msra.mxu0 0.0
    %2612 = vmatprep.subr.mxu0 0.0
    %2613 = vmatpush2.xpose.msra.mxu0 0.0
    %2614 = vmatprep.subr.mxu0 0.0
    %2615 = vmatpush2.xpose.msra.mxu0 0.0
    %2616 = vmatprep.subr.mxu0 0.0
    %2617 = vmatpush2.xpose.msra.mxu0 0.0
    %2618 = vmatprep.mubr.f32.mxu0 0.0
    %2619 = vmatmul.mubr.f32.gmra.mxu0 %v2550
    %v2620 = vpop.f32.mrf.mxu0
    %v2621 = vadd.f32 0.0, %v2620
    %v2622 = vpop.f32.mrf.mxu0
    %2623 = vdwg.mxu0
    %v2624 = vmul.f32 %v2543, 0.35355338
    %v2625 = vmul.f32 %v2621, 0.35355338
    %v2626 = vadd.f32 %v2624, %v188
    %v2627 = vadd.f32 %v2625, %v192
    %v2628 = vsel %vm291, %v2626, -inf
    %2629 = vmax.xlane.f32.xlu0 %v2628
    %v2630 = vpop.xlane.xlu0 %2629
    %v2631 = vsel %vm291, %v2627, -inf
    %2632 = vmax.xlane.f32.xlu0 %v2631
    %v2633 = vpop.xlane.xlu0 %2632
    %v2634 = vsub.f32 %v2626, %v2630
    %v2635 = vsub.f32 %v2627, %v2633
    %v2636 = vmul.f32 %v2634, 1.442695
    %v2637 = vpow.pop %v2636
    %v2638 = vmul.f32 %v2635, 1.442695
    %v2639 = vpow.pop %v2638
    %v2640 = vsel %vm291, %v2637, 0.0
    %2641 = vadd.xlane.f32.xlu0 %v2640
    %v2642 = vpop.xlane.xlu0 %2641
    %v2643 = vsel %vm291, %v2639, 0.0
    %2644 = vadd.xlane.f32.xlu0 %v2643
    %v2645 = vpop.xlane.xlu0 %2644
    %v2646 = vrcp.pop %v2642
    %v2647 = vmul.f32 %v2637, %v2646
    %v2648 = vrcp.pop %v2645
    %v2649 = vmul.f32 %v2639, %v2648
    %2650 = vst.msk [vmem:[%s2313 + $0x8] sm:$0xff] %vm291, %v2647
    %2651 = vst.msk [vmem:[%s2313 + $0x28] sm:$0xff] %vm291, %v2649
    %2652 = vrot.lane.b32.xlu0 %v2125, 56
    %v2653 = vpop.permute.xlu0 %2652
    %v2656 = vsel %vm291, %v2647, 0
    %2658 = vmatprep.subr.mxu0 0.0
    %2659 = vmatpush1.msra.mxu0 0.0
    %2660 = vmatprep.subr.mxu0 0.0
    %2661 = vmatpush1.msra.mxu0 0.0
    %2662 = vmatprep.subr.mxu0 0.0
    %2663 = vmatpush1.msra.mxu0 0.0
    %2664 = vmatprep.subr.mxu0 0.0
    %2665 = vmatpush1.msra.mxu0 0.0
    %2666 = vmatprep.subr.mxu0 0.0
    %2667 = vmatpush1.msra.mxu0 0.0
    %2668 = vmatprep.subr.mxu0 0.0
    %2669 = vmatpush1.msra.mxu0 0.0
    %2670 = vmatprep.subr.mxu0 0.0
    %2671 = vmatpush1.msra.mxu0 0.0
    %2672 = vmatprep.subr.mxu0 0.0
    %2673 = vmatpush1.msra.mxu0 0.0
    %2674 = vmatprep.subr.mxu0 0.0
    %2675 = vmatpush1.msra.mxu0 0.0
    %2676 = vmatprep.subr.mxu0 0.0
    %2677 = vmatpush1.msra.mxu0 0.0
    %2678 = vmatprep.subr.mxu0 0.0
    %2679 = vmatpush1.msra.mxu0 0.0
    %2680 = vmatprep.subr.mxu0 0.0
    %2681 = vmatpush1.msra.mxu0 0.0
    %2682 = vmatprep.subr.mxu0 0.0
    %2683 = vmatpush1.msra.mxu0 0.0
    %2684 = vmatprep.subr.mxu0 0.0
    %2685 = vmatpush1.msra.mxu0 0.0
    %2686 = vmatprep.subr.mxu0 0.0
    %2687 = vmatpush1.msra.mxu0 0.0
    %2688 = vmatprep.subr.mxu0 0.0
    %2689 = vmatpush1.msra.mxu0 %v2653
    %2690 = vmatprep.subr.mxu0 0.0
    %2691 = vmatpush2.msra.mxu0 0.0
    %2692 = vmatprep.subr.mxu0 0.0
    %2693 = vmatpush2.msra.mxu0 0.0
    %2694 = vmatprep.subr.mxu0 0.0
    %2695 = vmatpush2.msra.mxu0 0.0
    %2696 = vmatprep.subr.mxu0 0.0
    %2697 = vmatpush2.msra.mxu0 0.0
    %2698 = vmatprep.subr.mxu0 0.0
    %2699 = vmatpush2.msra.mxu0 0.0
    %2700 = vmatprep.subr.mxu0 0.0
    %2701 = vmatpush2.msra.mxu0 0.0
    %2702 = vmatprep.subr.mxu0 0.0
    %2703 = vmatpush2.msra.mxu0 0.0
    %2704 = vmatprep.subr.mxu0 0.0
    %2705 = vmatpush2.msra.mxu0 0.0
    %2706 = vmatprep.subr.mxu0 0.0
    %2707 = vmatpush2.msra.mxu0 0.0
    %2708 = vmatprep.subr.mxu0 0.0
    %2709 = vmatpush2.msra.mxu0 0.0
    %2710 = vmatprep.subr.mxu0 0.0
    %2711 = vmatpush2.msra.mxu0 0.0
    %2712 = vmatprep.subr.mxu0 0.0
    %2713 = vmatpush2.msra.mxu0 0.0
    %2714 = vmatprep.subr.mxu0 0.0
    %2715 = vmatpush2.msra.mxu0 0.0
    %2716 = vmatprep.subr.mxu0 0.0
    %2717 = vmatpush2.msra.mxu0 0.0
    %2718 = vmatprep.subr.mxu0 0.0
    %2719 = vmatpush2.msra.mxu0 0.0
    %2720 = vmatprep.subr.mxu0 0.0
    %2721 = vmatpush2.msra.mxu0 0.0
    %2722 = vmatprep.mubr.f32.mxu0 0.0
    %2723 = vmatmul.mubr.f32.gmra.mxu0 %v2656
    %v2724 = vpop.f32.mrf.mxu0
    %v2725 = vadd.f32 0.0, %v2724
    %v2726 = vpop.f32.mrf.mxu0
    %2727 = vdwg.mxu0
    %2728 = vrot.lane.b32.xlu0 %v2130, 56
    %v2729 = vpop.permute.xlu0 %2728
    %v2732 = vsel %vm291, %v2649, 0
    %2734 = vmatprep.subr.mxu0 0.0
    %2735 = vmatpush1.msra.mxu0 0.0
    %2736 = vmatprep.subr.mxu0 0.0
    %2737 = vmatpush1.msra.mxu0 0.0
    %2738 = vmatprep.subr.mxu0 0.0
    %2739 = vmatpush1.msra.mxu0 0.0
    %2740 = vmatprep.subr.mxu0 0.0
    %2741 = vmatpush1.msra.mxu0 0.0
    %2742 = vmatprep.subr.mxu0 0.0
    %2743 = vmatpush1.msra.mxu0 0.0
    %2744 = vmatprep.subr.mxu0 0.0
    %2745 = vmatpush1.msra.mxu0 0.0
    %2746 = vmatprep.subr.mxu0 0.0
    %2747 = vmatpush1.msra.mxu0 0.0
    %2748 = vmatprep.subr.mxu0 0.0
    %2749 = vmatpush1.msra.mxu0 0.0
    %2750 = vmatprep.subr.mxu0 0.0
    %2751 = vmatpush1.msra.mxu0 0.0
    %2752 = vmatprep.subr.mxu0 0.0
    %2753 = vmatpush1.msra.mxu0 0.0
    %2754 = vmatprep.subr.mxu0 0.0
    %2755 = vmatpush1.msra.mxu0 0.0
    %2756 = vmatprep.subr.mxu0 0.0
    %2757 = vmatpush1.msra.mxu0 0.0
    %2758 = vmatprep.subr.mxu0 0.0
    %2759 = vmatpush1.msra.mxu0 0.0
    %2760 = vmatprep.subr.mxu0 0.0
    %2761 = vmatpush1.msra.mxu0 0.0
    %2762 = vmatprep.subr.mxu0 0.0
    %2763 = vmatpush1.msra.mxu0 0.0
    %2764 = vmatprep.subr.mxu0 0.0
    %2765 = vmatpush1.msra.mxu0 %v2729
    %2766 = vmatprep.subr.mxu0 0.0
    %2767 = vmatpush2.msra.mxu0 0.0
    %2768 = vmatprep.subr.mxu0 0.0
    %2769 = vmatpush2.msra.mxu0 0.0
    %2770 = vmatprep.subr.mxu0 0.0
    %2771 = vmatpush2.msra.mxu0 0.0
    %2772 = vmatprep.subr.mxu0 0.0
    %2773 = vmatpush2.msra.mxu0 0.0
    %2774 = vmatprep.subr.mxu0 0.0
    %2775 = vmatpush2.msra.mxu0 0.0
    %2776 = vmatprep.subr.mxu0 0.0
    %2777 = vmatpush2.msra.mxu0 0.0
    %2778 = vmatprep.subr.mxu0 0.0
    %2779 = vmatpush2.msra.mxu0 0.0
    %2780 = vmatprep.subr.mxu0 0.0
    %2781 = vmatpush2.msra.mxu0 0.0
    %2782 = vmatprep.subr.mxu0 0.0
    %2783 = vmatpush2.msra.mxu0 0.0
    %2784 = vmatprep.subr.mxu0 0.0
    %2785 = vmatpush2.msra.mxu0 0.0
    %2786 = vmatprep.subr.mxu0 0.0
    %2787 = vmatpush2.msra.mxu0 0.0
    %2788 = vmatprep.subr.mxu0 0.0
    %2789 = vmatpush2.msra.mxu0 0.0
    %2790 = vmatprep.subr.mxu0 0.0
    %2791 = vmatpush2.msra.mxu0 0.0
    %2792 = vmatprep.subr.mxu0 0.0
    %2793 = vmatpush2.msra.mxu0 0.0
    %2794 = vmatprep.subr.mxu0 0.0
    %2795 = vmatpush2.msra.mxu0 0.0
    %2796 = vmatprep.subr.mxu0 0.0
    %2797 = vmatpush2.msra.mxu0 0.0
    %2798 = vmatprep.mubr.f32.mxu0 0.0
    %2799 = vmatmul.mubr.f32.gmra.mxu0 %v2732
    %v2800 = vpop.f32.mrf.mxu0
    %v2801 = vadd.f32 0.0, %v2800
    %v2802 = vpop.f32.mrf.mxu0
    %2803 = vdwg.mxu0
    %2804 = vrot.lane.b32.xlu0 %v2125, 112
    %v2805 = vpop.permute.xlu0 %2804
    %2806 = vrot.lane.b32.xlu0 %v2125, 80
    %v2807 = vpop.permute.xlu0 %2806
    %v2808 = vsel %vm291, %v2805, 0
    %v2810 = vsel %vm291, %v2807, 0
    %2812 = vmatprep.subr.mxu0 0.0
    %2813 = vmatpush1.xpose.msra.mxu0 0.0
    %2814 = vmatprep.subr.mxu0 0.0
    %2815 = vmatpush1.xpose.msra.mxu0 0.0
    %2816 = vmatprep.subr.mxu0 0.0
    %2817 = vmatpush1.xpose.msra.mxu0 0.0
    %2818 = vmatprep.subr.mxu0 0.0
    %2819 = vmatpush1.xpose.msra.mxu0 0.0
    %2820 = vmatprep.subr.mxu0 0.0
    %2821 = vmatpush1.xpose.msra.mxu0 0.0
    %2822 = vmatprep.subr.mxu0 0.0
    %2823 = vmatpush1.xpose.msra.mxu0 0.0
    %2824 = vmatprep.subr.mxu0 0.0
    %2825 = vmatpush1.xpose.msra.mxu0 0.0
    %2826 = vmatprep.subr.mxu0 0.0
    %2827 = vmatpush1.xpose.msra.mxu0 0.0
    %2828 = vmatprep.subr.mxu0 0.0
    %2829 = vmatpush1.xpose.msra.mxu0 0.0
    %2830 = vmatprep.subr.mxu0 0.0
    %2831 = vmatpush1.xpose.msra.mxu0 0.0
    %2832 = vmatprep.subr.mxu0 0.0
    %2833 = vmatpush1.xpose.msra.mxu0 0.0
    %2834 = vmatprep.subr.mxu0 0.0
    %2835 = vmatpush1.xpose.msra.mxu0 0.0
    %2836 = vmatprep.subr.mxu0 0.0
    %2837 = vmatpush1.xpose.msra.mxu0 0.0
    %2838 = vmatprep.subr.mxu0 0.0
    %2839 = vmatpush1.xpose.msra.mxu0 0.0
    %2840 = vmatprep.subr.mxu0 0.0
    %2841 = vmatpush1.xpose.msra.mxu0 0.0
    %2842 = vmatprep.subr.mxu0 0.0
    %2843 = vmatpush1.xpose.msra.mxu0 %v2810
    %2844 = vmatprep.subr.mxu0 0.0
    %2845 = vmatpush2.xpose.msra.mxu0 0.0
    %2846 = vmatprep.subr.mxu0 0.0
    %2847 = vmatpush2.xpose.msra.mxu0 0.0
    %2848 = vmatprep.subr.mxu0 0.0
    %2849 = vmatpush2.xpose.msra.mxu0 0.0
    %2850 = vmatprep.subr.mxu0 0.0
    %2851 = vmatpush2.xpose.msra.mxu0 0.0
    %2852 = vmatprep.subr.mxu0 0.0
    %2853 = vmatpush2.xpose.msra.mxu0 0.0
    %2854 = vmatprep.subr.mxu0 0.0
    %2855 = vmatpush2.xpose.msra.mxu0 0.0
    %2856 = vmatprep.subr.mxu0 0.0
    %2857 = vmatpush2.xpose.msra.mxu0 0.0
    %2858 = vmatprep.subr.mxu0 0.0
    %2859 = vmatpush2.xpose.msra.mxu0 0.0
    %2860 = vmatprep.subr.mxu0 0.0
    %2861 = vmatpush2.xpose.msra.mxu0 0.0
    %2862 = vmatprep.subr.mxu0 0.0
    %2863 = vmatpush2.xpose.msra.mxu0 0.0
    %2864 = vmatprep.subr.mxu0 0.0
    %2865 = vmatpush2.xpose.msra.mxu0 0.0
    %2866 = vmatprep.subr.mxu0 0.0
    %2867 = vmatpush2.xpose.msra.mxu0 0.0
    %2868 = vmatprep.subr.mxu0 0.0
    %2869 = vmatpush2.xpose.msra.mxu0 0.0
    %2870 = vmatprep.subr.mxu0 0.0
    %2871 = vmatpush2.xpose.msra.mxu0 0.0
    %2872 = vmatprep.subr.mxu0 0.0
    %2873 = vmatpush2.xpose.msra.mxu0 0.0
    %2874 = vmatprep.subr.mxu0 0.0
    %2875 = vmatpush2.xpose.msra.mxu0 0.0
    %2876 = vmatprep.mubr.f32.mxu0 0.0
    %2877 = vmatmul.mubr.f32.gmra.mxu0 %v2808
    %v2878 = vpop.f32.mrf.mxu0
    %v2879 = vadd.f32 0.0, %v2878
    %v2880 = vpop.f32.mrf.mxu0
    %2881 = vdwg.mxu0
    %2882 = vrot.lane.b32.xlu0 %v2130, 112
    %v2883 = vpop.permute.xlu0 %2882
    %2884 = vrot.lane.b32.xlu0 %v2130, 80
    %v2885 = vpop.permute.xlu0 %2884
    %v2886 = vsel %vm291, %v2883, 0
    %v2888 = vsel %vm291, %v2885, 0
    %2890 = vmatprep.subr.mxu0 0.0
    %2891 = vmatpush1.xpose.msra.mxu0 0.0
    %2892 = vmatprep.subr.mxu0 0.0
    %2893 = vmatpush1.xpose.msra.mxu0 0.0
    %2894 = vmatprep.subr.mxu0 0.0
    %2895 = vmatpush1.xpose.msra.mxu0 0.0
    %2896 = vmatprep.subr.mxu0 0.0
    %2897 = vmatpush1.xpose.msra.mxu0 0.0
    %2898 = vmatprep.subr.mxu0 0.0
    %2899 = vmatpush1.xpose.msra.mxu0 0.0
    %2900 = vmatprep.subr.mxu0 0.0
    %2901 = vmatpush1.xpose.msra.mxu0 0.0
    %2902 = vmatprep.subr.mxu0 0.0
    %2903 = vmatpush1.xpose.msra.mxu0 0.0
    %2904 = vmatprep.subr.mxu0 0.0
    %2905 = vmatpush1.xpose.msra.mxu0 0.0
    %2906 = vmatprep.subr.mxu0 0.0
    %2907 = vmatpush1.xpose.msra.mxu0 0.0
    %2908 = vmatprep.subr.mxu0 0.0
    %2909 = vmatpush1.xpose.msra.mxu0 0.0
    %2910 = vmatprep.subr.mxu0 0.0
    %2911 = vmatpush1.xpose.msra.mxu0 0.0
    %2912 = vmatprep.subr.mxu0 0.0
    %2913 = vmatpush1.xpose.msra.mxu0 0.0
    %2914 = vmatprep.subr.mxu0 0.0
    %2915 = vmatpush1.xpose.msra.mxu0 0.0
    %2916 = vmatprep.subr.mxu0 0.0
    %2917 = vmatpush1.xpose.msra.mxu0 0.0
    %2918 = vmatprep.subr.mxu0 0.0
    %2919 = vmatpush1.xpose.msra.mxu0 0.0
    %2920 = vmatprep.subr.mxu0 0.0
    %2921 = vmatpush1.xpose.msra.mxu0 %v2888
    %2922 = vmatprep.subr.mxu0 0.0
    %2923 = vmatpush2.xpose.msra.mxu0 0.0
    %2924 = vmatprep.subr.mxu0 0.0
    %2925 = vmatpush2.xpose.msra.mxu0 0.0
    %2926 = vmatprep.subr.mxu0 0.0
    %2927 = vmatpush2.xpose.msra.mxu0 0.0
    %2928 = vmatprep.subr.mxu0 0.0
    %2929 = vmatpush2.xpose.msra.mxu0 0.0
    %2930 = vmatprep.subr.mxu0 0.0
    %2931 = vmatpush2.xpose.msra.mxu0 0.0
    %2932 = vmatprep.subr.mxu0 0.0
    %2933 = vmatpush2.xpose.msra.mxu0 0.0
    %2934 = vmatprep.subr.mxu0 0.0
    %2935 = vmatpush2.xpose.msra.mxu0 0.0
    %2936 = vmatprep.subr.mxu0 0.0
    %2937 = vmatpush2.xpose.msra.mxu0 0.0
    %2938 = vmatprep.subr.mxu0 0.0
    %2939 = vmatpush2.xpose.msra.mxu0 0.0
    %2940 = vmatprep.subr.mxu0 0.0
    %2941 = vmatpush2.xpose.msra.mxu0 0.0
    %2942 = vmatprep.subr.mxu0 0.0
    %2943 = vmatpush2.xpose.msra.mxu0 0.0
    %2944 = vmatprep.subr.mxu0 0.0
    %2945 = vmatpush2.xpose.msra.mxu0 0.0
    %2946 = vmatprep.subr.mxu0 0.0
    %2947 = vmatpush2.xpose.msra.mxu0 0.0
    %2948 = vmatprep.subr.mxu0 0.0
    %2949 = vmatpush2.xpose.msra.mxu0 0.0
    %2950 = vmatprep.subr.mxu0 0.0
    %2951 = vmatpush2.xpose.msra.mxu0 0.0
    %2952 = vmatprep.subr.mxu0 0.0
    %2953 = vmatpush2.xpose.msra.mxu0 0.0
    %2954 = vmatprep.mubr.f32.mxu0 0.0
    %2955 = vmatmul.mubr.f32.gmra.mxu0 %v2886
    %v2956 = vpop.f32.mrf.mxu0
    %v2957 = vadd.f32 0.0, %v2956
    %v2958 = vpop.f32.mrf.mxu0
    %2959 = vdwg.mxu0
    %v2960 = vmul.f32 %v2879, 0.35355338
    %v2961 = vmul.f32 %v2957, 0.35355338
    %v2962 = vadd.f32 %v2960, %v188
    %v2963 = vadd.f32 %v2961, %v192
    %v2964 = vsel %vm291, %v2962, -inf
    %2965 = vmax.xlane.f32.xlu0 %v2964
    %v2966 = vpop.xlane.xlu0 %2965
    %v2967 = vsel %vm291, %v2963, -inf
    %2968 = vmax.xlane.f32.xlu0 %v2967
    %v2969 = vpop.xlane.xlu0 %2968
    %v2970 = vsub.f32 %v2962, %v2966
    %v2971 = vsub.f32 %v2963, %v2969
    %v2972 = vmul.f32 %v2970, 1.442695
    %v2973 = vpow.pop %v2972
    %v2974 = vmul.f32 %v2971, 1.442695
    %v2975 = vpow.pop %v2974
    %v2976 = vsel %vm291, %v2973, 0.0
    %2977 = vadd.xlane.f32.xlu0 %v2976
    %v2978 = vpop.xlane.xlu0 %2977
    %v2979 = vsel %vm291, %v2975, 0.0
    %2980 = vadd.xlane.f32.xlu0 %v2979
    %v2981 = vpop.xlane.xlu0 %2980
    %v2982 = vrcp.pop %v2978
    %v2983 = vmul.f32 %v2973, %v2982
    %v2984 = vrcp.pop %v2981
    %v2985 = vmul.f32 %v2975, %v2984
    %2986 = vst.msk [vmem:[%s2313 + $0x10] sm:$0xff] %vm291, %v2983
    %2987 = vst.msk [vmem:[%s2313 + $0x30] sm:$0xff] %vm291, %v2985
    %2988 = vrot.lane.b32.xlu0 %v2125, 48
    %v2989 = vpop.permute.xlu0 %2988
    %v2992 = vsel %vm291, %v2983, 0
    %2994 = vmatprep.subr.mxu0 0.0
    %2995 = vmatpush1.msra.mxu0 0.0
    %2996 = vmatprep.subr.mxu0 0.0
    %2997 = vmatpush1.msra.mxu0 0.0
    %2998 = vmatprep.subr.mxu0 0.0
    %2999 = vmatpush1.msra.mxu0 0.0
    %3000 = vmatprep.subr.mxu0 0.0
    %3001 = vmatpush1.msra.mxu0 0.0
    %3002 = vmatprep.subr.mxu0 0.0
    %3003 = vmatpush1.msra.mxu0 0.0
    %3004 = vmatprep.subr.mxu0 0.0
    %3005 = vmatpush1.msra.mxu0 0.0
    %3006 = vmatprep.subr.mxu0 0.0
    %3007 = vmatpush1.msra.mxu0 0.0
    %3008 = vmatprep.subr.mxu0 0.0
    %3009 = vmatpush1.msra.mxu0 0.0
    %3010 = vmatprep.subr.mxu0 0.0
    %3011 = vmatpush1.msra.mxu0 0.0
    %3012 = vmatprep.subr.mxu0 0.0
    %3013 = vmatpush1.msra.mxu0 0.0
    %3014 = vmatprep.subr.mxu0 0.0
    %3015 = vmatpush1.msra.mxu0 0.0
    %3016 = vmatprep.subr.mxu0 0.0
    %3017 = vmatpush1.msra.mxu0 0.0
    %3018 = vmatprep.subr.mxu0 0.0
    %3019 = vmatpush1.msra.mxu0 0.0
    %3020 = vmatprep.subr.mxu0 0.0
    %3021 = vmatpush1.msra.mxu0 0.0
    %3022 = vmatprep.subr.mxu0 0.0
    %3023 = vmatpush1.msra.mxu0 0.0
    %3024 = vmatprep.subr.mxu0 0.0
    %3025 = vmatpush1.msra.mxu0 %v2989
    %3026 = vmatprep.subr.mxu0 0.0
    %3027 = vmatpush2.msra.mxu0 0.0
    %3028 = vmatprep.subr.mxu0 0.0
    %3029 = vmatpush2.msra.mxu0 0.0
    %3030 = vmatprep.subr.mxu0 0.0
    %3031 = vmatpush2.msra.mxu0 0.0
    %3032 = vmatprep.subr.mxu0 0.0
    %3033 = vmatpush2.msra.mxu0 0.0
    %3034 = vmatprep.subr.mxu0 0.0
    %3035 = vmatpush2.msra.mxu0 0.0
    %3036 = vmatprep.subr.mxu0 0.0
    %3037 = vmatpush2.msra.mxu0 0.0
    %3038 = vmatprep.subr.mxu0 0.0
    %3039 = vmatpush2.msra.mxu0 0.0
    %3040 = vmatprep.subr.mxu0 0.0
    %3041 = vmatpush2.msra.mxu0 0.0
    %3042 = vmatprep.subr.mxu0 0.0
    %3043 = vmatpush2.msra.mxu0 0.0
    %3044 = vmatprep.subr.mxu0 0.0
    %3045 = vmatpush2.msra.mxu0 0.0
    %3046 = vmatprep.subr.mxu0 0.0
    %3047 = vmatpush2.msra.mxu0 0.0
    %3048 = vmatprep.subr.mxu0 0.0
    %3049 = vmatpush2.msra.mxu0 0.0
    %3050 = vmatprep.subr.mxu0 0.0
    %3051 = vmatpush2.msra.mxu0 0.0
    %3052 = vmatprep.subr.mxu0 0.0
    %3053 = vmatpush2.msra.mxu0 0.0
    %3054 = vmatprep.subr.mxu0 0.0
    %3055 = vmatpush2.msra.mxu0 0.0
    %3056 = vmatprep.subr.mxu0 0.0
    %3057 = vmatpush2.msra.mxu0 0.0
    %3058 = vmatprep.mubr.f32.mxu0 0.0
    %3059 = vmatmul.mubr.f32.gmra.mxu0 %v2992
    %v3060 = vpop.f32.mrf.mxu0
    %v3061 = vadd.f32 0.0, %v3060
    %v3062 = vpop.f32.mrf.mxu0
    %3063 = vdwg.mxu0
    %3064 = vrot.lane.b32.xlu0 %v2130, 48
    %v3065 = vpop.permute.xlu0 %3064
    %v3068 = vsel %vm291, %v2985, 0
    %3070 = vmatprep.subr.mxu0 0.0
    %3071 = vmatpush1.msra.mxu0 0.0
    %3072 = vmatprep.subr.mxu0 0.0
    %3073 = vmatpush1.msra.mxu0 0.0
    %3074 = vmatprep.subr.mxu0 0.0
    %3075 = vmatpush1.msra.mxu0 0.0
    %3076 = vmatprep.subr.mxu0 0.0
    %3077 = vmatpush1.msra.mxu0 0.0
    %3078 = vmatprep.subr.mxu0 0.0
    %3079 = vmatpush1.msra.mxu0 0.0
    %3080 = vmatprep.subr.mxu0 0.0
    %3081 = vmatpush1.msra.mxu0 0.0
    %3082 = vmatprep.subr.mxu0 0.0
    %3083 = vmatpush1.msra.mxu0 0.0
    %3084 = vmatprep.subr.mxu0 0.0
    %3085 = vmatpush1.msra.mxu0 0.0
    %3086 = vmatprep.subr.mxu0 0.0
    %3087 = vmatpush1.msra.mxu0 0.0
    %3088 = vmatprep.subr.mxu0 0.0
    %3089 = vmatpush1.msra.mxu0 0.0
    %3090 = vmatprep.subr.mxu0 0.0
    %3091 = vmatpush1.msra.mxu0 0.0
    %3092 = vmatprep.subr.mxu0 0.0
    %3093 = vmatpush1.msra.mxu0 0.0
    %3094 = vmatprep.subr.mxu0 0.0
    %3095 = vmatpush1.msra.mxu0 0.0
    %3096 = vmatprep.subr.mxu0 0.0
    %3097 = vmatpush1.msra.mxu0 0.0
    %3098 = vmatprep.subr.mxu0 0.0
    %3099 = vmatpush1.msra.mxu0 0.0
    %3100 = vmatprep.subr.mxu0 0.0
    %3101 = vmatpush1.msra.mxu0 %v3065
    %3102 = vmatprep.subr.mxu0 0.0
    %3103 = vmatpush2.msra.mxu0 0.0
    %3104 = vmatprep.subr.mxu0 0.0
    %3105 = vmatpush2.msra.mxu0 0.0
    %3106 = vmatprep.subr.mxu0 0.0
    %3107 = vmatpush2.msra.mxu0 0.0
    %3108 = vmatprep.subr.mxu0 0.0
    %3109 = vmatpush2.msra.mxu0 0.0
    %3110 = vmatprep.subr.mxu0 0.0
    %3111 = vmatpush2.msra.mxu0 0.0
    %3112 = vmatprep.subr.mxu0 0.0
    %3113 = vmatpush2.msra.mxu0 0.0
    %3114 = vmatprep.subr.mxu0 0.0
    %3115 = vmatpush2.msra.mxu0 0.0
    %3116 = vmatprep.subr.mxu0 0.0
    %3117 = vmatpush2.msra.mxu0 0.0
    %3118 = vmatprep.subr.mxu0 0.0
    %3119 = vmatpush2.msra.mxu0 0.0
    %3120 = vmatprep.subr.mxu0 0.0
    %3121 = vmatpush2.msra.mxu0 0.0
    %3122 = vmatprep.subr.mxu0 0.0
    %3123 = vmatpush2.msra.mxu0 0.0
    %3124 = vmatprep.subr.mxu0 0.0
    %3125 = vmatpush2.msra.mxu0 0.0
    %3126 = vmatprep.subr.mxu0 0.0
    %3127 = vmatpush2.msra.mxu0 0.0
    %3128 = vmatprep.subr.mxu0 0.0
    %3129 = vmatpush2.msra.mxu0 0.0
    %3130 = vmatprep.subr.mxu0 0.0
    %3131 = vmatpush2.msra.mxu0 0.0
    %3132 = vmatprep.subr.mxu0 0.0
    %3133 = vmatpush2.msra.mxu0 0.0
    %3134 = vmatprep.mubr.f32.mxu0 0.0
    %3135 = vmatmul.mubr.f32.gmra.mxu0 %v3068
    %v3136 = vpop.f32.mrf.mxu0
    %v3137 = vadd.f32 0.0, %v3136
    %v3138 = vpop.f32.mrf.mxu0
    %3139 = vdwg.mxu0
    %3140 = vrot.lane.b32.xlu0 %v2125, 104
    %v3141 = vpop.permute.xlu0 %3140
    %3142 = vrot.lane.b32.xlu0 %v2125, 72
    %v3143 = vpop.permute.xlu0 %3142
    %v3144 = vsel %vm291, %v3141, 0
    %v3146 = vsel %vm291, %v3143, 0
    %3148 = vmatprep.subr.mxu0 0.0
    %3149 = vmatpush1.xpose.msra.mxu0 0.0
    %3150 = vmatprep.subr.mxu0 0.0
    %3151 = vmatpush1.xpose.msra.mxu0 0.0
    %3152 = vmatprep.subr.mxu0 0.0
    %3153 = vmatpush1.xpose.msra.mxu0 0.0
    %3154 = vmatprep.subr.mxu0 0.0
    %3155 = vmatpush1.xpose.msra.mxu0 0.0
    %3156 = vmatprep.subr.mxu0 0.0
    %3157 = vmatpush1.xpose.msra.mxu0 0.0
    %3158 = vmatprep.subr.mxu0 0.0
    %3159 = vmatpush1.xpose.msra.mxu0 0.0
    %3160 = vmatprep.subr.mxu0 0.0
    %3161 = vmatpush1.xpose.msra.mxu0 0.0
    %3162 = vmatprep.subr.mxu0 0.0
    %3163 = vmatpush1.xpose.msra.mxu0 0.0
    %3164 = vmatprep.subr.mxu0 0.0
    %3165 = vmatpush1.xpose.msra.mxu0 0.0
    %3166 = vmatprep.subr.mxu0 0.0
    %3167 = vmatpush1.xpose.msra.mxu0 0.0
    %3168 = vmatprep.subr.mxu0 0.0
    %3169 = vmatpush1.xpose.msra.mxu0 0.0
    %3170 = vmatprep.subr.mxu0 0.0
    %3171 = vmatpush1.xpose.msra.mxu0 0.0
    %3172 = vmatprep.subr.mxu0 0.0
    %3173 = vmatpush1.xpose.msra.mxu0 0.0
    %3174 = vmatprep.subr.mxu0 0.0
    %3175 = vmatpush1.xpose.msra.mxu0 0.0
    %3176 = vmatprep.subr.mxu0 0.0
    %3177 = vmatpush1.xpose.msra.mxu0 0.0
    %3178 = vmatprep.subr.mxu0 0.0
    %3179 = vmatpush1.xpose.msra.mxu0 %v3146
    %3180 = vmatprep.subr.mxu0 0.0
    %3181 = vmatpush2.xpose.msra.mxu0 0.0
    %3182 = vmatprep.subr.mxu0 0.0
    %3183 = vmatpush2.xpose.msra.mxu0 0.0
    %3184 = vmatprep.subr.mxu0 0.0
    %3185 = vmatpush2.xpose.msra.mxu0 0.0
    %3186 = vmatprep.subr.mxu0 0.0
    %3187 = vmatpush2.xpose.msra.mxu0 0.0
    %3188 = vmatprep.subr.mxu0 0.0
    %3189 = vmatpush2.xpose.msra.mxu0 0.0
    %3190 = vmatprep.subr.mxu0 0.0
    %3191 = vmatpush2.xpose.msra.mxu0 0.0
    %3192 = vmatprep.subr.mxu0 0.0
    %3193 = vmatpush2.xpose.msra.mxu0 0.0
    %3194 = vmatprep.subr.mxu0 0.0
    %3195 = vmatpush2.xpose.msra.mxu0 0.0
    %3196 = vmatprep.subr.mxu0 0.0
    %3197 = vmatpush2.xpose.msra.mxu0 0.0
    %3198 = vmatprep.subr.mxu0 0.0
    %3199 = vmatpush2.xpose.msra.mxu0 0.0
    %3200 = vmatprep.subr.mxu0 0.0
    %3201 = vmatpush2.xpose.msra.mxu0 0.0
    %3202 = vmatprep.subr.mxu0 0.0
    %3203 = vmatpush2.xpose.msra.mxu0 0.0
    %3204 = vmatprep.subr.mxu0 0.0
    %3205 = vmatpush2.xpose.msra.mxu0 0.0
    %3206 = vmatprep.subr.mxu0 0.0
    %3207 = vmatpush2.xpose.msra.mxu0 0.0
    %3208 = vmatprep.subr.mxu0 0.0
    %3209 = vmatpush2.xpose.msra.mxu0 0.0
    %3210 = vmatprep.subr.mxu0 0.0
    %3211 = vmatpush2.xpose.msra.mxu0 0.0
    %3212 = vmatprep.mubr.f32.mxu0 0.0
    %3213 = vmatmul.mubr.f32.gmra.mxu0 %v3144
    %v3214 = vpop.f32.mrf.mxu0
    %v3215 = vadd.f32 0.0, %v3214
    %v3216 = vpop.f32.mrf.mxu0
    %3217 = vdwg.mxu0
    %3218 = vrot.lane.b32.xlu0 %v2130, 104
    %v3219 = vpop.permute.xlu0 %3218
    %3220 = vrot.lane.b32.xlu0 %v2130, 72
    %v3221 = vpop.permute.xlu0 %3220
    %v3222 = vsel %vm291, %v3219, 0
    %v3224 = vsel %vm291, %v3221, 0
    %3226 = vmatprep.subr.mxu0 0.0
    %3227 = vmatpush1.xpose.msra.mxu0 0.0
    %3228 = vmatprep.subr.mxu0 0.0
    %3229 = vmatpush1.xpose.msra.mxu0 0.0
    %3230 = vmatprep.subr.mxu0 0.0
    %3231 = vmatpush1.xpose.msra.mxu0 0.0
    %3232 = vmatprep.subr.mxu0 0.0
    %3233 = vmatpush1.xpose.msra.mxu0 0.0
    %3234 = vmatprep.subr.mxu0 0.0
    %3235 = vmatpush1.xpose.msra.mxu0 0.0
    %3236 = vmatprep.subr.mxu0 0.0
    %3237 = vmatpush1.xpose.msra.mxu0 0.0
    %3238 = vmatprep.subr.mxu0 0.0
    %3239 = vmatpush1.xpose.msra.mxu0 0.0
    %3240 = vmatprep.subr.mxu0 0.0
    %3241 = vmatpush1.xpose.msra.mxu0 0.0
    %3242 = vmatprep.subr.mxu0 0.0
    %3243 = vmatpush1.xpose.msra.mxu0 0.0
    %3244 = vmatprep.subr.mxu0 0.0
    %3245 = vmatpush1.xpose.msra.mxu0 0.0
    %3246 = vmatprep.subr.mxu0 0.0
    %3247 = vmatpush1.xpose.msra.mxu0 0.0
    %3248 = vmatprep.subr.mxu0 0.0
    %3249 = vmatpush1.xpose.msra.mxu0 0.0
    %3250 = vmatprep.subr.mxu0 0.0
    %3251 = vmatpush1.xpose.msra.mxu0 0.0
    %3252 = vmatprep.subr.mxu0 0.0
    %3253 = vmatpush1.xpose.msra.mxu0 0.0
    %3254 = vmatprep.subr.mxu0 0.0
    %3255 = vmatpush1.xpose.msra.mxu0 0.0
    %3256 = vmatprep.subr.mxu0 0.0
    %3257 = vmatpush1.xpose.msra.mxu0 %v3224
    %3258 = vmatprep.subr.mxu0 0.0
    %3259 = vmatpush2.xpose.msra.mxu0 0.0
    %3260 = vmatprep.subr.mxu0 0.0
    %3261 = vmatpush2.xpose.msra.mxu0 0.0
    %3262 = vmatprep.subr.mxu0 0.0
    %3263 = vmatpush2.xpose.msra.mxu0 0.0
    %3264 = vmatprep.subr.mxu0 0.0
    %3265 = vmatpush2.xpose.msra.mxu0 0.0
    %3266 = vmatprep.subr.mxu0 0.0
    %3267 = vmatpush2.xpose.msra.mxu0 0.0
    %3268 = vmatprep.subr.mxu0 0.0
    %3269 = vmatpush2.xpose.msra.mxu0 0.0
    %3270 = vmatprep.subr.mxu0 0.0
    %3271 = vmatpush2.xpose.msra.mxu0 0.0
    %3272 = vmatprep.subr.mxu0 0.0
    %3273 = vmatpush2.xpose.msra.mxu0 0.0
    %3274 = vmatprep.subr.mxu0 0.0
    %3275 = vmatpush2.xpose.msra.mxu0 0.0
    %3276 = vmatprep.subr.mxu0 0.0
    %3277 = vmatpush2.xpose.msra.mxu0 0.0
    %3278 = vmatprep.subr.mxu0 0.0
    %3279 = vmatpush2.xpose.msra.mxu0 0.0
    %3280 = vmatprep.subr.mxu0 0.0
    %3281 = vmatpush2.xpose.msra.mxu0 0.0
    %3282 = vmatprep.subr.mxu0 0.0
    %3283 = vmatpush2.xpose.msra.mxu0 0.0
    %3284 = vmatprep.subr.mxu0 0.0
    %3285 = vmatpush2.xpose.msra.mxu0 0.0
    %3286 = vmatprep.subr.mxu0 0.0
    %3287 = vmatpush2.xpose.msra.mxu0 0.0
    %3288 = vmatprep.subr.mxu0 0.0
    %3289 = vmatpush2.xpose.msra.mxu0 0.0
    %3290 = vmatprep.mubr.f32.mxu0 0.0
    %3291 = vmatmul.mubr.f32.gmra.mxu0 %v3222
    %v3292 = vpop.f32.mrf.mxu0
    %v3293 = vadd.f32 0.0, %v3292
    %v3294 = vpop.f32.mrf.mxu0
    %3295 = vdwg.mxu0
    %v3296 = vmul.f32 %v3215, 0.35355338
    %v3297 = vmul.f32 %v3293, 0.35355338
    %v3298 = vadd.f32 %v3296, %v188
    %v3299 = vadd.f32 %v3297, %v192
    %v3300 = vsel %vm291, %v3298, -inf
    %3301 = vmax.xlane.f32.xlu0 %v3300
    %v3302 = vpop.xlane.xlu0 %3301
    %v3303 = vsel %vm291, %v3299, -inf
    %3304 = vmax.xlane.f32.xlu0 %v3303
    %v3305 = vpop.xlane.xlu0 %3304
    %v3306 = vsub.f32 %v3298, %v3302
    %v3307 = vsub.f32 %v3299, %v3305
    %v3308 = vmul.f32 %v3306, 1.442695
    %v3309 = vpow.pop %v3308
    %v3310 = vmul.f32 %v3307, 1.442695
    %v3311 = vpow.pop %v3310
    %v3312 = vsel %vm291, %v3309, 0.0
    %3313 = vadd.xlane.f32.xlu0 %v3312
    %v3314 = vpop.xlane.xlu0 %3313
    %v3315 = vsel %vm291, %v3311, 0.0
    %3316 = vadd.xlane.f32.xlu0 %v3315
    %v3317 = vpop.xlane.xlu0 %3316
    %v3318 = vrcp.pop %v3314
    %v3319 = vmul.f32 %v3309, %v3318
    %v3320 = vrcp.pop %v3317
    %v3321 = vmul.f32 %v3311, %v3320
    %3322 = vst.msk [vmem:[%s2313 + $0x18] sm:$0xff] %vm291, %v3319
    %3323 = vst.msk [vmem:[%s2313 + $0x38] sm:$0xff] %vm291, %v3321
    %3324 = vrot.lane.b32.xlu0 %v2125, 40
    %v3325 = vpop.permute.xlu0 %3324
    %v3328 = vsel %vm291, %v3319, 0
    %3330 = vmatprep.subr.mxu0 0.0
    %3331 = vmatpush1.msra.mxu0 0.0
    %3332 = vmatprep.subr.mxu0 0.0
    %3333 = vmatpush1.msra.mxu0 0.0
    %3334 = vmatprep.subr.mxu0 0.0
    %3335 = vmatpush1.msra.mxu0 0.0
    %3336 = vmatprep.subr.mxu0 0.0
    %3337 = vmatpush1.msra.mxu0 0.0
    %3338 = vmatprep.subr.mxu0 0.0
    %3339 = vmatpush1.msra.mxu0 0.0
    %3340 = vmatprep.subr.mxu0 0.0
    %3341 = vmatpush1.msra.mxu0 0.0
    %3342 = vmatprep.subr.mxu0 0.0
    %3343 = vmatpush1.msra.mxu0 0.0
    %3344 = vmatprep.subr.mxu0 0.0
    %3345 = vmatpush1.msra.mxu0 0.0
    %3346 = vmatprep.subr.mxu0 0.0
    %3347 = vmatpush1.msra.mxu0 0.0
    %3348 = vmatprep.subr.mxu0 0.0
    %3349 = vmatpush1.msra.mxu0 0.0
    %3350 = vmatprep.subr.mxu0 0.0
    %3351 = vmatpush1.msra.mxu0 0.0
    %3352 = vmatprep.subr.mxu0 0.0
    %3353 = vmatpush1.msra.mxu0 0.0
    %3354 = vmatprep.subr.mxu0 0.0
    %3355 = vmatpush1.msra.mxu0 0.0
    %3356 = vmatprep.subr.mxu0 0.0
    %3357 = vmatpush1.msra.mxu0 0.0
    %3358 = vmatprep.subr.mxu0 0.0
    %3359 = vmatpush1.msra.mxu0 0.0
    %3360 = vmatprep.subr.mxu0 0.0
    %3361 = vmatpush1.msra.mxu0 %v3325
    %3362 = vmatprep.subr.mxu0 0.0
    %3363 = vmatpush2.msra.mxu0 0.0
    %3364 = vmatprep.subr.mxu0 0.0
    %3365 = vmatpush2.msra.mxu0 0.0
    %3366 = vmatprep.subr.mxu0 0.0
    %3367 = vmatpush2.msra.mxu0 0.0
    %3368 = vmatprep.subr.mxu0 0.0
    %3369 = vmatpush2.msra.mxu0 0.0
    %3370 = vmatprep.subr.mxu0 0.0
    %3371 = vmatpush2.msra.mxu0 0.0
    %3372 = vmatprep.subr.mxu0 0.0
    %3373 = vmatpush2.msra.mxu0 0.0
    %3374 = vmatprep.subr.mxu0 0.0
    %3375 = vmatpush2.msra.mxu0 0.0
    %3376 = vmatprep.subr.mxu0 0.0
    %3377 = vmatpush2.msra.mxu0 0.0
    %3378 = vmatprep.subr.mxu0 0.0
    %3379 = vmatpush2.msra.mxu0 0.0
    %3380 = vmatprep.subr.mxu0 0.0
    %3381 = vmatpush2.msra.mxu0 0.0
    %3382 = vmatprep.subr.mxu0 0.0
    %3383 = vmatpush2.msra.mxu0 0.0
    %3384 = vmatprep.subr.mxu0 0.0
    %3385 = vmatpush2.msra.mxu0 0.0
    %3386 = vmatprep.subr.mxu0 0.0
    %3387 = vmatpush2.msra.mxu0 0.0
    %3388 = vmatprep.subr.mxu0 0.0
    %3389 = vmatpush2.msra.mxu0 0.0
    %3390 = vmatprep.subr.mxu0 0.0
    %3391 = vmatpush2.msra.mxu0 0.0
    %3392 = vmatprep.subr.mxu0 0.0
    %3393 = vmatpush2.msra.mxu0 0.0
    %3394 = vmatprep.mubr.f32.mxu0 0.0
    %3395 = vmatmul.mubr.f32.gmra.mxu0 %v3328
    %v3396 = vpop.f32.mrf.mxu0
    %v3397 = vadd.f32 0.0, %v3396
    %v3398 = vpop.f32.mrf.mxu0
    %3399 = vdwg.mxu0
    %3400 = vrot.lane.b32.xlu0 %v2130, 40
    %v3401 = vpop.permute.xlu0 %3400
    %v3404 = vsel %vm291, %v3321, 0
    %3406 = vmatprep.subr.mxu0 0.0
    %3407 = vmatpush1.msra.mxu0 0.0
    %3408 = vmatprep.subr.mxu0 0.0
    %3409 = vmatpush1.msra.mxu0 0.0
    %3410 = vmatprep.subr.mxu0 0.0
    %3411 = vmatpush1.msra.mxu0 0.0
    %3412 = vmatprep.subr.mxu0 0.0
    %3413 = vmatpush1.msra.mxu0 0.0
    %3414 = vmatprep.subr.mxu0 0.0
    %3415 = vmatpush1.msra.mxu0 0.0
    %3416 = vmatprep.subr.mxu0 0.0
    %3417 = vmatpush1.msra.mxu0 0.0
    %3418 = vmatprep.subr.mxu0 0.0
    %3419 = vmatpush1.msra.mxu0 0.0
    %3420 = vmatprep.subr.mxu0 0.0
    %3421 = vmatpush1.msra.mxu0 0.0
    %3422 = vmatprep.subr.mxu0 0.0
    %3423 = vmatpush1.msra.mxu0 0.0
    %3424 = vmatprep.subr.mxu0 0.0
    %3425 = vmatpush1.msra.mxu0 0.0
    %3426 = vmatprep.subr.mxu0 0.0
    %3427 = vmatpush1.msra.mxu0 0.0
    %3428 = vmatprep.subr.mxu0 0.0
    %3429 = vmatpush1.msra.mxu0 0.0
    %3430 = vmatprep.subr.mxu0 0.0
    %3431 = vmatpush1.msra.mxu0 0.0
    %3432 = vmatprep.subr.mxu0 0.0
    %3433 = vmatpush1.msra.mxu0 0.0
    %3434 = vmatprep.subr.mxu0 0.0
    %3435 = vmatpush1.msra.mxu0 0.0
    %3436 = vmatprep.subr.mxu0 0.0
    %3437 = vmatpush1.msra.mxu0 %v3401
    %3438 = vmatprep.subr.mxu0 0.0
    %3439 = vmatpush2.msra.mxu0 0.0
    %3440 = vmatprep.subr.mxu0 0.0
    %3441 = vmatpush2.msra.mxu0 0.0
    %3442 = vmatprep.subr.mxu0 0.0
    %3443 = vmatpush2.msra.mxu0 0.0
    %3444 = vmatprep.subr.mxu0 0.0
    %3445 = vmatpush2.msra.mxu0 0.0
    %3446 = vmatprep.subr.mxu0 0.0
    %3447 = vmatpush2.msra.mxu0 0.0
    %3448 = vmatprep.subr.mxu0 0.0
    %3449 = vmatpush2.msra.mxu0 0.0
    %3450 = vmatprep.subr.mxu0 0.0
    %3451 = vmatpush2.msra.mxu0 0.0
    %3452 = vmatprep.subr.mxu0 0.0
    %3453 = vmatpush2.msra.mxu0 0.0
    %3454 = vmatprep.subr.mxu0 0.0
    %3455 = vmatpush2.msra.mxu0 0.0
    %3456 = vmatprep.subr.mxu0 0.0
    %3457 = vmatpush2.msra.mxu0 0.0
    %3458 = vmatprep.subr.mxu0 0.0
    %3459 = vmatpush2.msra.mxu0 0.0
    %3460 = vmatprep.subr.mxu0 0.0
    %3461 = vmatpush2.msra.mxu0 0.0
    %3462 = vmatprep.subr.mxu0 0.0
    %3463 = vmatpush2.msra.mxu0 0.0
    %3464 = vmatprep.subr.mxu0 0.0
    %3465 = vmatpush2.msra.mxu0 0.0
    %3466 = vmatprep.subr.mxu0 0.0
    %3467 = vmatpush2.msra.mxu0 0.0
    %3468 = vmatprep.subr.mxu0 0.0
    %3469 = vmatpush2.msra.mxu0 0.0
    %3470 = vmatprep.mubr.f32.mxu0 0.0
    %3471 = vmatmul.mubr.f32.gmra.mxu0 %v3404
    %v3472 = vpop.f32.mrf.mxu0
    %v3473 = vadd.f32 0.0, %v3472
    %v3474 = vpop.f32.mrf.mxu0
    %3475 = vdwg.mxu0
    %3478 = vrot.lane.b32.xlu0 %v2725, 8
    %v3479 = vpop.permute.xlu0 %3478
    %3480 = vrot.lane.b32.xlu0 %v2801, 8
    %v3481 = vpop.permute.xlu0 %3480
    %3486 = vrot.lane.b32.xlu0 %v3061, 16
    %v3487 = vpop.permute.xlu0 %3486
    %3488 = vrot.lane.b32.xlu0 %v3137, 16
    %v3489 = vpop.permute.xlu0 %3488
    %3494 = vrot.lane.b32.xlu0 %v3397, 24
    %v3495 = vpop.permute.xlu0 %3494
    %3496 = vrot.lane.b32.xlu0 %v3473, 24
    %v3497 = vpop.permute.xlu0 %3496
    %v3500 = vsel %vm291, %v2389, %v3479
    %v3501 = vsel %vm291, %v2465, %v3481
    %v3502 = vsel %vm1657, %v3500, %v3487
    %v3503 = vsel %vm1657, %v3501, %v3489
    %v3504 = vsel %vm1660, %v3502, %v3495
    %v3505 = vsel %vm1660, %v3503, %v3497
    %s3506 = scalar_lea.vmem %s6, 32
    %v3507 = vld [vmem:[%s3506] sm:$0xff]
    %v3508 = vld [vmem:[%s3506 + $0x8] sm:$0xff]
    %v3509 = vld [vmem:[%s3506 + $0x10] sm:$0xff]
    %v3510 = vld [vmem:[%s3506 + $0x18] sm:$0xff]
    %s3511 = scalar_lea.vmem %s7, 1
    %v3512 = vld [vmem:[%s3511] sm:$0x1]
    %v3514 = vlaneseq
    %v3515 = vshrl.u32 %v3514, 7
    %v3516 = vsub.s32 0, %v3515
    %v3517 = vrot.slane %v3512, %v3516
    %v3520 = vsel %vm206, %v3504, 0
    %v3523 = vsel %vm206, %v3505, 0
    %3525 = vmatprep.subr.mxu0 0.0
    %3526 = vmatpush1.msra.mxu0 0.0
    %3527 = vmatprep.subr.mxu0 0.0
    %3528 = vmatpush1.msra.mxu0 0.0
    %3529 = vmatprep.subr.mxu0 0.0
    %3530 = vmatpush1.msra.mxu0 0.0
    %3531 = vmatprep.subr.mxu0 0.0
    %3532 = vmatpush1.msra.mxu0 0.0
    %3533 = vmatprep.subr.mxu0 0.0
    %3534 = vmatpush1.msra.mxu0 0.0
    %3535 = vmatprep.subr.mxu0 0.0
    %3536 = vmatpush1.msra.mxu0 0.0
    %3537 = vmatprep.subr.mxu0 0.0
    %3538 = vmatpush1.msra.mxu0 0.0
    %3539 = vmatprep.subr.mxu0 0.0
    %3540 = vmatpush1.msra.mxu0 0.0
    %3541 = vmatprep.subr.mxu0 0.0
    %3542 = vmatpush1.msra.mxu0 0.0
    %3543 = vmatprep.subr.mxu0 0.0
    %3544 = vmatpush1.msra.mxu0 0.0
    %3545 = vmatprep.subr.mxu0 0.0
    %3546 = vmatpush1.msra.mxu0 0.0
    %3547 = vmatprep.subr.mxu0 0.0
    %3548 = vmatpush1.msra.mxu0 0.0
    %3549 = vmatprep.subr.mxu0 0.0
    %3550 = vmatpush1.msra.mxu0 %v3510
    %3551 = vmatprep.subr.mxu0 0.0
    %3552 = vmatpush1.msra.mxu0 %v3509
    %3553 = vmatprep.subr.mxu0 0.0
    %3554 = vmatpush1.msra.mxu0 %v3508
    %3555 = vmatprep.subr.mxu0 0.0
    %3556 = vmatpush1.msra.mxu0 %v3507
    %3557 = vmatprep.subr.mxu0 0.0
    %3558 = vmatpush2.msra.mxu0 0.0
    %3559 = vmatprep.subr.mxu0 0.0
    %3560 = vmatpush2.msra.mxu0 0.0
    %3561 = vmatprep.subr.mxu0 0.0
    %3562 = vmatpush2.msra.mxu0 0.0
    %3563 = vmatprep.subr.mxu0 0.0
    %3564 = vmatpush2.msra.mxu0 0.0
    %3565 = vmatprep.subr.mxu0 0.0
    %3566 = vmatpush2.msra.mxu0 0.0
    %3567 = vmatprep.subr.mxu0 0.0
    %3568 = vmatpush2.msra.mxu0 0.0
    %3569 = vmatprep.subr.mxu0 0.0
    %3570 = vmatpush2.msra.mxu0 0.0
    %3571 = vmatprep.subr.mxu0 0.0
    %3572 = vmatpush2.msra.mxu0 0.0
    %3573 = vmatprep.subr.mxu0 0.0
    %3574 = vmatpush2.msra.mxu0 0.0
    %3575 = vmatprep.subr.mxu0 0.0
    %3576 = vmatpush2.msra.mxu0 0.0
    %3577 = vmatprep.subr.mxu0 0.0
    %3578 = vmatpush2.msra.mxu0 0.0
    %3579 = vmatprep.subr.mxu0 0.0
    %3580 = vmatpush2.msra.mxu0 0.0
    %3581 = vmatprep.subr.mxu0 0.0
    %3582 = vmatpush2.msra.mxu0 0.0
    %3583 = vmatprep.subr.mxu0 0.0
    %3584 = vmatpush2.msra.mxu0 0.0
    %3585 = vmatprep.subr.mxu0 0.0
    %3586 = vmatpush2.msra.mxu0 0.0
    %3587 = vmatprep.subr.mxu0 0.0
    %3588 = vmatpush2.msra.mxu0 0.0
    %3589 = vmatprep.mubr.f32.mxu0 0.0
    %3590 = vmatmul.mubr.f32.gmra.mxu0 %v3520
    %v3591 = vpop.f32.mrf.mxu0
    %v3592 = vadd.f32 %v3517, %v3591
    %v3593 = vpop.f32.mrf.mxu0
    %3594 = vmatprep.mubr.f32.mxu0 0.0
    %3595 = vmatmul.mubr.f32.gmra.mxu0 %v3523
    %v3596 = vpop.f32.mrf.mxu0
    %v3597 = vadd.f32 %v3517, %v3596
    %v3598 = vpop.f32.mrf.mxu0
    %3599 = vdwg.mxu0
    %v3600 = vadd.f32 %v3592, %v2037
    %v3601 = vadd.f32 %v3597, %v2038
    %s3602 = scalar_lea.vmem %s8, 1
    %v3603 = vld [vmem:[%s3602] sm:$0x1]
    %s3604 = scalar_lea.vmem %s9, 1
    %v3605 = vld [vmem:[%s3604] sm:$0x1]
    %v3606 = vsel %vm206, %v3600, 0.0
    %3607 = vadd.xlane.f32.xlu0 %v3606
    %v3608 = vpop.xlane.xlu0 %3607
    %v3609 = vsel %vm206, %v3601, 0.0
    %3610 = vadd.xlane.f32.xlu0 %v3609
    %v3611 = vpop.xlane.xlu0 %3610
    %v3612 = vmul.f32 %v3608, %v1765
    %v3613 = vmul.f32 %v3611, %v1765
    %v3614 = vsub.f32 %v3600, %v3612
    %v3615 = vsub.f32 %v3601, %v3613
    %v3616 = vmul.f32 %v3614, %v3614
    %v3617 = vmul.f32 %v3615, %v3615
    %v3618 = vsel %vm206, %v3616, 0.0
    %3619 = vadd.xlane.f32.xlu0 %v3618
    %v3620 = vpop.xlane.xlu0 %3619
    %v3621 = vsel %vm206, %v3617, 0.0
    %3622 = vadd.xlane.f32.xlu0 %v3621
    %v3623 = vpop.xlane.xlu0 %3622
    %v3624 = vmul.f32 %v3620, %v1765
    %v3625 = vmul.f32 %v3623, %v1765
    %v3626 = vadd.f32 %v3624, 1e-05
    %v3627 = vadd.f32 %v3625, 1e-05
    %v3628 = vrsqrt.pop %v3626
    %v3629 = vrsqrt.pop %v3627
    %v3630 = vmul.f32 %v3614, %v3628
    %v3631 = vmul.f32 %v3615, %v3629
    %v3633 = vlaneseq
    %v3634 = vshrl.u32 %v3633, 7
    %v3635 = vsub.s32 0, %v3634
    %v3636 = vrot.slane %v3603, %v3635
    %v3638 = vmul.f32 %v3630, %v3636
    %v3639 = vmul.f32 %v3631, %v3636
    %v3641 = vlaneseq
    %v3642 = vshrl.u32 %v3641, 7
    %v3643 = vsub.s32 0, %v3642
    %v3644 = vrot.slane %v3605, %v3643
    %v3646 = vadd.f32 %v3638, %v3644
    %v3647 = vadd.f32 %v3639, %v3644
    %s3648 = scalar_lea.vmem %s10, 32
    %v3649 = vld [vmem:[%s3648] sm:$0xff]
    %v3650 = vld [vmem:[%s3648 + $0x8] sm:$0xff]
    %v3651 = vld [vmem:[%s3648 + $0x10] sm:$0xff]
    %v3652 = vld [vmem:[%s3648 + $0x18] sm:$0xff]
    %s3653 = scalar_lea.vmem %s11, 1
    %v3654 = vld [vmem:[%s3653] sm:$0x1]
    %v3656 = vlaneseq
    %v3657 = vshrl.u32 %v3656, 7
    %v3658 = vsub.s32 0, %v3657
    %v3659 = vrot.slane %v3654, %v3658
    %v3662 = vsel %vm206, %v3646, 0
    %v3665 = vsel %vm206, %v3647, 0
    %3667 = vmatprep.subr.mxu0 0.0
    %3668 = vmatpush1.msra.mxu0 0.0
    %3669 = vmatprep.subr.mxu0 0.0
    %3670 = vmatpush1.msra.mxu0 0.0
    %3671 = vmatprep.subr.mxu0 0.0
    %3672 = vmatpush1.msra.mxu0 0.0
    %3673 = vmatprep.subr.mxu0 0.0
    %3674 = vmatpush1.msra.mxu0 0.0
    %3675 = vmatprep.subr.mxu0 0.0
    %3676 = vmatpush1.msra.mxu0 0.0
    %3677 = vmatprep.subr.mxu0 0.0
    %3678 = vmatpush1.msra.mxu0 0.0
    %3679 = vmatprep.subr.mxu0 0.0
    %3680 = vmatpush1.msra.mxu0 0.0
    %3681 = vmatprep.subr.mxu0 0.0
    %3682 = vmatpush1.msra.mxu0 0.0
    %3683 = vmatprep.subr.mxu0 0.0
    %3684 = vmatpush1.msra.mxu0 0.0
    %3685 = vmatprep.subr.mxu0 0.0
    %3686 = vmatpush1.msra.mxu0 0.0
    %3687 = vmatprep.subr.mxu0 0.0
    %3688 = vmatpush1.msra.mxu0 0.0
    %3689 = vmatprep.subr.mxu0 0.0
    %3690 = vmatpush1.msra.mxu0 0.0
    %3691 = vmatprep.subr.mxu0 0.0
    %3692 = vmatpush1.msra.mxu0 %v3652
    %3693 = vmatprep.subr.mxu0 0.0
    %3694 = vmatpush1.msra.mxu0 %v3651
    %3695 = vmatprep.subr.mxu0 0.0
    %3696 = vmatpush1.msra.mxu0 %v3650
    %3697 = vmatprep.subr.mxu0 0.0
    %3698 = vmatpush1.msra.mxu0 %v3649
    %3699 = vmatprep.subr.mxu0 0.0
    %3700 = vmatpush2.msra.mxu0 0.0
    %3701 = vmatprep.subr.mxu0 0.0
    %3702 = vmatpush2.msra.mxu0 0.0
    %3703 = vmatprep.subr.mxu0 0.0
    %3704 = vmatpush2.msra.mxu0 0.0
    %3705 = vmatprep.subr.mxu0 0.0
    %3706 = vmatpush2.msra.mxu0 0.0
    %3707 = vmatprep.subr.mxu0 0.0
    %3708 = vmatpush2.msra.mxu0 0.0
    %3709 = vmatprep.subr.mxu0 0.0
    %3710 = vmatpush2.msra.mxu0 0.0
    %3711 = vmatprep.subr.mxu0 0.0
    %3712 = vmatpush2.msra.mxu0 0.0
    %3713 = vmatprep.subr.mxu0 0.0
    %3714 = vmatpush2.msra.mxu0 0.0
    %3715 = vmatprep.subr.mxu0 0.0
    %3716 = vmatpush2.msra.mxu0 0.0
    %3717 = vmatprep.subr.mxu0 0.0
    %3718 = vmatpush2.msra.mxu0 0.0
    %3719 = vmatprep.subr.mxu0 0.0
    %3720 = vmatpush2.msra.mxu0 0.0
    %3721 = vmatprep.subr.mxu0 0.0
    %3722 = vmatpush2.msra.mxu0 0.0
    %3723 = vmatprep.subr.mxu0 0.0
    %3724 = vmatpush2.msra.mxu0 0.0
    %3725 = vmatprep.subr.mxu0 0.0
    %3726 = vmatpush2.msra.mxu0 0.0
    %3727 = vmatprep.subr.mxu0 0.0
    %3728 = vmatpush2.msra.mxu0 0.0
    %3729 = vmatprep.subr.mxu0 0.0
    %3730 = vmatpush2.msra.mxu0 0.0
    %3731 = vmatprep.mubr.f32.mxu0 0.0
    %3732 = vmatmul.mubr.f32.gmra.mxu0 %v3662
    %v3733 = vpop.f32.mrf.mxu0
    %v3734 = vadd.f32 %v3659, %v3733
    %v3735 = vpop.f32.mrf.mxu0
    %3736 = vmatprep.mubr.f32.mxu0 0.0
    %3737 = vmatmul.mubr.f32.gmra.mxu0 %v3665
    %v3738 = vpop.f32.mrf.mxu0
    %v3739 = vadd.f32 %v3659, %v3738
    %v3740 = vpop.f32.mrf.mxu0
    %3741 = vdwg.mxu0
    %v3742 = vmax.f32 %v3734, 0.0
    %v3743 = vmax.f32 %v3739, 0.0
    %s3744 = scalar_lea.vmem %s12, 64
    %v3745 = vld [vmem:[%s3744] sm:$0xff]
    %v3746 = vld [vmem:[%s3744 + $0x8] sm:$0xff]
    %v3747 = vld [vmem:[%s3744 + $0x10] sm:$0xff]
    %v3748 = vld [vmem:[%s3744 + $0x18] sm:$0xff]
    %v3749 = vld [vmem:[%s3744 + $0x20] sm:$0xff]
    %v3750 = vld [vmem:[%s3744 + $0x28] sm:$0xff]
    %v3751 = vld [vmem:[%s3744 + $0x30] sm:$0xff]
    %v3752 = vld [vmem:[%s3744 + $0x38] sm:$0xff]
    %s3753 = scalar_lea.vmem %s13, 1
    %v3754 = vld [vmem:[%s3753] sm:$0x1]
    %v3756 = vlaneseq
    %v3757 = vshrl.u32 %v3756, 7
    %v3758 = vsub.s32 0, %v3757
    %v3759 = vrot.slane %v3754, %v3758
    %v3762 = vsel %vm1911, %v3742, 0
    %v3765 = vsel %vm1911, %v3743, 0
    %3767 = vmatprep.subr.mxu0 0.0
    %3768 = vmatpush1.msra.mxu0 0.0
    %3769 = vmatprep.subr.mxu0 0.0
    %3770 = vmatpush1.msra.mxu0 0.0
    %3771 = vmatprep.subr.mxu0 0.0
    %3772 = vmatpush1.msra.mxu0 0.0
    %3773 = vmatprep.subr.mxu0 0.0
    %3774 = vmatpush1.msra.mxu0 0.0
    %3775 = vmatprep.subr.mxu0 0.0
    %3776 = vmatpush1.msra.mxu0 0.0
    %3777 = vmatprep.subr.mxu0 0.0
    %3778 = vmatpush1.msra.mxu0 0.0
    %3779 = vmatprep.subr.mxu0 0.0
    %3780 = vmatpush1.msra.mxu0 0.0
    %3781 = vmatprep.subr.mxu0 0.0
    %3782 = vmatpush1.msra.mxu0 0.0
    %3783 = vmatprep.subr.mxu0 0.0
    %3784 = vmatpush1.msra.mxu0 %v3752
    %3785 = vmatprep.subr.mxu0 0.0
    %3786 = vmatpush1.msra.mxu0 %v3751
    %3787 = vmatprep.subr.mxu0 0.0
    %3788 = vmatpush1.msra.mxu0 %v3750
    %3789 = vmatprep.subr.mxu0 0.0
    %3790 = vmatpush1.msra.mxu0 %v3749
    %3791 = vmatprep.subr.mxu0 0.0
    %3792 = vmatpush1.msra.mxu0 %v3748
    %3793 = vmatprep.subr.mxu0 0.0
    %3794 = vmatpush1.msra.mxu0 %v3747
    %3795 = vmatprep.subr.mxu0 0.0
    %3796 = vmatpush1.msra.mxu0 %v3746
    %3797 = vmatprep.subr.mxu0 0.0
    %3798 = vmatpush1.msra.mxu0 %v3745
    %3799 = vmatprep.subr.mxu0 0.0
    %3800 = vmatpush2.msra.mxu0 0.0
    %3801 = vmatprep.subr.mxu0 0.0
    %3802 = vmatpush2.msra.mxu0 0.0
    %3803 = vmatprep.subr.mxu0 0.0
    %3804 = vmatpush2.msra.mxu0 0.0
    %3805 = vmatprep.subr.mxu0 0.0
    %3806 = vmatpush2.msra.mxu0 0.0
    %3807 = vmatprep.subr.mxu0 0.0
    %3808 = vmatpush2.msra.mxu0 0.0
    %3809 = vmatprep.subr.mxu0 0.0
    %3810 = vmatpush2.msra.mxu0 0.0
    %3811 = vmatprep.subr.mxu0 0.0
    %3812 = vmatpush2.msra.mxu0 0.0
    %3813 = vmatprep.subr.mxu0 0.0
    %3814 = vmatpush2.msra.mxu0 0.0
    %3815 = vmatprep.subr.mxu0 0.0
    %3816 = vmatpush2.msra.mxu0 0.0
    %3817 = vmatprep.subr.mxu0 0.0
    %3818 = vmatpush2.msra.mxu0 0.0
    %3819 = vmatprep.subr.mxu0 0.0
    %3820 = vmatpush2.msra.mxu0 0.0
    %3821 = vmatprep.subr.mxu0 0.0
    %3822 = vmatpush2.msra.mxu0 0.0
    %3823 = vmatprep.subr.mxu0 0.0
    %3824 = vmatpush2.msra.mxu0 0.0
    %3825 = vmatprep.subr.mxu0 0.0
    %3826 = vmatpush2.msra.mxu0 0.0
    %3827 = vmatprep.subr.mxu0 0.0
    %3828 = vmatpush2.msra.mxu0 0.0
    %3829 = vmatprep.subr.mxu0 0.0
    %3830 = vmatpush2.msra.mxu0 0.0
    %3831 = vmatprep.mubr.f32.mxu0 0.0
    %3832 = vmatmul.mubr.f32.gmra.mxu0 %v3762
    %v3833 = vpop.f32.mrf.mxu0
    %v3834 = vadd.f32 %v3759, %v3833
    %v3835 = vpop.f32.mrf.mxu0
    %3836 = vmatprep.mubr.f32.mxu0 0.0
    %3837 = vmatmul.mubr.f32.gmra.mxu0 %v3765
    %v3838 = vpop.f32.mrf.mxu0
    %v3839 = vadd.f32 %v3759, %v3838
    %v3840 = vpop.f32.mrf.mxu0
    %3841 = vdwg.mxu0
    %v3842 = vadd.f32 %v3834, %v3646
    %v3843 = vadd.f32 %v3839, %v3647
    %s3844 = scalar_lea.vmem %s14, 1
    %v3845 = vld [vmem:[%s3844] sm:$0x1]
    %s3846 = scalar_lea.vmem %s15, 1
    %v3847 = vld [vmem:[%s3846] sm:$0x1]
    %v3848 = vsel %vm206, %v3842, 0.0
    %3849 = vadd.xlane.f32.xlu0 %v3848
    %v3850 = vpop.xlane.xlu0 %3849
    %v3851 = vsel %vm206, %v3843, 0.0
    %3852 = vadd.xlane.f32.xlu0 %v3851
    %v3853 = vpop.xlane.xlu0 %3852
    %v3854 = vmul.f32 %v3850, %v1765
    %v3855 = vmul.f32 %v3853, %v1765
    %v3856 = vsub.f32 %v3842, %v3854
    %v3857 = vsub.f32 %v3843, %v3855
    %v3858 = vmul.f32 %v3856, %v3856
    %v3859 = vmul.f32 %v3857, %v3857
    %v3860 = vsel %vm206, %v3858, 0.0
    %3861 = vadd.xlane.f32.xlu0 %v3860
    %v3862 = vpop.xlane.xlu0 %3861
    %v3863 = vsel %vm206, %v3859, 0.0
    %3864 = vadd.xlane.f32.xlu0 %v3863
    %v3865 = vpop.xlane.xlu0 %3864
    %v3866 = vmul.f32 %v3862, %v1765
    %v3867 = vmul.f32 %v3865, %v1765
    %v3868 = vadd.f32 %v3866, 1e-05
    %v3869 = vadd.f32 %v3867, 1e-05
    %v3870 = vrsqrt.pop %v3868
    %v3871 = vrsqrt.pop %v3869
    %v3872 = vmul.f32 %v3856, %v3870
    %v3873 = vmul.f32 %v3857, %v3871
    %v3875 = vlaneseq
    %v3876 = vshrl.u32 %v3875, 7
    %v3877 = vsub.s32 0, %v3876
    %v3878 = vrot.slane %v3845, %v3877
    %v3880 = vmul.f32 %v3872, %v3878
    %v3881 = vmul.f32 %v3873, %v3878
    %v3883 = vlaneseq
    %v3884 = vshrl.u32 %v3883, 7
    %v3885 = vsub.s32 0, %v3884
    %v3886 = vrot.slane %v3847, %v3885
    %v3888 = vadd.f32 %v3880, %v3886
    %v3889 = vadd.f32 %v3881, %v3886
    %3890 = vst.msk [vmem:[#allocation2] sm:$0xff] %vm206, %v3888
    %3891 = vst.msk [vmem:[#allocation2 + $0x8] sm:$0xff] %vm206, %v3889
    // Predicated region
    $region66: #{encoder_forward.1} parent=1 // pred_check
      _
    $region67: #{encoder_forward.1} parent=1 // pred_check_branch
      %3893 = sbr.rel (0) target = $region69
    $region68: #{encoder_forward.1} parent=1 // pred_region
      %s3895 = ssub.s32 256, 256
      %3896 = vsyncadd [#allocation3], %s3895
      %s3897 = sshll.u32 [#allocation2], 4
      %s3898 = int_to_ptr.vmem [resolvable:$true] %s3897
      %3903 = dma.vmem_to_hbm [thread:$0]  %s3898, 256, %s16, [#allocation3], 128, 128, 8
    $region69: #{encoder_forward.1} parent=1 // pred_fallthru
      _
    // Predicated region
    $region70: #{encoder_forward.1} parent=1 // pred_check
      _
    $region71: #{encoder_forward.1} parent=1 // pred_check_branch
      %3905 = sbr.rel (0) target = $region73
    $region72: #{encoder_forward.1} parent=1 // pred_region
      _
    $region73: #{encoder_forward.1} parent=1 // pred_fallthru
      _
    // Predicated region
    $region74: #{encoder_forward.1} parent=1 // pred_check
      _
    $region75: #{encoder_forward.1} parent=1 // pred_check_branch
      %3907 = sbr.rel (0) target = $region77
    $region76: #{encoder_forward.1} parent=1 // pred_region
      %3908 = dma.done [#allocation3], 256
    $region77: #{encoder_forward.1} parent=1 // pred_fallthru
      _
    // Predicated region
    $region78: #{encoder_forward.1} parent=1 // pred_check
      _
    $region79: #{encoder_forward.1} parent=1 // pred_check_branch
      %3910 = sbr.rel (0) target = $region81
    $region80: #{encoder_forward.1} parent=1 // pred_region
      _
    $region81: #{encoder_forward.1} parent=1 // pred_fallthru
      _
    %3911 = vsyncpa [#allocation3], 1

</llo_original>
